<compile_context>
chip_gen: v7x
topology: tpu7x:2x2x1
jax: 0.10.0
libtpu: 0.0.40
codegen_flags: <defaults>
</compile_context>

<pallas_src>
import math
from functools import partial

import jax
import jax.numpy as jnp
import numpy as np
from jax.experimental import pallas as pl
from jax.experimental.pallas import tpu as pltpu

# ----------------------------- config ---------------------------------------
B = 2            # batch
SEQ = 8          # seq_length
D = 32           # input_dim (d_model)
H = 64           # hidden_dim (dim_feedforward)
N_LAYERS = 2
N_HEADS = 4
NUM_CLASSES = 10
EPS = 1e-5
S1 = SEQ + 1     # +1 class token
DH = D // N_HEADS
C_PAD = 128      # lane-dense padded classifier width


# ----------------------------- kernel ---------------------------------------
def _encoder_kernel(x_ref,      # (B*S1, D)        f32  (cls token + pos enc applied)
                    wqkv_ref,   # (L, D, 3D)       bf16 (Q part pre-scaled by 1/sqrt(dh))
                    wo_ref,     # (L, D, D)        bf16
                    w1_ref,     # (L, D, H)        bf16
                    w2_ref,     # (L, H, D)        bf16
                    wc_ref,     # (D, C_PAD)       bf16
                    vec_ref,    # (L, 8, 128)      f32  rows: bqkv|bo|b1|b2|ln1g|ln1b|ln2g|ln2b
                    bc_ref,     # (1, C_PAD)       f32
                    out_ref,    # (B, C_PAD)       f32
                    *, n_layers, n_heads, batch, s1, d, hidden, eps):
    f32, bf16 = jnp.float32, jnp.bfloat16
    dh = d // n_heads
    x = x_ref[...]                                   # (B*S1, D) f32

    def layernorm(v, gamma, beta):
        mu = jnp.mean(v, axis=-1, keepdims=True)
        var = jnp.mean((v - mu) ** 2, axis=-1, keepdims=True)
        return (v - mu) * jax.lax.rsqrt(var + eps) * gamma + beta

    for l in range(n_layers):
        # ---- per-layer bias / LayerNorm slab: every slice starts at lane 0 ----
        vec = vec_ref[l]                             # (8, 128) f32
        bqkv = vec[0:1, 0:3 * d]                     # (1, 3D)  (Q part pre-scaled)
        bo   = vec[1:2, 0:d]
        b1   = vec[2:3, 0:hidden]
        b2   = vec[3:4, 0:d]
        ln1g = vec[4:5, 0:d]
        ln1b = vec[5:6, 0:d]
        ln2g = vec[6:7, 0:d]
        ln2b = vec[7:8, 0:d]

        wo_l = wo_ref[l]                             # (D, D)  bf16

        # ---- fused QKV projection: one 2-D MXU matmul ----
        qkv = jnp.dot(x.astype(bf16), wqkv_ref[l],
                      preferred_element_type=f32) + bqkv       # (B*S1, 3D) f32
        qkv16 = qkv.astype(bf16)

        # ---- multi-head self-attention, unrolled over (batch, head) ----
        per_batch = []
        for b in range(batch):
            r0 = b * s1
            acc = jnp.zeros((s1, d), f32)
            for h in range(n_heads):
                c0 = h * dh
                q_bh = qkv16[r0:r0 + s1, c0:c0 + dh]                    # (S1, dh)
                k_bh = qkv16[r0:r0 + s1, d + c0:d + c0 + dh]            # (S1, dh)
                v_bh = qkv16[r0:r0 + s1, 2 * d + c0:2 * d + c0 + dh]    # (S1, dh)

                s = jnp.einsum('qe,ke->qk', q_bh, k_bh,
                               preferred_element_type=f32)              # (S1, S1)
                s = s - jnp.max(s, axis=-1, keepdims=True)
                p = jnp.exp(s)
                p = p * pl.reciprocal(jnp.sum(p, axis=-1, keepdims=True),
                                      approx=True)

                o = jnp.dot(p.astype(bf16), v_bh,
                            preferred_element_type=f32)                 # (S1, dh)
                acc = acc + jnp.dot(o.astype(bf16), wo_l[c0:c0 + dh, :],
                                    preferred_element_type=f32)         # (S1, D)
            per_batch.append(acc)
        attn = jnp.concatenate(per_batch, axis=0) + bo                  # (B*S1, D)

        # post-norm (PyTorch default norm_first=False); dropout = identity
        x = layernorm(x + attn, ln1g, ln1b)

        # ---- feed forward (ReLU), plain 2-D matmuls ----
        h1 = jnp.dot(x.astype(bf16), w1_ref[l], preferred_element_type=f32) + b1
        h1 = jnp.maximum(h1, 0.0)
        ff = jnp.dot(h1.astype(bf16), w2_ref[l], preferred_element_type=f32) + b2
        x = layernorm(x + ff, ln2g, ln2b)

    # ---- classifier on the class-token rows, lane-dense output, bias fused ----
    cls = jnp.concatenate([x[b * s1:b * s1 + 1, :] for b in range(batch)],
                          axis=0)                                       # (B, D)
    out_ref[...] = (jnp.dot(cls.astype(bf16), wc_ref[...],
                            preferred_element_type=f32) + bc_ref[...])  # (B, C_PAD)


# ----------------------------- wrapper ---------------------------------------
@jax.jit
def transformer_encoder_forward(src, params):
    """src: (B, SEQ, D) float32 -> logits (B, NUM_CLASSES) float32."""
    b = src.shape[0]
    bf16, f32 = jnp.bfloat16, jnp.float32
    scale = 1.0 / math.sqrt(DH)

    cls_tok = jnp.broadcast_to(params["class_token"], (b, 1, D))
    x = jnp.concatenate([cls_tok, src], axis=1) + params["pos_enc"]   # (B, S1, D)
    x2 = x.reshape(b * S1, D).astype(f32)                             # (B*S1, D)

    # fold 1/sqrt(dh) into the Q columns of the fused QKV weight / bias
    q_scale = jnp.concatenate([jnp.full((D,), scale, f32),
                               jnp.ones((2 * D,), f32)])              # (3D,)
    wqkv = (params["wqkv"] * q_scale).astype(bf16)                    # (L, D, 3D)
    bqkv = params["bqkv"][:, 0, :] * q_scale                          # (L, 3D)

    # per-layer bias / LayerNorm slab: (L, 8, 128), lane-0-aligned rows
    vec = jnp.zeros((N_LAYERS, 8, 128), f32)
    vec = vec.at[:, 0, :3 * D].set(bqkv)
    vec = vec.at[:, 1, :D].set(params["bo"][:, 0, :])
    vec = vec.at[:, 2, :H].set(params["b1"][:, 0, :])
    vec = vec.at[:, 3, :D].set(params["b2"][:, 0, :])
    vec = vec.at[:, 4, :D].set(params["ln1g"][:, 0, :])
    vec = vec.at[:, 5, :D].set(params["ln1b"][:, 0, :])
    vec = vec.at[:, 6, :D].set(params["ln2g"][:, 0, :])
    vec = vec.at[:, 7, :D].set(params["ln2b"][:, 0, :])

    # classifier weight / bias padded to a 128-lane-dense output
    wc_pad = jnp.zeros((D, C_PAD), f32).at[:, :NUM_CLASSES].set(params["wc"]).astype(bf16)
    bc_pad = jnp.zeros((1, C_PAD), f32).at[:, :NUM_CLASSES].set(params["bc"])

    kernel = partial(_encoder_kernel, n_layers=N_LAYERS, n_heads=N_HEADS,
                     batch=b, s1=S1, d=D, hidden=H, eps=EPS)

    vmem = pl.BlockSpec(memory_space=pltpu.MemorySpace.VMEM)
    out = pl.pallas_call(
        kernel,
        out_shape=jax.ShapeDtypeStruct((b, C_PAD), jnp.float32),
        in_specs=[vmem] * 8,
        out_specs=vmem,
    )(x2, wqkv, params["wo"].astype(bf16), params["w1"].astype(bf16),
      params["w2"].astype(bf16), wc_pad, vec, bc_pad)

    return out[:, :NUM_CLASSES]


# ----------------------------- reference (pure JAX, f32) ----------------------
def reference_forward(src, params):
    b = src.shape[0]
    cls_tok = jnp.broadcast_to(params["class_token"], (b, 1, D))
    x = jnp.concatenate([cls_tok, src], axis=1) + params["pos_enc"]

    def ln(v, g, b_):
        mu = jnp.mean(v, -1, keepdims=True)
        var = jnp.mean((v - mu) ** 2, -1, keepdims=True)
        return (v - mu) / jnp.sqrt(var + EPS) * g + b_

    hi = jax.lax.Precision.HIGHEST
    for l in range(N_LAYERS):
        qkv = jnp.einsum("bsd,de->bse", x, params["wqkv"][l], precision=hi) + params["bqkv"][l]
        q, k, v = qkv[..., :D], qkv[..., D:2 * D], qkv[..., 2 * D:]
        qh = q.reshape(b, S1, N_HEADS, DH)
        kh = k.reshape(b, S1, N_HEADS, DH)
        vh = v.reshape(b, S1, N_HEADS, DH)
        s = jnp.einsum("bqhd,bkhd->bhqk", qh, kh, precision=hi) / math.sqrt(DH)
        p = jax.nn.softmax(s, axis=-1)
        o = jnp.einsum("bhqk,bkhd->bqhd", p, vh, precision=hi).reshape(b, S1, D)
        attn = jnp.einsum("bsd,de->bse", o, params["wo"][l], precision=hi) + params["bo"][l]
        x = ln(x + attn, params["ln1g"][l], params["ln1b"][l])
        h1 = jax.nn.relu(jnp.einsum("bsd,dh->bsh", x, params["w1"][l], precision=hi) + params["b1"][l])
        ff = jnp.einsum("bsh,hd->bsd", h1, params["w2"][l], precision=hi) + params["b2"][l]
        x = ln(x + ff, params["ln2g"][l], params["ln2b"][l])
    return jnp.einsum("bd,dc->bc", x[:, 0, :], params["wc"], precision=hi) + params["bc"]


# ----------------------------- params ----------------------------------------
def init_params(key):
    ks = jax.random.split(key, 16)
    std = 0.02
    return {
        "class_token": jax.random.normal(ks[0], (1, 1, D), jnp.float32),
        "pos_enc":     jax.random.normal(ks[1], (1, S1, D), jnp.float32),
        "wqkv": std * jax.random.normal(ks[2], (N_LAYERS, D, 3 * D), jnp.float32),
        "bqkv": std * jax.random.normal(ks[3], (N_LAYERS, 1, 3 * D), jnp.float32),
        "wo":   std * jax.random.normal(ks[4], (N_LAYERS, D, D), jnp.float32),
        "bo":   std * jax.random.normal(ks[5], (N_LAYERS, 1, D), jnp.float32),
        "w1":   std * jax.random.normal(ks[6], (N_LAYERS, D, H), jnp.float32),
        "b1":   std * jax.random.normal(ks[7], (N_LAYERS, 1, H), jnp.float32),
        "w2":   std * jax.random.normal(ks[8], (N_LAYERS, H, D), jnp.float32),
        "b2":   std * jax.random.normal(ks[9], (N_LAYERS, 1, D), jnp.float32),
        "ln1g": 1.0 + 0.1 * jax.random.normal(ks[10], (N_LAYERS, 1, D), jnp.float32),
        "ln1b": 0.1 * jax.random.normal(ks[11], (N_LAYERS, 1, D), jnp.float32),
        "ln2g": 1.0 + 0.1 * jax.random.normal(ks[12], (N_LAYERS, 1, D), jnp.float32),
        "ln2b": 0.1 * jax.random.normal(ks[13], (N_LAYERS, 1, D), jnp.float32),
        "wc":   std * jax.random.normal(ks[14], (D, NUM_CLASSES), jnp.float32),
        "bc":   std * jax.random.normal(ks[15], (1, NUM_CLASSES), jnp.float32),
    }


# ----------------------------- main -------------------------------------------
if __name__ == "__main__":
    key = jax.random.PRNGKey(0)
    kp, kx = jax.random.split(key)
    params = init_params(kp)
    src = jax.random.normal(kx, (B, SEQ, D), jnp.float32)

    out = transformer_encoder_forward(src, params)
    out = jax.block_until_ready(out)

    assert out.shape == (B, NUM_CLASSES), out.shape
    assert bool(jnp.all(jnp.isfinite(out))), "non-finite output"

    ref = jax.block_until_ready(reference_forward(src, params))
    np.testing.assert_allclose(np.asarray(out), np.asarray(ref), rtol=2e-2, atol=2e-2)

    print("KERNEL_OK")
</pallas_src>

<mosaic_0001>
module attributes {stable_mosaic.version = 11 : i64} {
  func.func @_encoder_kernel(%arg0: memref<18x32xf32, #tpu.memory_space<vmem>>, %arg1: memref<2x32x96xbf16, #tpu.memory_space<vmem>>, %arg2: memref<2x32x32xbf16, #tpu.memory_space<vmem>>, %arg3: memref<2x32x64xbf16, #tpu.memory_space<vmem>>, %arg4: memref<2x64x32xbf16, #tpu.memory_space<vmem>>, %arg5: memref<32x128xbf16, #tpu.memory_space<vmem>>, %arg6: memref<2x8x128xf32, #tpu.memory_space<vmem>>, %arg7: memref<1x128xf32, #tpu.memory_space<vmem>>, %arg8: memref<2x128xf32, #tpu.memory_space<vmem>>) attributes {dimension_semantics = [], scalar_prefetch = 0 : i64, scratch_operands = 0 : i64, tpu.core_type = #tpu.core_type<tc>} {
    %c0 = arith.constant 0 : index
    %c0_0 = arith.constant 0 : index
    %0 = vector.load %arg0[%c0, %c0_0] : memref<18x32xf32, #tpu.memory_space<vmem>>, vector<18x32xf32>
    %c0_1 = arith.constant 0 : index
    %c0_2 = arith.constant 0 : index
    %c0_3 = arith.constant 0 : index
    %1 = vector.load %arg6[%c0_1, %c0_2, %c0_3] : memref<2x8x128xf32, #tpu.memory_space<vmem>>, vector<1x8x128xf32>
    %2 = vector.shape_cast %1 : vector<1x8x128xf32> to vector<8x128xf32>
    %3 = vector.extract_strided_slice %2 {offsets = [0, 0], sizes = [1, 96], strides = [1, 1]} : vector<8x128xf32> to vector<1x96xf32>
    %4 = vector.extract_strided_slice %2 {offsets = [1, 0], sizes = [1, 32], strides = [1, 1]} : vector<8x128xf32> to vector<1x32xf32>
    %5 = vector.extract_strided_slice %2 {offsets = [2, 0], sizes = [1, 64], strides = [1, 1]} : vector<8x128xf32> to vector<1x64xf32>
    %6 = vector.extract_strided_slice %2 {offsets = [3, 0], sizes = [1, 32], strides = [1, 1]} : vector<8x128xf32> to vector<1x32xf32>
    %7 = vector.extract_strided_slice %2 {offsets = [4, 0], sizes = [1, 32], strides = [1, 1]} : vector<8x128xf32> to vector<1x32xf32>
    %8 = vector.extract_strided_slice %2 {offsets = [5, 0], sizes = [1, 32], strides = [1, 1]} : vector<8x128xf32> to vector<1x32xf32>
    %9 = vector.extract_strided_slice %2 {offsets = [6, 0], sizes = [1, 32], strides = [1, 1]} : vector<8x128xf32> to vector<1x32xf32>
    %10 = vector.extract_strided_slice %2 {offsets = [7, 0], sizes = [1, 32], strides = [1, 1]} : vector<8x128xf32> to vector<1x32xf32>
    %c0_4 = arith.constant 0 : index
    %c0_5 = arith.constant 0 : index
    %c0_6 = arith.constant 0 : index
    %11 = vector.load %arg2[%c0_4, %c0_5, %c0_6] : memref<2x32x32xbf16, #tpu.memory_space<vmem>>, vector<1x32x32xbf16>
    %12 = vector.shape_cast %11 : vector<1x32x32xbf16> to vector<32x32xbf16>
    %13 = arith.truncf %0 : vector<18x32xf32> to vector<18x32xbf16>
    %c0_7 = arith.constant 0 : index
    %c0_8 = arith.constant 0 : index
    %c0_9 = arith.constant 0 : index
    %14 = vector.load %arg1[%c0_7, %c0_8, %c0_9] : memref<2x32x96xbf16, #tpu.memory_space<vmem>>, vector<1x32x96xbf16>
    %15 = vector.shape_cast %14 : vector<1x32x96xbf16> to vector<32x96xbf16>
    %cst = arith.constant dense<0.000000e+00> : vector<18x96xf32>
    %16 = tpu.matmul %13, %15, %cst {dimension_numbers = #tpu.dot_dimension_numbers<[1], [0], [0], [1], [0, 0, 1, 1], [], []>} : vector<18x32xbf16>, vector<32x96xbf16>, vector<18x96xf32> -> vector<18x96xf32>
    %17 = vector.broadcast %3 : vector<1x96xf32> to vector<18x96xf32>
    %18 = arith.addf %16, %17 : vector<18x96xf32>
    %19 = arith.truncf %18 : vector<18x96xf32> to vector<18x96xbf16>
    %cst_10 = arith.constant 0.000000e+00 : f32
    %20 = vector.broadcast %cst_10 : f32 to vector<9x32xf32>
    %21 = vector.extract_strided_slice %19 {offsets = [0, 0], sizes = [9, 8], strides = [1, 1]} : vector<18x96xbf16> to vector<9x8xbf16>
    %22 = vector.extract_strided_slice %19 {offsets = [0, 32], sizes = [9, 8], strides = [1, 1]} : vector<18x96xbf16> to vector<9x8xbf16>
    %23 = vector.extract_strided_slice %19 {offsets = [0, 64], sizes = [9, 8], strides = [1, 1]} : vector<18x96xbf16> to vector<9x8xbf16>
    "tpu.trace_start"() <{level = 10 : i32, message = "qe,ke->qk"}> : () -> ()
    %cst_11 = arith.constant dense<0.000000e+00> : vector<9x9xf32>
    %24 = tpu.matmul %21, %22, %cst_11 {dimension_numbers = #tpu.dot_dimension_numbers<[1], [1], [0], [0], [0, 0, 1, 0], [], []>} : vector<9x8xbf16>, vector<9x8xbf16>, vector<9x9xf32> -> vector<9x9xf32>
    "tpu.trace_stop"() : () -> ()
    %cst_12 = arith.constant dense<0xFF800000> : vector<9xf32>
    %25 = vector.multi_reduction <maximumf>, %24, %cst_12 [1] : vector<9x9xf32> to vector<9xf32>
    %26 = vector.shape_cast %25 : vector<9xf32> to vector<9x1xf32>
    %27 = vector.broadcast %26 : vector<9x1xf32> to vector<9x9xf32>
    %28 = arith.subf %24, %27 : vector<9x9xf32>
    %29 = math.exp %28 : vector<9x9xf32>
    %cst_13 = arith.constant dense<0.000000e+00> : vector<9xf32>
    %30 = vector.multi_reduction <add>, %29, %cst_13 [1] : vector<9x9xf32> to vector<9xf32>
    %31 = vector.shape_cast %30 : vector<9xf32> to vector<9x1xf32>
    %32 = tpu.reciprocal %31 {approx = true} : vector<9x1xf32> -> vector<9x1xf32>
    %33 = vector.broadcast %32 : vector<9x1xf32> to vector<9x9xf32>
    %34 = arith.mulf %29, %33 : vector<9x9xf32>
    %35 = arith.truncf %34 : vector<9x9xf32> to vector<9x9xbf16>
    %cst_14 = arith.constant dense<0.000000e+00> : vector<9x8xf32>
    %36 = tpu.matmul %35, %23, %cst_14 {dimension_numbers = #tpu.dot_dimension_numbers<[1], [0], [0], [1], [0, 0, 1, 1], [], []>} : vector<9x9xbf16>, vector<9x8xbf16>, vector<9x8xf32> -> vector<9x8xf32>
    %37 = arith.truncf %36 : vector<9x8xf32> to vector<9x8xbf16>
    %38 = vector.extract_strided_slice %12 {offsets = [0, 0], sizes = [8, 32], strides = [1, 1]} : vector<32x32xbf16> to vector<8x32xbf16>
    %cst_15 = arith.constant dense<0.000000e+00> : vector<9x32xf32>
    %39 = tpu.matmul %37, %38, %cst_15 {dimension_numbers = #tpu.dot_dimension_numbers<[1], [0], [0], [1], [0, 0, 1, 1], [], []>} : vector<9x8xbf16>, vector<8x32xbf16>, vector<9x32xf32> -> vector<9x32xf32>
    %40 = arith.addf %20, %39 : vector<9x32xf32>
    %41 = vector.extract_strided_slice %19 {offsets = [0, 8], sizes = [9, 8], strides = [1, 1]} : vector<18x96xbf16> to vector<9x8xbf16>
    %42 = vector.extract_strided_slice %19 {offsets = [0, 40], sizes = [9, 8], strides = [1, 1]} : vector<18x96xbf16> to vector<9x8xbf16>
    %43 = vector.extract_strided_slice %19 {offsets = [0, 72], sizes = [9, 8], strides = [1, 1]} : vector<18x96xbf16> to vector<9x8xbf16>
    "tpu.trace_start"() <{level = 10 : i32, message = "qe,ke->qk"}> : () -> ()
    %cst_16 = arith.constant dense<0.000000e+00> : vector<9x9xf32>
    %44 = tpu.matmul %41, %42, %cst_16 {dimension_numbers = #tpu.dot_dimension_numbers<[1], [1], [0], [0], [0, 0, 1, 0], [], []>} : vector<9x8xbf16>, vector<9x8xbf16>, vector<9x9xf32> -> vector<9x9xf32>
    "tpu.trace_stop"() : () -> ()
    %cst_17 = arith.constant dense<0xFF800000> : vector<9xf32>
    %45 = vector.multi_reduction <maximumf>, %44, %cst_17 [1] : vector<9x9xf32> to vector<9xf32>
    %46 = vector.shape_cast %45 : vector<9xf32> to vector<9x1xf32>
    %47 = vector.broadcast %46 : vector<9x1xf32> to vector<9x9xf32>
    %48 = arith.subf %44, %47 : vector<9x9xf32>
    %49 = math.exp %48 : vector<9x9xf32>
    %cst_18 = arith.constant dense<0.000000e+00> : vector<9xf32>
    %50 = vector.multi_reduction <add>, %49, %cst_18 [1] : vector<9x9xf32> to vector<9xf32>
    %51 = vector.shape_cast %50 : vector<9xf32> to vector<9x1xf32>
    %52 = tpu.reciprocal %51 {approx = true} : vector<9x1xf32> -> vector<9x1xf32>
    %53 = vector.broadcast %52 : vector<9x1xf32> to vector<9x9xf32>
    %54 = arith.mulf %49, %53 : vector<9x9xf32>
    %55 = arith.truncf %54 : vector<9x9xf32> to vector<9x9xbf16>
    %cst_19 = arith.constant dense<0.000000e+00> : vector<9x8xf32>
    %56 = tpu.matmul %55, %43, %cst_19 {dimension_numbers = #tpu.dot_dimension_numbers<[1], [0], [0], [1], [0, 0, 1, 1], [], []>} : vector<9x9xbf16>, vector<9x8xbf16>, vector<9x8xf32> -> vector<9x8xf32>
    %57 = arith.truncf %56 : vector<9x8xf32> to vector<9x8xbf16>
    %58 = vector.extract_strided_slice %12 {offsets = [8, 0], sizes = [8, 32], strides = [1, 1]} : vector<32x32xbf16> to vector<8x32xbf16>
    %cst_20 = arith.constant dense<0.000000e+00> : vector<9x32xf32>
    %59 = tpu.matmul %57, %58, %cst_20 {dimension_numbers = #tpu.dot_dimension_numbers<[1], [0], [0], [1], [0, 0, 1, 1], [], []>} : vector<9x8xbf16>, vector<8x32xbf16>, vector<9x32xf32> -> vector<9x32xf32>
    %60 = arith.addf %40, %59 : vector<9x32xf32>
    %61 = vector.extract_strided_slice %19 {offsets = [0, 16], sizes = [9, 8], strides = [1, 1]} : vector<18x96xbf16> to vector<9x8xbf16>
    %62 = vector.extract_strided_slice %19 {offsets = [0, 48], sizes = [9, 8], strides = [1, 1]} : vector<18x96xbf16> to vector<9x8xbf16>
    %63 = vector.extract_strided_slice %19 {offsets = [0, 80], sizes = [9, 8], strides = [1, 1]} : vector<18x96xbf16> to vector<9x8xbf16>
    "tpu.trace_start"() <{level = 10 : i32, message = "qe,ke->qk"}> : () -> ()
    %cst_21 = arith.constant dense<0.000000e+00> : vector<9x9xf32>
    %64 = tpu.matmul %61, %62, %cst_21 {dimension_numbers = #tpu.dot_dimension_numbers<[1], [1], [0], [0], [0, 0, 1, 0], [], []>} : vector<9x8xbf16>, vector<9x8xbf16>, vector<9x9xf32> -> vector<9x9xf32>
    "tpu.trace_stop"() : () -> ()
    %cst_22 = arith.constant dense<0xFF800000> : vector<9xf32>
    %65 = vector.multi_reduction <maximumf>, %64, %cst_22 [1] : vector<9x9xf32> to vector<9xf32>
    %66 = vector.shape_cast %65 : vector<9xf32> to vector<9x1xf32>
    %67 = vector.broadcast %66 : vector<9x1xf32> to vector<9x9xf32>
    %68 = arith.subf %64, %67 : vector<9x9xf32>
    %69 = math.exp %68 : vector<9x9xf32>
    %cst_23 = arith.constant dense<0.000000e+00> : vector<9xf32>
    %70 = vector.multi_reduction <add>, %69, %cst_23 [1] : vector<9x9xf32> to vector<9xf32>
    %71 = vector.shape_cast %70 : vector<9xf32> to vector<9x1xf32>
    %72 = tpu.reciprocal %71 {approx = true} : vector<9x1xf32> -> vector<9x1xf32>
    %73 = vector.broadcast %72 : vector<9x1xf32> to vector<9x9xf32>
    %74 = arith.mulf %69, %73 : vector<9x9xf32>
    %75 = arith.truncf %74 : vector<9x9xf32> to vector<9x9xbf16>
    %cst_24 = arith.constant dense<0.000000e+00> : vector<9x8xf32>
    %76 = tpu.matmul %75, %63, %cst_24 {dimension_numbers = #tpu.dot_dimension_numbers<[1], [0], [0], [1], [0, 0, 1, 1], [], []>} : vector<9x9xbf16>, vector<9x8xbf16>, vector<9x8xf32> -> vector<9x8xf32>
    %77 = arith.truncf %76 : vector<9x8xf32> to vector<9x8xbf16>
    %78 = vector.extract_strided_slice %12 {offsets = [16, 0], sizes = [8, 32], strides = [1, 1]} : vector<32x32xbf16> to vector<8x32xbf16>
    %cst_25 = arith.constant dense<0.000000e+00> : vector<9x32xf32>
    %79 = tpu.matmul %77, %78, %cst_25 {dimension_numbers = #tpu.dot_dimension_numbers<[1], [0], [0], [1], [0, 0, 1, 1], [], []>} : vector<9x8xbf16>, vector<8x32xbf16>, vector<9x32xf32> -> vector<9x32xf32>
    %80 = arith.addf %60, %79 : vector<9x32xf32>
    %81 = vector.extract_strided_slice %19 {offsets = [0, 24], sizes = [9, 8], strides = [1, 1]} : vector<18x96xbf16> to vector<9x8xbf16>
    %82 = vector.extract_strided_slice %19 {offsets = [0, 56], sizes = [9, 8], strides = [1, 1]} : vector<18x96xbf16> to vector<9x8xbf16>
    %83 = vector.extract_strided_slice %19 {offsets = [0, 88], sizes = [9, 8], strides = [1, 1]} : vector<18x96xbf16> to vector<9x8xbf16>
    "tpu.trace_start"() <{level = 10 : i32, message = "qe,ke->qk"}> : () -> ()
    %cst_26 = arith.constant dense<0.000000e+00> : vector<9x9xf32>
    %84 = tpu.matmul %81, %82, %cst_26 {dimension_numbers = #tpu.dot_dimension_numbers<[1], [1], [0], [0], [0, 0, 1, 0], [], []>} : vector<9x8xbf16>, vector<9x8xbf16>, vector<9x9xf32> -> vector<9x9xf32>
    "tpu.trace_stop"() : () -> ()
    %cst_27 = arith.constant dense<0xFF800000> : vector<9xf32>
    %85 = vector.multi_reduction <maximumf>, %84, %cst_27 [1] : vector<9x9xf32> to vector<9xf32>
    %86 = vector.shape_cast %85 : vector<9xf32> to vector<9x1xf32>
    %87 = vector.broadcast %86 : vector<9x1xf32> to vector<9x9xf32>
    %88 = arith.subf %84, %87 : vector<9x9xf32>
    %89 = math.exp %88 : vector<9x9xf32>
    %cst_28 = arith.constant dense<0.000000e+00> : vector<9xf32>
    %90 = vector.multi_reduction <add>, %89, %cst_28 [1] : vector<9x9xf32> to vector<9xf32>
    %91 = vector.shape_cast %90 : vector<9xf32> to vector<9x1xf32>
    %92 = tpu.reciprocal %91 {approx = true} : vector<9x1xf32> -> vector<9x1xf32>
    %93 = vector.broadcast %92 : vector<9x1xf32> to vector<9x9xf32>
    %94 = arith.mulf %89, %93 : vector<9x9xf32>
    %95 = arith.truncf %94 : vector<9x9xf32> to vector<9x9xbf16>
    %cst_29 = arith.constant dense<0.000000e+00> : vector<9x8xf32>
    %96 = tpu.matmul %95, %83, %cst_29 {dimension_numbers = #tpu.dot_dimension_numbers<[1], [0], [0], [1], [0, 0, 1, 1], [], []>} : vector<9x9xbf16>, vector<9x8xbf16>, vector<9x8xf32> -> vector<9x8xf32>
    %97 = arith.truncf %96 : vector<9x8xf32> to vector<9x8xbf16>
    %98 = vector.extract_strided_slice %12 {offsets = [24, 0], sizes = [8, 32], strides = [1, 1]} : vector<32x32xbf16> to vector<8x32xbf16>
    %cst_30 = arith.constant dense<0.000000e+00> : vector<9x32xf32>
    %99 = tpu.matmul %97, %98, %cst_30 {dimension_numbers = #tpu.dot_dimension_numbers<[1], [0], [0], [1], [0, 0, 1, 1], [], []>} : vector<9x8xbf16>, vector<8x32xbf16>, vector<9x32xf32> -> vector<9x32xf32>
    %100 = arith.addf %80, %99 : vector<9x32xf32>
    %cst_31 = arith.constant 0.000000e+00 : f32
    %101 = vector.broadcast %cst_31 : f32 to vector<9x32xf32>
    %102 = vector.extract_strided_slice %19 {offsets = [9, 0], sizes = [9, 8], strides = [1, 1]} : vector<18x96xbf16> to vector<9x8xbf16>
    %103 = vector.extract_strided_slice %19 {offsets = [9, 32], sizes = [9, 8], strides = [1, 1]} : vector<18x96xbf16> to vector<9x8xbf16>
    %104 = vector.extract_strided_slice %19 {offsets = [9, 64], sizes = [9, 8], strides = [1, 1]} : vector<18x96xbf16> to vector<9x8xbf16>
    "tpu.trace_start"() <{level = 10 : i32, message = "qe,ke->qk"}> : () -> ()
    %cst_32 = arith.constant dense<0.000000e+00> : vector<9x9xf32>
    %105 = tpu.matmul %102, %103, %cst_32 {dimension_numbers = #tpu.dot_dimension_numbers<[1], [1], [0], [0], [0, 0, 1, 0], [], []>} : vector<9x8xbf16>, vector<9x8xbf16>, vector<9x9xf32> -> vector<9x9xf32>
    "tpu.trace_stop"() : () -> ()
    %cst_33 = arith.constant dense<0xFF800000> : vector<9xf32>
    %106 = vector.multi_reduction <maximumf>, %105, %cst_33 [1] : vector<9x9xf32> to vector<9xf32>
    %107 = vector.shape_cast %106 : vector<9xf32> to vector<9x1xf32>
    %108 = vector.broadcast %107 : vector<9x1xf32> to vector<9x9xf32>
    %109 = arith.subf %105, %108 : vector<9x9xf32>
    %110 = math.exp %109 : vector<9x9xf32>
    %cst_34 = arith.constant dense<0.000000e+00> : vector<9xf32>
    %111 = vector.multi_reduction <add>, %110, %cst_34 [1] : vector<9x9xf32> to vector<9xf32>
    %112 = vector.shape_cast %111 : vector<9xf32> to vector<9x1xf32>
    %113 = tpu.reciprocal %112 {approx = true} : vector<9x1xf32> -> vector<9x1xf32>
    %114 = vector.broadcast %113 : vector<9x1xf32> to vector<9x9xf32>
    %115 = arith.mulf %110, %114 : vector<9x9xf32>
    %116 = arith.truncf %115 : vector<9x9xf32> to vector<9x9xbf16>
    %cst_35 = arith.constant dense<0.000000e+00> : vector<9x8xf32>
    %117 = tpu.matmul %116, %104, %cst_35 {dimension_numbers = #tpu.dot_dimension_numbers<[1], [0], [0], [1], [0, 0, 1, 1], [], []>} : vector<9x9xbf16>, vector<9x8xbf16>, vector<9x8xf32> -> vector<9x8xf32>
    %118 = arith.truncf %117 : vector<9x8xf32> to vector<9x8xbf16>
    %119 = vector.extract_strided_slice %12 {offsets = [0, 0], sizes = [8, 32], strides = [1, 1]} : vector<32x32xbf16> to vector<8x32xbf16>
    %cst_36 = arith.constant dense<0.000000e+00> : vector<9x32xf32>
    %120 = tpu.matmul %118, %119, %cst_36 {dimension_numbers = #tpu.dot_dimension_numbers<[1], [0], [0], [1], [0, 0, 1, 1], [], []>} : vector<9x8xbf16>, vector<8x32xbf16>, vector<9x32xf32> -> vector<9x32xf32>
    %121 = arith.addf %101, %120 : vector<9x32xf32>
    %122 = vector.extract_strided_slice %19 {offsets = [9, 8], sizes = [9, 8], strides = [1, 1]} : vector<18x96xbf16> to vector<9x8xbf16>
    %123 = vector.extract_strided_slice %19 {offsets = [9, 40], sizes = [9, 8], strides = [1, 1]} : vector<18x96xbf16> to vector<9x8xbf16>
    %124 = vector.extract_strided_slice %19 {offsets = [9, 72], sizes = [9, 8], strides = [1, 1]} : vector<18x96xbf16> to vector<9x8xbf16>
    "tpu.trace_start"() <{level = 10 : i32, message = "qe,ke->qk"}> : () -> ()
    %cst_37 = arith.constant dense<0.000000e+00> : vector<9x9xf32>
    %125 = tpu.matmul %122, %123, %cst_37 {dimension_numbers = #tpu.dot_dimension_numbers<[1], [1], [0], [0], [0, 0, 1, 0], [], []>} : vector<9x8xbf16>, vector<9x8xbf16>, vector<9x9xf32> -> vector<9x9xf32>
    "tpu.trace_stop"() : () -> ()
    %cst_38 = arith.constant dense<0xFF800000> : vector<9xf32>
    %126 = vector.multi_reduction <maximumf>, %125, %cst_38 [1] : vector<9x9xf32> to vector<9xf32>
    %127 = vector.shape_cast %126 : vector<9xf32> to vector<9x1xf32>
    %128 = vector.broadcast %127 : vector<9x1xf32> to vector<9x9xf32>
    %129 = arith.subf %125, %128 : vector<9x9xf32>
    %130 = math.exp %129 : vector<9x9xf32>
    %cst_39 = arith.constant dense<0.000000e+00> : vector<9xf32>
    %131 = vector.multi_reduction <add>, %130, %cst_39 [1] : vector<9x9xf32> to vector<9xf32>
    %132 = vector.shape_cast %131 : vector<9xf32> to vector<9x1xf32>
    %133 = tpu.reciprocal %132 {approx = true} : vector<9x1xf32> -> vector<9x1xf32>
    %134 = vector.broadcast %133 : vector<9x1xf32> to vector<9x9xf32>
    %135 = arith.mulf %130, %134 : vector<9x9xf32>
    %136 = arith.truncf %135 : vector<9x9xf32> to vector<9x9xbf16>
    %cst_40 = arith.constant dense<0.000000e+00> : vector<9x8xf32>
    %137 = tpu.matmul %136, %124, %cst_40 {dimension_numbers = #tpu.dot_dimension_numbers<[1], [0], [0], [1], [0, 0, 1, 1], [], []>} : vector<9x9xbf16>, vector<9x8xbf16>, vector<9x8xf32> -> vector<9x8xf32>
    %138 = arith.truncf %137 : vector<9x8xf32> to vector<9x8xbf16>
    %139 = vector.extract_strided_slice %12 {offsets = [8, 0], sizes = [8, 32], strides = [1, 1]} : vector<32x32xbf16> to vector<8x32xbf16>
    %cst_41 = arith.constant dense<0.000000e+00> : vector<9x32xf32>
    %140 = tpu.matmul %138, %139, %cst_41 {dimension_numbers = #tpu.dot_dimension_numbers<[1], [0], [0], [1], [0, 0, 1, 1], [], []>} : vector<9x8xbf16>, vector<8x32xbf16>, vector<9x32xf32> -> vector<9x32xf32>
    %141 = arith.addf %121, %140 : vector<9x32xf32>
    %142 = vector.extract_strided_slice %19 {offsets = [9, 16], sizes = [9, 8], strides = [1, 1]} : vector<18x96xbf16> to vector<9x8xbf16>
    %143 = vector.extract_strided_slice %19 {offsets = [9, 48], sizes = [9, 8], strides = [1, 1]} : vector<18x96xbf16> to vector<9x8xbf16>
    %144 = vector.extract_strided_slice %19 {offsets = [9, 80], sizes = [9, 8], strides = [1, 1]} : vector<18x96xbf16> to vector<9x8xbf16>
    "tpu.trace_start"() <{level = 10 : i32, message = "qe,ke->qk"}> : () -> ()
    %cst_42 = arith.constant dense<0.000000e+00> : vector<9x9xf32>
    %145 = tpu.matmul %142, %143, %cst_42 {dimension_numbers = #tpu.dot_dimension_numbers<[1], [1], [0], [0], [0, 0, 1, 0], [], []>} : vector<9x8xbf16>, vector<9x8xbf16>, vector<9x9xf32> -> vector<9x9xf32>
    "tpu.trace_stop"() : () -> ()
    %cst_43 = arith.constant dense<0xFF800000> : vector<9xf32>
    %146 = vector.multi_reduction <maximumf>, %145, %cst_43 [1] : vector<9x9xf32> to vector<9xf32>
    %147 = vector.shape_cast %146 : vector<9xf32> to vector<9x1xf32>
    %148 = vector.broadcast %147 : vector<9x1xf32> to vector<9x9xf32>
    %149 = arith.subf %145, %148 : vector<9x9xf32>
    %150 = math.exp %149 : vector<9x9xf32>
    %cst_44 = arith.constant dense<0.000000e+00> : vector<9xf32>
    %151 = vector.multi_reduction <add>, %150, %cst_44 [1] : vector<9x9xf32> to vector<9xf32>
    %152 = vector.shape_cast %151 : vector<9xf32> to vector<9x1xf32>
    %153 = tpu.reciprocal %152 {approx = true} : vector<9x1xf32> -> vector<9x1xf32>
    %154 = vector.broadcast %153 : vector<9x1xf32> to vector<9x9xf32>
    %155 = arith.mulf %150, %154 : vector<9x9xf32>
    %156 = arith.truncf %155 : vector<9x9xf32> to vector<9x9xbf16>
    %cst_45 = arith.constant dense<0.000000e+00> : vector<9x8xf32>
    %157 = tpu.matmul %156, %144, %cst_45 {dimension_numbers = #tpu.dot_dimension_numbers<[1], [0], [0], [1], [0, 0, 1, 1], [], []>} : vector<9x9xbf16>, vector<9x8xbf16>, vector<9x8xf32> -> vector<9x8xf32>
    %158 = arith.truncf %157 : vector<9x8xf32> to vector<9x8xbf16>
    %159 = vector.extract_strided_slice %12 {offsets = [16, 0], sizes = [8, 32], strides = [1, 1]} : vector<32x32xbf16> to vector<8x32xbf16>
    %cst_46 = arith.constant dense<0.000000e+00> : vector<9x32xf32>
    %160 = tpu.matmul %158, %159, %cst_46 {dimension_numbers = #tpu.dot_dimension_numbers<[1], [0], [0], [1], [0, 0, 1, 1], [], []>} : vector<9x8xbf16>, vector<8x32xbf16>, vector<9x32xf32> -> vector<9x32xf32>
    %161 = arith.addf %141, %160 : vector<9x32xf32>
    %162 = vector.extract_strided_slice %19 {offsets = [9, 24], sizes = [9, 8], strides = [1, 1]} : vector<18x96xbf16> to vector<9x8xbf16>
    %163 = vector.extract_strided_slice %19 {offsets = [9, 56], sizes = [9, 8], strides = [1, 1]} : vector<18x96xbf16> to vector<9x8xbf16>
    %164 = vector.extract_strided_slice %19 {offsets = [9, 88], sizes = [9, 8], strides = [1, 1]} : vector<18x96xbf16> to vector<9x8xbf16>
    "tpu.trace_start"() <{level = 10 : i32, message = "qe,ke->qk"}> : () -> ()
    %cst_47 = arith.constant dense<0.000000e+00> : vector<9x9xf32>
    %165 = tpu.matmul %162, %163, %cst_47 {dimension_numbers = #tpu.dot_dimension_numbers<[1], [1], [0], [0], [0, 0, 1, 0], [], []>} : vector<9x8xbf16>, vector<9x8xbf16>, vector<9x9xf32> -> vector<9x9xf32>
    "tpu.trace_stop"() : () -> ()
    %cst_48 = arith.constant dense<0xFF800000> : vector<9xf32>
    %166 = vector.multi_reduction <maximumf>, %165, %cst_48 [1] : vector<9x9xf32> to vector<9xf32>
    %167 = vector.shape_cast %166 : vector<9xf32> to vector<9x1xf32>
    %168 = vector.broadcast %167 : vector<9x1xf32> to vector<9x9xf32>
    %169 = arith.subf %165, %168 : vector<9x9xf32>
    %170 = math.exp %169 : vector<9x9xf32>
    %cst_49 = arith.constant dense<0.000000e+00> : vector<9xf32>
    %171 = vector.multi_reduction <add>, %170, %cst_49 [1] : vector<9x9xf32> to vector<9xf32>
    %172 = vector.shape_cast %171 : vector<9xf32> to vector<9x1xf32>
    %173 = tpu.reciprocal %172 {approx = true} : vector<9x1xf32> -> vector<9x1xf32>
    %174 = vector.broadcast %173 : vector<9x1xf32> to vector<9x9xf32>
    %175 = arith.mulf %170, %174 : vector<9x9xf32>
    %176 = arith.truncf %175 : vector<9x9xf32> to vector<9x9xbf16>
    %cst_50 = arith.constant dense<0.000000e+00> : vector<9x8xf32>
    %177 = tpu.matmul %176, %164, %cst_50 {dimension_numbers = #tpu.dot_dimension_numbers<[1], [0], [0], [1], [0, 0, 1, 1], [], []>} : vector<9x9xbf16>, vector<9x8xbf16>, vector<9x8xf32> -> vector<9x8xf32>
    %178 = arith.truncf %177 : vector<9x8xf32> to vector<9x8xbf16>
    %179 = vector.extract_strided_slice %12 {offsets = [24, 0], sizes = [8, 32], strides = [1, 1]} : vector<32x32xbf16> to vector<8x32xbf16>
    %cst_51 = arith.constant dense<0.000000e+00> : vector<9x32xf32>
    %180 = tpu.matmul %178, %179, %cst_51 {dimension_numbers = #tpu.dot_dimension_numbers<[1], [0], [0], [1], [0, 0, 1, 1], [], []>} : vector<9x8xbf16>, vector<8x32xbf16>, vector<9x32xf32> -> vector<9x32xf32>
    %181 = arith.addf %161, %180 : vector<9x32xf32>
    %182 = tpu.concatenate %100, %181 in 0 : vector<9x32xf32>, vector<9x32xf32> -> vector<18x32xf32>
    %183 = vector.broadcast %4 : vector<1x32xf32> to vector<18x32xf32>
    %184 = arith.addf %182, %183 : vector<18x32xf32>
    %185 = arith.addf %0, %184 : vector<18x32xf32>
    %cst_52 = arith.constant dense<0.000000e+00> : vector<18xf32>
    %186 = vector.multi_reduction <add>, %185, %cst_52 [1] : vector<18x32xf32> to vector<18xf32>
    %187 = vector.shape_cast %186 : vector<18xf32> to vector<18x1xf32>
    %cst_53 = arith.constant 3.200000e+01 : f32
    %188 = vector.broadcast %cst_53 : f32 to vector<18x1xf32>
    %189 = arith.divf %187, %188 : vector<18x1xf32>
    %190 = vector.broadcast %189 : vector<18x1xf32> to vector<18x32xf32>
    %191 = arith.subf %185, %190 : vector<18x32xf32>
    %192 = arith.mulf %191, %191 : vector<18x32xf32>
    %cst_54 = arith.constant dense<0.000000e+00> : vector<18xf32>
    %193 = vector.multi_reduction <add>, %192, %cst_54 [1] : vector<18x32xf32> to vector<18xf32>
    %194 = vector.shape_cast %193 : vector<18xf32> to vector<18x1xf32>
    %cst_55 = arith.constant 3.200000e+01 : f32
    %195 = vector.broadcast %cst_55 : f32 to vector<18x1xf32>
    %196 = arith.divf %194, %195 : vector<18x1xf32>
    %197 = vector.broadcast %189 : vector<18x1xf32> to vector<18x32xf32>
    %198 = arith.subf %185, %197 : vector<18x32xf32>
    %cst_56 = arith.constant 9.99999974E-6 : f32
    %199 = vector.broadcast %cst_56 : f32 to vector<18x1xf32>
    %200 = arith.addf %196, %199 : vector<18x1xf32>
    %201 = math.rsqrt %200 : vector<18x1xf32>
    %202 = vector.broadcast %201 : vector<18x1xf32> to vector<18x32xf32>
    %203 = arith.mulf %198, %202 : vector<18x32xf32>
    %204 = vector.broadcast %7 : vector<1x32xf32> to vector<18x32xf32>
    %205 = arith.mulf %203, %204 : vector<18x32xf32>
    %206 = vector.broadcast %8 : vector<1x32xf32> to vector<18x32xf32>
    %207 = arith.addf %205, %206 : vector<18x32xf32>
    %208 = arith.truncf %207 : vector<18x32xf32> to vector<18x32xbf16>
    %c0_57 = arith.constant 0 : index
    %c0_58 = arith.constant 0 : index
    %c0_59 = arith.constant 0 : index
    %209 = vector.load %arg3[%c0_57, %c0_58, %c0_59] : memref<2x32x64xbf16, #tpu.memory_space<vmem>>, vector<1x32x64xbf16>
    %210 = vector.shape_cast %209 : vector<1x32x64xbf16> to vector<32x64xbf16>
    %cst_60 = arith.constant dense<0.000000e+00> : vector<18x64xf32>
    %211 = tpu.matmul %208, %210, %cst_60 {dimension_numbers = #tpu.dot_dimension_numbers<[1], [0], [0], [1], [0, 0, 1, 1], [], []>} : vector<18x32xbf16>, vector<32x64xbf16>, vector<18x64xf32> -> vector<18x64xf32>
    %212 = vector.broadcast %5 : vector<1x64xf32> to vector<18x64xf32>
    %213 = arith.addf %211, %212 : vector<18x64xf32>
    %cst_61 = arith.constant 0.000000e+00 : f32
    %214 = vector.broadcast %cst_61 : f32 to vector<18x64xf32>
    %215 = arith.maximumf %213, %214 : vector<18x64xf32>
    %216 = arith.truncf %215 : vector<18x64xf32> to vector<18x64xbf16>
    %c0_62 = arith.constant 0 : index
    %c0_63 = arith.constant 0 : index
    %c0_64 = arith.constant 0 : index
    %217 = vector.load %arg4[%c0_62, %c0_63, %c0_64] : memref<2x64x32xbf16, #tpu.memory_space<vmem>>, vector<1x64x32xbf16>
    %218 = vector.shape_cast %217 : vector<1x64x32xbf16> to vector<64x32xbf16>
    %cst_65 = arith.constant dense<0.000000e+00> : vector<18x32xf32>
    %219 = tpu.matmul %216, %218, %cst_65 {dimension_numbers = #tpu.dot_dimension_numbers<[1], [0], [0], [1], [0, 0, 1, 1], [], []>} : vector<18x64xbf16>, vector<64x32xbf16>, vector<18x32xf32> -> vector<18x32xf32>
    %220 = vector.broadcast %6 : vector<1x32xf32> to vector<18x32xf32>
    %221 = arith.addf %219, %220 : vector<18x32xf32>
    %222 = arith.addf %207, %221 : vector<18x32xf32>
    %cst_66 = arith.constant dense<0.000000e+00> : vector<18xf32>
    %223 = vector.multi_reduction <add>, %222, %cst_66 [1] : vector<18x32xf32> to vector<18xf32>
    %224 = vector.shape_cast %223 : vector<18xf32> to vector<18x1xf32>
    %cst_67 = arith.constant 3.200000e+01 : f32
    %225 = vector.broadcast %cst_67 : f32 to vector<18x1xf32>
    %226 = arith.divf %224, %225 : vector<18x1xf32>
    %227 = vector.broadcast %226 : vector<18x1xf32> to vector<18x32xf32>
    %228 = arith.subf %222, %227 : vector<18x32xf32>
    %229 = arith.mulf %228, %228 : vector<18x32xf32>
    %cst_68 = arith.constant dense<0.000000e+00> : vector<18xf32>
    %230 = vector.multi_reduction <add>, %229, %cst_68 [1] : vector<18x32xf32> to vector<18xf32>
    %231 = vector.shape_cast %230 : vector<18xf32> to vector<18x1xf32>
    %cst_69 = arith.constant 3.200000e+01 : f32
    %232 = vector.broadcast %cst_69 : f32 to vector<18x1xf32>
    %233 = arith.divf %231, %232 : vector<18x1xf32>
    %234 = vector.broadcast %226 : vector<18x1xf32> to vector<18x32xf32>
    %235 = arith.subf %222, %234 : vector<18x32xf32>
    %cst_70 = arith.constant 9.99999974E-6 : f32
    %236 = vector.broadcast %cst_70 : f32 to vector<18x1xf32>
    %237 = arith.addf %233, %236 : vector<18x1xf32>
    %238 = math.rsqrt %237 : vector<18x1xf32>
    %239 = vector.broadcast %238 : vector<18x1xf32> to vector<18x32xf32>
    %240 = arith.mulf %235, %239 : vector<18x32xf32>
    %241 = vector.broadcast %9 : vector<1x32xf32> to vector<18x32xf32>
    %242 = arith.mulf %240, %241 : vector<18x32xf32>
    %243 = vector.broadcast %10 : vector<1x32xf32> to vector<18x32xf32>
    %244 = arith.addf %242, %243 : vector<18x32xf32>
    %c1 = arith.constant 1 : index
    %c0_71 = arith.constant 0 : index
    %c0_72 = arith.constant 0 : index
    %245 = vector.load %arg6[%c1, %c0_71, %c0_72] : memref<2x8x128xf32, #tpu.memory_space<vmem>>, vector<1x8x128xf32>
    %246 = vector.shape_cast %245 : vector<1x8x128xf32> to vector<8x128xf32>
    %247 = vector.extract_strided_slice %246 {offsets = [0, 0], sizes = [1, 96], strides = [1, 1]} : vector<8x128xf32> to vector<1x96xf32>
    %248 = vector.extract_strided_slice %246 {offsets = [1, 0], sizes = [1, 32], strides = [1, 1]} : vector<8x128xf32> to vector<1x32xf32>
    %249 = vector.extract_strided_slice %246 {offsets = [2, 0], sizes = [1, 64], strides = [1, 1]} : vector<8x128xf32> to vector<1x64xf32>
    %250 = vector.extract_strided_slice %246 {offsets = [3, 0], sizes = [1, 32], strides = [1, 1]} : vector<8x128xf32> to vector<1x32xf32>
    %251 = vector.extract_strided_slice %246 {offsets = [4, 0], sizes = [1, 32], strides = [1, 1]} : vector<8x128xf32> to vector<1x32xf32>
    %252 = vector.extract_strided_slice %246 {offsets = [5, 0], sizes = [1, 32], strides = [1, 1]} : vector<8x128xf32> to vector<1x32xf32>
    %253 = vector.extract_strided_slice %246 {offsets = [6, 0], sizes = [1, 32], strides = [1, 1]} : vector<8x128xf32> to vector<1x32xf32>
    %254 = vector.extract_strided_slice %246 {offsets = [7, 0], sizes = [1, 32], strides = [1, 1]} : vector<8x128xf32> to vector<1x32xf32>
    %c1_73 = arith.constant 1 : index
    %c0_74 = arith.constant 0 : index
    %c0_75 = arith.constant 0 : index
    %255 = vector.load %arg2[%c1_73, %c0_74, %c0_75] : memref<2x32x32xbf16, #tpu.memory_space<vmem>>, vector<1x32x32xbf16>
    %256 = vector.shape_cast %255 : vector<1x32x32xbf16> to vector<32x32xbf16>
    %257 = arith.truncf %244 : vector<18x32xf32> to vector<18x32xbf16>
    %c1_76 = arith.constant 1 : index
    %c0_77 = arith.constant 0 : index
    %c0_78 = arith.constant 0 : index
    %258 = vector.load %arg1[%c1_76, %c0_77, %c0_78] : memref<2x32x96xbf16, #tpu.memory_space<vmem>>, vector<1x32x96xbf16>
    %259 = vector.shape_cast %258 : vector<1x32x96xbf16> to vector<32x96xbf16>
    %cst_79 = arith.constant dense<0.000000e+00> : vector<18x96xf32>
    %260 = tpu.matmul %257, %259, %cst_79 {dimension_numbers = #tpu.dot_dimension_numbers<[1], [0], [0], [1], [0, 0, 1, 1], [], []>} : vector<18x32xbf16>, vector<32x96xbf16>, vector<18x96xf32> -> vector<18x96xf32>
    %261 = vector.broadcast %247 : vector<1x96xf32> to vector<18x96xf32>
    %262 = arith.addf %260, %261 : vector<18x96xf32>
    %263 = arith.truncf %262 : vector<18x96xf32> to vector<18x96xbf16>
    %cst_80 = arith.constant 0.000000e+00 : f32
    %264 = vector.broadcast %cst_80 : f32 to vector<9x32xf32>
    %265 = vector.extract_strided_slice %263 {offsets = [0, 0], sizes = [9, 8], strides = [1, 1]} : vector<18x96xbf16> to vector<9x8xbf16>
    %266 = vector.extract_strided_slice %263 {offsets = [0, 32], sizes = [9, 8], strides = [1, 1]} : vector<18x96xbf16> to vector<9x8xbf16>
    %267 = vector.extract_strided_slice %263 {offsets = [0, 64], sizes = [9, 8], strides = [1, 1]} : vector<18x96xbf16> to vector<9x8xbf16>
    "tpu.trace_start"() <{level = 10 : i32, message = "qe,ke->qk"}> : () -> ()
    %cst_81 = arith.constant dense<0.000000e+00> : vector<9x9xf32>
    %268 = tpu.matmul %265, %266, %cst_81 {dimension_numbers = #tpu.dot_dimension_numbers<[1], [1], [0], [0], [0, 0, 1, 0], [], []>} : vector<9x8xbf16>, vector<9x8xbf16>, vector<9x9xf32> -> vector<9x9xf32>
    "tpu.trace_stop"() : () -> ()
    %cst_82 = arith.constant dense<0xFF800000> : vector<9xf32>
    %269 = vector.multi_reduction <maximumf>, %268, %cst_82 [1] : vector<9x9xf32> to vector<9xf32>
    %270 = vector.shape_cast %269 : vector<9xf32> to vector<9x1xf32>
    %271 = vector.broadcast %270 : vector<9x1xf32> to vector<9x9xf32>
    %272 = arith.subf %268, %271 : vector<9x9xf32>
    %273 = math.exp %272 : vector<9x9xf32>
    %cst_83 = arith.constant dense<0.000000e+00> : vector<9xf32>
    %274 = vector.multi_reduction <add>, %273, %cst_83 [1] : vector<9x9xf32> to vector<9xf32>
    %275 = vector.shape_cast %274 : vector<9xf32> to vector<9x1xf32>
    %276 = tpu.reciprocal %275 {approx = true} : vector<9x1xf32> -> vector<9x1xf32>
    %277 = vector.broadcast %276 : vector<9x1xf32> to vector<9x9xf32>
    %278 = arith.mulf %273, %277 : vector<9x9xf32>
    %279 = arith.truncf %278 : vector<9x9xf32> to vector<9x9xbf16>
    %cst_84 = arith.constant dense<0.000000e+00> : vector<9x8xf32>
    %280 = tpu.matmul %279, %267, %cst_84 {dimension_numbers = #tpu.dot_dimension_numbers<[1], [0], [0], [1], [0, 0, 1, 1], [], []>} : vector<9x9xbf16>, vector<9x8xbf16>, vector<9x8xf32> -> vector<9x8xf32>
    %281 = arith.truncf %280 : vector<9x8xf32> to vector<9x8xbf16>
    %282 = vector.extract_strided_slice %256 {offsets = [0, 0], sizes = [8, 32], strides = [1, 1]} : vector<32x32xbf16> to vector<8x32xbf16>
    %cst_85 = arith.constant dense<0.000000e+00> : vector<9x32xf32>
    %283 = tpu.matmul %281, %282, %cst_85 {dimension_numbers = #tpu.dot_dimension_numbers<[1], [0], [0], [1], [0, 0, 1, 1], [], []>} : vector<9x8xbf16>, vector<8x32xbf16>, vector<9x32xf32> -> vector<9x32xf32>
    %284 = arith.addf %264, %283 : vector<9x32xf32>
    %285 = vector.extract_strided_slice %263 {offsets = [0, 8], sizes = [9, 8], strides = [1, 1]} : vector<18x96xbf16> to vector<9x8xbf16>
    %286 = vector.extract_strided_slice %263 {offsets = [0, 40], sizes = [9, 8], strides = [1, 1]} : vector<18x96xbf16> to vector<9x8xbf16>
    %287 = vector.extract_strided_slice %263 {offsets = [0, 72], sizes = [9, 8], strides = [1, 1]} : vector<18x96xbf16> to vector<9x8xbf16>
    "tpu.trace_start"() <{level = 10 : i32, message = "qe,ke->qk"}> : () -> ()
    %cst_86 = arith.constant dense<0.000000e+00> : vector<9x9xf32>
    %288 = tpu.matmul %285, %286, %cst_86 {dimension_numbers = #tpu.dot_dimension_numbers<[1], [1], [0], [0], [0, 0, 1, 0], [], []>} : vector<9x8xbf16>, vector<9x8xbf16>, vector<9x9xf32> -> vector<9x9xf32>
    "tpu.trace_stop"() : () -> ()
    %cst_87 = arith.constant dense<0xFF800000> : vector<9xf32>
    %289 = vector.multi_reduction <maximumf>, %288, %cst_87 [1] : vector<9x9xf32> to vector<9xf32>
    %290 = vector.shape_cast %289 : vector<9xf32> to vector<9x1xf32>
    %291 = vector.broadcast %290 : vector<9x1xf32> to vector<9x9xf32>
    %292 = arith.subf %288, %291 : vector<9x9xf32>
    %293 = math.exp %292 : vector<9x9xf32>
    %cst_88 = arith.constant dense<0.000000e+00> : vector<9xf32>
    %294 = vector.multi_reduction <add>, %293, %cst_88 [1] : vector<9x9xf32> to vector<9xf32>
    %295 = vector.shape_cast %294 : vector<9xf32> to vector<9x1xf32>
    %296 = tpu.reciprocal %295 {approx = true} : vector<9x1xf32> -> vector<9x1xf32>
    %297 = vector.broadcast %296 : vector<9x1xf32> to vector<9x9xf32>
    %298 = arith.mulf %293, %297 : vector<9x9xf32>
    %299 = arith.truncf %298 : vector<9x9xf32> to vector<9x9xbf16>
    %cst_89 = arith.constant dense<0.000000e+00> : vector<9x8xf32>
    %300 = tpu.matmul %299, %287, %cst_89 {dimension_numbers = #tpu.dot_dimension_numbers<[1], [0], [0], [1], [0, 0, 1, 1], [], []>} : vector<9x9xbf16>, vector<9x8xbf16>, vector<9x8xf32> -> vector<9x8xf32>
    %301 = arith.truncf %300 : vector<9x8xf32> to vector<9x8xbf16>
    %302 = vector.extract_strided_slice %256 {offsets = [8, 0], sizes = [8, 32], strides = [1, 1]} : vector<32x32xbf16> to vector<8x32xbf16>
    %cst_90 = arith.constant dense<0.000000e+00> : vector<9x32xf32>
    %303 = tpu.matmul %301, %302, %cst_90 {dimension_numbers = #tpu.dot_dimension_numbers<[1], [0], [0], [1], [0, 0, 1, 1], [], []>} : vector<9x8xbf16>, vector<8x32xbf16>, vector<9x32xf32> -> vector<9x32xf32>
    %304 = arith.addf %284, %303 : vector<9x32xf32>
    %305 = vector.extract_strided_slice %263 {offsets = [0, 16], sizes = [9, 8], strides = [1, 1]} : vector<18x96xbf16> to vector<9x8xbf16>
    %306 = vector.extract_strided_slice %263 {offsets = [0, 48], sizes = [9, 8], strides = [1, 1]} : vector<18x96xbf16> to vector<9x8xbf16>
    %307 = vector.extract_strided_slice %263 {offsets = [0, 80], sizes = [9, 8], strides = [1, 1]} : vector<18x96xbf16> to vector<9x8xbf16>
    "tpu.trace_start"() <{level = 10 : i32, message = "qe,ke->qk"}> : () -> ()
    %cst_91 = arith.constant dense<0.000000e+00> : vector<9x9xf32>
    %308 = tpu.matmul %305, %306, %cst_91 {dimension_numbers = #tpu.dot_dimension_numbers<[1], [1], [0], [0], [0, 0, 1, 0], [], []>} : vector<9x8xbf16>, vector<9x8xbf16>, vector<9x9xf32> -> vector<9x9xf32>
    "tpu.trace_stop"() : () -> ()
    %cst_92 = arith.constant dense<0xFF800000> : vector<9xf32>
    %309 = vector.multi_reduction <maximumf>, %308, %cst_92 [1] : vector<9x9xf32> to vector<9xf32>
    %310 = vector.shape_cast %309 : vector<9xf32> to vector<9x1xf32>
    %311 = vector.broadcast %310 : vector<9x1xf32> to vector<9x9xf32>
    %312 = arith.subf %308, %311 : vector<9x9xf32>
    %313 = math.exp %312 : vector<9x9xf32>
    %cst_93 = arith.constant dense<0.000000e+00> : vector<9xf32>
    %314 = vector.multi_reduction <add>, %313, %cst_93 [1] : vector<9x9xf32> to vector<9xf32>
    %315 = vector.shape_cast %314 : vector<9xf32> to vector<9x1xf32>
    %316 = tpu.reciprocal %315 {approx = true} : vector<9x1xf32> -> vector<9x1xf32>
    %317 = vector.broadcast %316 : vector<9x1xf32> to vector<9x9xf32>
    %318 = arith.mulf %313, %317 : vector<9x9xf32>
    %319 = arith.truncf %318 : vector<9x9xf32> to vector<9x9xbf16>
    %cst_94 = arith.constant dense<0.000000e+00> : vector<9x8xf32>
    %320 = tpu.matmul %319, %307, %cst_94 {dimension_numbers = #tpu.dot_dimension_numbers<[1], [0], [0], [1], [0, 0, 1, 1], [], []>} : vector<9x9xbf16>, vector<9x8xbf16>, vector<9x8xf32> -> vector<9x8xf32>
    %321 = arith.truncf %320 : vector<9x8xf32> to vector<9x8xbf16>
    %322 = vector.extract_strided_slice %256 {offsets = [16, 0], sizes = [8, 32], strides = [1, 1]} : vector<32x32xbf16> to vector<8x32xbf16>
    %cst_95 = arith.constant dense<0.000000e+00> : vector<9x32xf32>
    %323 = tpu.matmul %321, %322, %cst_95 {dimension_numbers = #tpu.dot_dimension_numbers<[1], [0], [0], [1], [0, 0, 1, 1], [], []>} : vector<9x8xbf16>, vector<8x32xbf16>, vector<9x32xf32> -> vector<9x32xf32>
    %324 = arith.addf %304, %323 : vector<9x32xf32>
    %325 = vector.extract_strided_slice %263 {offsets = [0, 24], sizes = [9, 8], strides = [1, 1]} : vector<18x96xbf16> to vector<9x8xbf16>
    %326 = vector.extract_strided_slice %263 {offsets = [0, 56], sizes = [9, 8], strides = [1, 1]} : vector<18x96xbf16> to vector<9x8xbf16>
    %327 = vector.extract_strided_slice %263 {offsets = [0, 88], sizes = [9, 8], strides = [1, 1]} : vector<18x96xbf16> to vector<9x8xbf16>
    "tpu.trace_start"() <{level = 10 : i32, message = "qe,ke->qk"}> : () -> ()
    %cst_96 = arith.constant dense<0.000000e+00> : vector<9x9xf32>
    %328 = tpu.matmul %325, %326, %cst_96 {dimension_numbers = #tpu.dot_dimension_numbers<[1], [1], [0], [0], [0, 0, 1, 0], [], []>} : vector<9x8xbf16>, vector<9x8xbf16>, vector<9x9xf32> -> vector<9x9xf32>
    "tpu.trace_stop"() : () -> ()
    %cst_97 = arith.constant dense<0xFF800000> : vector<9xf32>
    %329 = vector.multi_reduction <maximumf>, %328, %cst_97 [1] : vector<9x9xf32> to vector<9xf32>
    %330 = vector.shape_cast %329 : vector<9xf32> to vector<9x1xf32>
    %331 = vector.broadcast %330 : vector<9x1xf32> to vector<9x9xf32>
    %332 = arith.subf %328, %331 : vector<9x9xf32>
    %333 = math.exp %332 : vector<9x9xf32>
    %cst_98 = arith.constant dense<0.000000e+00> : vector<9xf32>
    %334 = vector.multi_reduction <add>, %333, %cst_98 [1] : vector<9x9xf32> to vector<9xf32>
    %335 = vector.shape_cast %334 : vector<9xf32> to vector<9x1xf32>
    %336 = tpu.reciprocal %335 {approx = true} : vector<9x1xf32> -> vector<9x1xf32>
    %337 = vector.broadcast %336 : vector<9x1xf32> to vector<9x9xf32>
    %338 = arith.mulf %333, %337 : vector<9x9xf32>
    %339 = arith.truncf %338 : vector<9x9xf32> to vector<9x9xbf16>
    %cst_99 = arith.constant dense<0.000000e+00> : vector<9x8xf32>
    %340 = tpu.matmul %339, %327, %cst_99 {dimension_numbers = #tpu.dot_dimension_numbers<[1], [0], [0], [1], [0, 0, 1, 1], [], []>} : vector<9x9xbf16>, vector<9x8xbf16>, vector<9x8xf32> -> vector<9x8xf32>
    %341 = arith.truncf %340 : vector<9x8xf32> to vector<9x8xbf16>
    %342 = vector.extract_strided_slice %256 {offsets = [24, 0], sizes = [8, 32], strides = [1, 1]} : vector<32x32xbf16> to vector<8x32xbf16>
    %cst_100 = arith.constant dense<0.000000e+00> : vector<9x32xf32>
    %343 = tpu.matmul %341, %342, %cst_100 {dimension_numbers = #tpu.dot_dimension_numbers<[1], [0], [0], [1], [0, 0, 1, 1], [], []>} : vector<9x8xbf16>, vector<8x32xbf16>, vector<9x32xf32> -> vector<9x32xf32>
    %344 = arith.addf %324, %343 : vector<9x32xf32>
    %cst_101 = arith.constant 0.000000e+00 : f32
    %345 = vector.broadcast %cst_101 : f32 to vector<9x32xf32>
    %346 = vector.extract_strided_slice %263 {offsets = [9, 0], sizes = [9, 8], strides = [1, 1]} : vector<18x96xbf16> to vector<9x8xbf16>
    %347 = vector.extract_strided_slice %263 {offsets = [9, 32], sizes = [9, 8], strides = [1, 1]} : vector<18x96xbf16> to vector<9x8xbf16>
    %348 = vector.extract_strided_slice %263 {offsets = [9, 64], sizes = [9, 8], strides = [1, 1]} : vector<18x96xbf16> to vector<9x8xbf16>
    "tpu.trace_start"() <{level = 10 : i32, message = "qe,ke->qk"}> : () -> ()
    %cst_102 = arith.constant dense<0.000000e+00> : vector<9x9xf32>
    %349 = tpu.matmul %346, %347, %cst_102 {dimension_numbers = #tpu.dot_dimension_numbers<[1], [1], [0], [0], [0, 0, 1, 0], [], []>} : vector<9x8xbf16>, vector<9x8xbf16>, vector<9x9xf32> -> vector<9x9xf32>
    "tpu.trace_stop"() : () -> ()
    %cst_103 = arith.constant dense<0xFF800000> : vector<9xf32>
    %350 = vector.multi_reduction <maximumf>, %349, %cst_103 [1] : vector<9x9xf32> to vector<9xf32>
    %351 = vector.shape_cast %350 : vector<9xf32> to vector<9x1xf32>
    %352 = vector.broadcast %351 : vector<9x1xf32> to vector<9x9xf32>
    %353 = arith.subf %349, %352 : vector<9x9xf32>
    %354 = math.exp %353 : vector<9x9xf32>
    %cst_104 = arith.constant dense<0.000000e+00> : vector<9xf32>
    %355 = vector.multi_reduction <add>, %354, %cst_104 [1] : vector<9x9xf32> to vector<9xf32>
    %356 = vector.shape_cast %355 : vector<9xf32> to vector<9x1xf32>
    %357 = tpu.reciprocal %356 {approx = true} : vector<9x1xf32> -> vector<9x1xf32>
    %358 = vector.broadcast %357 : vector<9x1xf32> to vector<9x9xf32>
    %359 = arith.mulf %354, %358 : vector<9x9xf32>
    %360 = arith.truncf %359 : vector<9x9xf32> to vector<9x9xbf16>
    %cst_105 = arith.constant dense<0.000000e+00> : vector<9x8xf32>
    %361 = tpu.matmul %360, %348, %cst_105 {dimension_numbers = #tpu.dot_dimension_numbers<[1], [0], [0], [1], [0, 0, 1, 1], [], []>} : vector<9x9xbf16>, vector<9x8xbf16>, vector<9x8xf32> -> vector<9x8xf32>
    %362 = arith.truncf %361 : vector<9x8xf32> to vector<9x8xbf16>
    %363 = vector.extract_strided_slice %256 {offsets = [0, 0], sizes = [8, 32], strides = [1, 1]} : vector<32x32xbf16> to vector<8x32xbf16>
    %cst_106 = arith.constant dense<0.000000e+00> : vector<9x32xf32>
    %364 = tpu.matmul %362, %363, %cst_106 {dimension_numbers = #tpu.dot_dimension_numbers<[1], [0], [0], [1], [0, 0, 1, 1], [], []>} : vector<9x8xbf16>, vector<8x32xbf16>, vector<9x32xf32> -> vector<9x32xf32>
    %365 = arith.addf %345, %364 : vector<9x32xf32>
    %366 = vector.extract_strided_slice %263 {offsets = [9, 8], sizes = [9, 8], strides = [1, 1]} : vector<18x96xbf16> to vector<9x8xbf16>
    %367 = vector.extract_strided_slice %263 {offsets = [9, 40], sizes = [9, 8], strides = [1, 1]} : vector<18x96xbf16> to vector<9x8xbf16>
    %368 = vector.extract_strided_slice %263 {offsets = [9, 72], sizes = [9, 8], strides = [1, 1]} : vector<18x96xbf16> to vector<9x8xbf16>
    "tpu.trace_start"() <{level = 10 : i32, message = "qe,ke->qk"}> : () -> ()
    %cst_107 = arith.constant dense<0.000000e+00> : vector<9x9xf32>
    %369 = tpu.matmul %366, %367, %cst_107 {dimension_numbers = #tpu.dot_dimension_numbers<[1], [1], [0], [0], [0, 0, 1, 0], [], []>} : vector<9x8xbf16>, vector<9x8xbf16>, vector<9x9xf32> -> vector<9x9xf32>
    "tpu.trace_stop"() : () -> ()
    %cst_108 = arith.constant dense<0xFF800000> : vector<9xf32>
    %370 = vector.multi_reduction <maximumf>, %369, %cst_108 [1] : vector<9x9xf32> to vector<9xf32>
    %371 = vector.shape_cast %370 : vector<9xf32> to vector<9x1xf32>
    %372 = vector.broadcast %371 : vector<9x1xf32> to vector<9x9xf32>
    %373 = arith.subf %369, %372 : vector<9x9xf32>
    %374 = math.exp %373 : vector<9x9xf32>
    %cst_109 = arith.constant dense<0.000000e+00> : vector<9xf32>
    %375 = vector.multi_reduction <add>, %374, %cst_109 [1] : vector<9x9xf32> to vector<9xf32>
    %376 = vector.shape_cast %375 : vector<9xf32> to vector<9x1xf32>
    %377 = tpu.reciprocal %376 {approx = true} : vector<9x1xf32> -> vector<9x1xf32>
    %378 = vector.broadcast %377 : vector<9x1xf32> to vector<9x9xf32>
    %379 = arith.mulf %374, %378 : vector<9x9xf32>
    %380 = arith.truncf %379 : vector<9x9xf32> to vector<9x9xbf16>
    %cst_110 = arith.constant dense<0.000000e+00> : vector<9x8xf32>
    %381 = tpu.matmul %380, %368, %cst_110 {dimension_numbers = #tpu.dot_dimension_numbers<[1], [0], [0], [1], [0, 0, 1, 1], [], []>} : vector<9x9xbf16>, vector<9x8xbf16>, vector<9x8xf32> -> vector<9x8xf32>
    %382 = arith.truncf %381 : vector<9x8xf32> to vector<9x8xbf16>
    %383 = vector.extract_strided_slice %256 {offsets = [8, 0], sizes = [8, 32], strides = [1, 1]} : vector<32x32xbf16> to vector<8x32xbf16>
    %cst_111 = arith.constant dense<0.000000e+00> : vector<9x32xf32>
    %384 = tpu.matmul %382, %383, %cst_111 {dimension_numbers = #tpu.dot_dimension_numbers<[1], [0], [0], [1], [0, 0, 1, 1], [], []>} : vector<9x8xbf16>, vector<8x32xbf16>, vector<9x32xf32> -> vector<9x32xf32>
    %385 = arith.addf %365, %384 : vector<9x32xf32>
    %386 = vector.extract_strided_slice %263 {offsets = [9, 16], sizes = [9, 8], strides = [1, 1]} : vector<18x96xbf16> to vector<9x8xbf16>
    %387 = vector.extract_strided_slice %263 {offsets = [9, 48], sizes = [9, 8], strides = [1, 1]} : vector<18x96xbf16> to vector<9x8xbf16>
    %388 = vector.extract_strided_slice %263 {offsets = [9, 80], sizes = [9, 8], strides = [1, 1]} : vector<18x96xbf16> to vector<9x8xbf16>
    "tpu.trace_start"() <{level = 10 : i32, message = "qe,ke->qk"}> : () -> ()
    %cst_112 = arith.constant dense<0.000000e+00> : vector<9x9xf32>
    %389 = tpu.matmul %386, %387, %cst_112 {dimension_numbers = #tpu.dot_dimension_numbers<[1], [1], [0], [0], [0, 0, 1, 0], [], []>} : vector<9x8xbf16>, vector<9x8xbf16>, vector<9x9xf32> -> vector<9x9xf32>
    "tpu.trace_stop"() : () -> ()
    %cst_113 = arith.constant dense<0xFF800000> : vector<9xf32>
    %390 = vector.multi_reduction <maximumf>, %389, %cst_113 [1] : vector<9x9xf32> to vector<9xf32>
    %391 = vector.shape_cast %390 : vector<9xf32> to vector<9x1xf32>
    %392 = vector.broadcast %391 : vector<9x1xf32> to vector<9x9xf32>
    %393 = arith.subf %389, %392 : vector<9x9xf32>
    %394 = math.exp %393 : vector<9x9xf32>
    %cst_114 = arith.constant dense<0.000000e+00> : vector<9xf32>
    %395 = vector.multi_reduction <add>, %394, %cst_114 [1] : vector<9x9xf32> to vector<9xf32>
    %396 = vector.shape_cast %395 : vector<9xf32> to vector<9x1xf32>
    %397 = tpu.reciprocal %396 {approx = true} : vector<9x1xf32> -> vector<9x1xf32>
    %398 = vector.broadcast %397 : vector<9x1xf32> to vector<9x9xf32>
    %399 = arith.mulf %394, %398 : vector<9x9xf32>
    %400 = arith.truncf %399 : vector<9x9xf32> to vector<9x9xbf16>
    %cst_115 = arith.constant dense<0.000000e+00> : vector<9x8xf32>
    %401 = tpu.matmul %400, %388, %cst_115 {dimension_numbers = #tpu.dot_dimension_numbers<[1], [0], [0], [1], [0, 0, 1, 1], [], []>} : vector<9x9xbf16>, vector<9x8xbf16>, vector<9x8xf32> -> vector<9x8xf32>
    %402 = arith.truncf %401 : vector<9x8xf32> to vector<9x8xbf16>
    %403 = vector.extract_strided_slice %256 {offsets = [16, 0], sizes = [8, 32], strides = [1, 1]} : vector<32x32xbf16> to vector<8x32xbf16>
    %cst_116 = arith.constant dense<0.000000e+00> : vector<9x32xf32>
    %404 = tpu.matmul %402, %403, %cst_116 {dimension_numbers = #tpu.dot_dimension_numbers<[1], [0], [0], [1], [0, 0, 1, 1], [], []>} : vector<9x8xbf16>, vector<8x32xbf16>, vector<9x32xf32> -> vector<9x32xf32>
    %405 = arith.addf %385, %404 : vector<9x32xf32>
    %406 = vector.extract_strided_slice %263 {offsets = [9, 24], sizes = [9, 8], strides = [1, 1]} : vector<18x96xbf16> to vector<9x8xbf16>
    %407 = vector.extract_strided_slice %263 {offsets = [9, 56], sizes = [9, 8], strides = [1, 1]} : vector<18x96xbf16> to vector<9x8xbf16>
    %408 = vector.extract_strided_slice %263 {offsets = [9, 88], sizes = [9, 8], strides = [1, 1]} : vector<18x96xbf16> to vector<9x8xbf16>
    "tpu.trace_start"() <{level = 10 : i32, message = "qe,ke->qk"}> : () -> ()
    %cst_117 = arith.constant dense<0.000000e+00> : vector<9x9xf32>
    %409 = tpu.matmul %406, %407, %cst_117 {dimension_numbers = #tpu.dot_dimension_numbers<[1], [1], [0], [0], [0, 0, 1, 0], [], []>} : vector<9x8xbf16>, vector<9x8xbf16>, vector<9x9xf32> -> vector<9x9xf32>
    "tpu.trace_stop"() : () -> ()
    %cst_118 = arith.constant dense<0xFF800000> : vector<9xf32>
    %410 = vector.multi_reduction <maximumf>, %409, %cst_118 [1] : vector<9x9xf32> to vector<9xf32>
    %411 = vector.shape_cast %410 : vector<9xf32> to vector<9x1xf32>
    %412 = vector.broadcast %411 : vector<9x1xf32> to vector<9x9xf32>
    %413 = arith.subf %409, %412 : vector<9x9xf32>
    %414 = math.exp %413 : vector<9x9xf32>
    %cst_119 = arith.constant dense<0.000000e+00> : vector<9xf32>
    %415 = vector.multi_reduction <add>, %414, %cst_119 [1] : vector<9x9xf32> to vector<9xf32>
    %416 = vector.shape_cast %415 : vector<9xf32> to vector<9x1xf32>
    %417 = tpu.reciprocal %416 {approx = true} : vector<9x1xf32> -> vector<9x1xf32>
    %418 = vector.broadcast %417 : vector<9x1xf32> to vector<9x9xf32>
    %419 = arith.mulf %414, %418 : vector<9x9xf32>
    %420 = arith.truncf %419 : vector<9x9xf32> to vector<9x9xbf16>
    %cst_120 = arith.constant dense<0.000000e+00> : vector<9x8xf32>
    %421 = tpu.matmul %420, %408, %cst_120 {dimension_numbers = #tpu.dot_dimension_numbers<[1], [0], [0], [1], [0, 0, 1, 1], [], []>} : vector<9x9xbf16>, vector<9x8xbf16>, vector<9x8xf32> -> vector<9x8xf32>
    %422 = arith.truncf %421 : vector<9x8xf32> to vector<9x8xbf16>
    %423 = vector.extract_strided_slice %256 {offsets = [24, 0], sizes = [8, 32], strides = [1, 1]} : vector<32x32xbf16> to vector<8x32xbf16>
    %cst_121 = arith.constant dense<0.000000e+00> : vector<9x32xf32>
    %424 = tpu.matmul %422, %423, %cst_121 {dimension_numbers = #tpu.dot_dimension_numbers<[1], [0], [0], [1], [0, 0, 1, 1], [], []>} : vector<9x8xbf16>, vector<8x32xbf16>, vector<9x32xf32> -> vector<9x32xf32>
    %425 = arith.addf %405, %424 : vector<9x32xf32>
    %426 = tpu.concatenate %344, %425 in 0 : vector<9x32xf32>, vector<9x32xf32> -> vector<18x32xf32>
    %427 = vector.broadcast %248 : vector<1x32xf32> to vector<18x32xf32>
    %428 = arith.addf %426, %427 : vector<18x32xf32>
    %429 = arith.addf %244, %428 : vector<18x32xf32>
    %cst_122 = arith.constant dense<0.000000e+00> : vector<18xf32>
    %430 = vector.multi_reduction <add>, %429, %cst_122 [1] : vector<18x32xf32> to vector<18xf32>
    %431 = vector.shape_cast %430 : vector<18xf32> to vector<18x1xf32>
    %cst_123 = arith.constant 3.200000e+01 : f32
    %432 = vector.broadcast %cst_123 : f32 to vector<18x1xf32>
    %433 = arith.divf %431, %432 : vector<18x1xf32>
    %434 = vector.broadcast %433 : vector<18x1xf32> to vector<18x32xf32>
    %435 = arith.subf %429, %434 : vector<18x32xf32>
    %436 = arith.mulf %435, %435 : vector<18x32xf32>
    %cst_124 = arith.constant dense<0.000000e+00> : vector<18xf32>
    %437 = vector.multi_reduction <add>, %436, %cst_124 [1] : vector<18x32xf32> to vector<18xf32>
    %438 = vector.shape_cast %437 : vector<18xf32> to vector<18x1xf32>
    %cst_125 = arith.constant 3.200000e+01 : f32
    %439 = vector.broadcast %cst_125 : f32 to vector<18x1xf32>
    %440 = arith.divf %438, %439 : vector<18x1xf32>
    %441 = vector.broadcast %433 : vector<18x1xf32> to vector<18x32xf32>
    %442 = arith.subf %429, %441 : vector<18x32xf32>
    %cst_126 = arith.constant 9.99999974E-6 : f32
    %443 = vector.broadcast %cst_126 : f32 to vector<18x1xf32>
    %444 = arith.addf %440, %443 : vector<18x1xf32>
    %445 = math.rsqrt %444 : vector<18x1xf32>
    %446 = vector.broadcast %445 : vector<18x1xf32> to vector<18x32xf32>
    %447 = arith.mulf %442, %446 : vector<18x32xf32>
    %448 = vector.broadcast %251 : vector<1x32xf32> to vector<18x32xf32>
    %449 = arith.mulf %447, %448 : vector<18x32xf32>
    %450 = vector.broadcast %252 : vector<1x32xf32> to vector<18x32xf32>
    %451 = arith.addf %449, %450 : vector<18x32xf32>
    %452 = arith.truncf %451 : vector<18x32xf32> to vector<18x32xbf16>
    %c1_127 = arith.constant 1 : index
    %c0_128 = arith.constant 0 : index
    %c0_129 = arith.constant 0 : index
    %453 = vector.load %arg3[%c1_127, %c0_128, %c0_129] : memref<2x32x64xbf16, #tpu.memory_space<vmem>>, vector<1x32x64xbf16>
    %454 = vector.shape_cast %453 : vector<1x32x64xbf16> to vector<32x64xbf16>
    %cst_130 = arith.constant dense<0.000000e+00> : vector<18x64xf32>
    %455 = tpu.matmul %452, %454, %cst_130 {dimension_numbers = #tpu.dot_dimension_numbers<[1], [0], [0], [1], [0, 0, 1, 1], [], []>} : vector<18x32xbf16>, vector<32x64xbf16>, vector<18x64xf32> -> vector<18x64xf32>
    %456 = vector.broadcast %249 : vector<1x64xf32> to vector<18x64xf32>
    %457 = arith.addf %455, %456 : vector<18x64xf32>
    %cst_131 = arith.constant 0.000000e+00 : f32
    %458 = vector.broadcast %cst_131 : f32 to vector<18x64xf32>
    %459 = arith.maximumf %457, %458 : vector<18x64xf32>
    %460 = arith.truncf %459 : vector<18x64xf32> to vector<18x64xbf16>
    %c1_132 = arith.constant 1 : index
    %c0_133 = arith.constant 0 : index
    %c0_134 = arith.constant 0 : index
    %461 = vector.load %arg4[%c1_132, %c0_133, %c0_134] : memref<2x64x32xbf16, #tpu.memory_space<vmem>>, vector<1x64x32xbf16>
    %462 = vector.shape_cast %461 : vector<1x64x32xbf16> to vector<64x32xbf16>
    %cst_135 = arith.constant dense<0.000000e+00> : vector<18x32xf32>
    %463 = tpu.matmul %460, %462, %cst_135 {dimension_numbers = #tpu.dot_dimension_numbers<[1], [0], [0], [1], [0, 0, 1, 1], [], []>} : vector<18x64xbf16>, vector<64x32xbf16>, vector<18x32xf32> -> vector<18x32xf32>
    %464 = vector.broadcast %250 : vector<1x32xf32> to vector<18x32xf32>
    %465 = arith.addf %463, %464 : vector<18x32xf32>
    %466 = arith.addf %451, %465 : vector<18x32xf32>
    %cst_136 = arith.constant dense<0.000000e+00> : vector<18xf32>
    %467 = vector.multi_reduction <add>, %466, %cst_136 [1] : vector<18x32xf32> to vector<18xf32>
    %468 = vector.shape_cast %467 : vector<18xf32> to vector<18x1xf32>
    %cst_137 = arith.constant 3.200000e+01 : f32
    %469 = vector.broadcast %cst_137 : f32 to vector<18x1xf32>
    %470 = arith.divf %468, %469 : vector<18x1xf32>
    %471 = vector.broadcast %470 : vector<18x1xf32> to vector<18x32xf32>
    %472 = arith.subf %466, %471 : vector<18x32xf32>
    %473 = arith.mulf %472, %472 : vector<18x32xf32>
    %cst_138 = arith.constant dense<0.000000e+00> : vector<18xf32>
    %474 = vector.multi_reduction <add>, %473, %cst_138 [1] : vector<18x32xf32> to vector<18xf32>
    %475 = vector.shape_cast %474 : vector<18xf32> to vector<18x1xf32>
    %cst_139 = arith.constant 3.200000e+01 : f32
    %476 = vector.broadcast %cst_139 : f32 to vector<18x1xf32>
    %477 = arith.divf %475, %476 : vector<18x1xf32>
    %478 = vector.broadcast %470 : vector<18x1xf32> to vector<18x32xf32>
    %479 = arith.subf %466, %478 : vector<18x32xf32>
    %cst_140 = arith.constant 9.99999974E-6 : f32
    %480 = vector.broadcast %cst_140 : f32 to vector<18x1xf32>
    %481 = arith.addf %477, %480 : vector<18x1xf32>
    %482 = math.rsqrt %481 : vector<18x1xf32>
    %483 = vector.broadcast %482 : vector<18x1xf32> to vector<18x32xf32>
    %484 = arith.mulf %479, %483 : vector<18x32xf32>
    %485 = vector.broadcast %253 : vector<1x32xf32> to vector<18x32xf32>
    %486 = arith.mulf %484, %485 : vector<18x32xf32>
    %487 = vector.broadcast %254 : vector<1x32xf32> to vector<18x32xf32>
    %488 = arith.addf %486, %487 : vector<18x32xf32>
    %489 = vector.extract_strided_slice %488 {offsets = [0, 0], sizes = [1, 32], strides = [1, 1]} : vector<18x32xf32> to vector<1x32xf32>
    %490 = vector.extract_strided_slice %488 {offsets = [9, 0], sizes = [1, 32], strides = [1, 1]} : vector<18x32xf32> to vector<1x32xf32>
    %491 = tpu.concatenate %489, %490 in 0 : vector<1x32xf32>, vector<1x32xf32> -> vector<2x32xf32>
    %492 = arith.truncf %491 : vector<2x32xf32> to vector<2x32xbf16>
    %c0_141 = arith.constant 0 : index
    %c0_142 = arith.constant 0 : index
    %493 = vector.load %arg5[%c0_141, %c0_142] : memref<32x128xbf16, #tpu.memory_space<vmem>>, vector<32x128xbf16>
    %cst_143 = arith.constant dense<0.000000e+00> : vector<2x128xf32>
    %494 = tpu.matmul %492, %493, %cst_143 {dimension_numbers = #tpu.dot_dimension_numbers<[1], [0], [0], [1], [0, 0, 1, 1], [], []>} : vector<2x32xbf16>, vector<32x128xbf16>, vector<2x128xf32> -> vector<2x128xf32>
    %c0_144 = arith.constant 0 : index
    %c0_145 = arith.constant 0 : index
    %495 = vector.load %arg7[%c0_144, %c0_145] : memref<1x128xf32, #tpu.memory_space<vmem>>, vector<1x128xf32>
    %496 = vector.broadcast %495 : vector<1x128xf32> to vector<2x128xf32>
    %497 = arith.addf %494, %496 : vector<2x128xf32>
    %c0_146 = arith.constant 0 : index
    %c0_147 = arith.constant 0 : index
    %498 = vector.load %arg8[%c0_146, %c0_147] : memref<2x128xf32, #tpu.memory_space<vmem>>, vector<2x128xf32>
    tpu.vector_store %arg8[%c0_146, %c0_147], %497 {strides = array<i32>} : memref<2x128xf32, #tpu.memory_space<vmem>>, vector<2x128xf32>,
    return
  }
}

</mosaic_0001>

<llo_original>
// kernel: transformer_encoder_forward.1
$region0: #{transformer_encoder_forward.1}
  #allocation0 [shape = 'u32[]', space=smem, size = 0x4, offset = 0x4, fixed_abs, tag = 'smem constant byte address 0x4 - core index']
  #allocation1 [shape = 'u32[144,128]{1,0:T(1,128)}', space=vmem, size = 0x12000, scoped, tag = 'internal scratch']
  %s0 = inlined_call_operand.vmem [shape: f32[18,32], index: 0, kind: input, shape index: {}]
  %s1 = inlined_call_operand.vmem [shape: bf16[2,32,96], index: 1, kind: input, shape index: {}]
  %s2 = inlined_call_operand.vmem [shape: bf16[2,32,32], index: 2, kind: input, shape index: {}]
  %s3 = inlined_call_operand.vmem [shape: bf16[2,32,64], index: 3, kind: input, shape index: {}]
  %s4 = inlined_call_operand.vmem [shape: bf16[2,64,32], index: 4, kind: input, shape index: {}]
  %s5 = inlined_call_operand.vmem [shape: bf16[32,128], index: 5, kind: input, shape index: {}]
  %s6 = inlined_call_operand.vmem [shape: f32[2,8,128], index: 6, kind: input, shape index: {}]
  %s7 = inlined_call_operand.vmem [shape: f32[1,128], index: 7, kind: input, shape index: {}]
  %s8 = inlined_call_operand.hbm [shape: f32[2,128], index: 8, kind: output, shape index: {}]
  %s9 = sld [smem:[#allocation0]]
  $region42: #{transformer_encoder_forward.1} parent=0
    _
  %s11 = ssub.s32 1, %s9
  %s12 = scalar_select 0, %s11, %s9
  $region1: #{transformer_encoder_forward.1} parent=0
    #allocation2 [shape = 'u8[1024]{0}', space=vmem, size = 0x400, scoped, tag = 'output window, operand 0, single buffered']
    #allocation3 [shape = 's32[1]{0}', space=sflag, size = 0x4, scoped, tag = 'scoped memory for transformer_encoder_forward.1']
    %13 = vsyncpa [#allocation3], 0
    // Predicated region
    $region2: #{transformer_encoder_forward.1} parent=1 // pred_check
      _
    $region3: #{transformer_encoder_forward.1} parent=1 // pred_check_branch
      %15 = sbr.rel (0) target = $region5
    $region4: #{transformer_encoder_forward.1} parent=1 // pred_region
      _
    $region5: #{transformer_encoder_forward.1} parent=1 // pred_fallthru
      _
    // Predicated region
    $region6: #{transformer_encoder_forward.1} parent=1 // pred_check
      _
    $region7: #{transformer_encoder_forward.1} parent=1 // pred_check_branch
      %17 = sbr.rel (0) target = $region9
    $region8: #{transformer_encoder_forward.1} parent=1 // pred_region
      _
    $region9: #{transformer_encoder_forward.1} parent=1 // pred_fallthru
      _
    // Predicated region
    $region10: #{transformer_encoder_forward.1} parent=1 // pred_check
      _
    $region11: #{transformer_encoder_forward.1} parent=1 // pred_check_branch
      %19 = sbr.rel (0) target = $region13
    $region12: #{transformer_encoder_forward.1} parent=1 // pred_region
      _
    $region13: #{transformer_encoder_forward.1} parent=1 // pred_fallthru
      _
    // Predicated region
    $region14: #{transformer_encoder_forward.1} parent=1 // pred_check
      _
    $region15: #{transformer_encoder_forward.1} parent=1 // pred_check_branch
      %21 = sbr.rel (0) target = $region17
    $region16: #{transformer_encoder_forward.1} parent=1 // pred_region
      _
    $region17: #{transformer_encoder_forward.1} parent=1 // pred_fallthru
      _
    // Predicated region
    $region18: #{transformer_encoder_forward.1} parent=1 // pred_check
      _
    $region19: #{transformer_encoder_forward.1} parent=1 // pred_check_branch
      %23 = sbr.rel (0) target = $region21
    $region20: #{transformer_encoder_forward.1} parent=1 // pred_region
      _
    $region21: #{transformer_encoder_forward.1} parent=1 // pred_fallthru
      _
    // Predicated region
    $region22: #{transformer_encoder_forward.1} parent=1 // pred_check
      _
    $region23: #{transformer_encoder_forward.1} parent=1 // pred_check_branch
      %25 = sbr.rel (0) target = $region25
    $region24: #{transformer_encoder_forward.1} parent=1 // pred_region
      _
    $region25: #{transformer_encoder_forward.1} parent=1 // pred_fallthru
      _
    // Predicated region
    $region26: #{transformer_encoder_forward.1} parent=1 // pred_check
      _
    $region27: #{transformer_encoder_forward.1} parent=1 // pred_check_branch
      %27 = sbr.rel (0) target = $region29
    $region28: #{transformer_encoder_forward.1} parent=1 // pred_region
      _
    $region29: #{transformer_encoder_forward.1} parent=1 // pred_fallthru
      _
    // Predicated region
    $region30: #{transformer_encoder_forward.1} parent=1 // pred_check
      _
    $region31: #{transformer_encoder_forward.1} parent=1 // pred_check_branch
      %29 = sbr.rel (0) target = $region33
    $region32: #{transformer_encoder_forward.1} parent=1 // pred_region
      _
    $region33: #{transformer_encoder_forward.1} parent=1 // pred_fallthru
      _
    %v31 = vld [vmem:[%s0] sm:$0xff]
    %v32 = vld [vmem:[%s0 + $0x8] sm:$0xff]
    %v33 = vld [vmem:[%s0 + $0x10] sm:$0x3]
    %v34 = vld [vmem:[%s6] sm:$0xff]
    %v35 = vld [vmem:[%s2] sm:$0xf]
    %v36 = vld [vmem:[%s2 + $0x4] sm:$0xf]
    %v37 = vld [vmem:[%s2 + $0x8] sm:$0xf]
    %v38 = vld [vmem:[%s2 + $0xc] sm:$0xf]
    %v39 = vpack.c.bf16 %v32, %v31
    %v40 = vpack.c.bf16 %v33, %v33
    %v41 = vld [vmem:[%s1] sm:$0xf]
    %v42 = vld [vmem:[%s1 + $0x4] sm:$0xf]
    %v43 = vld [vmem:[%s1 + $0x8] sm:$0xf]
    %v44 = vld [vmem:[%s1 + $0xc] sm:$0xf]
    %v45 = vlaneseq
    %v46 = vshrl.u32 %v45, 7
    %v47 = vsub.s32 0, %v46
    %v48 = vrot.slane %v34, %v47
    %v53 = vunpack.c.l.b16 %v41
    %v54 = vunpack.c.l.b16 %v42
    %v55 = vunpack.c.l.b16 %v43
    %v56 = vunpack.c.l.b16 %v44
    %v57 = vpack.c.b16 %v54, %v53
    %v58 = vpack.c.b16 %v56, %v55
    %vm61 = vcmask 261120
    %v63 = vsel %vm61, %v39, 0
    %v66 = vsel %vm61, %v40, 0
    %68 = vmatprep.subr.bf16.mxu0 0
    %69 = vmatpush1.bf16.msra.mxu0 %v57
    %70 = vmatprep.subr.bf16.mxu0 0
    %71 = vmatpush1.bf16.msra.mxu0 %v58
    %72 = vmatprep.subr.bf16.mxu0 0
    %73 = vmatpush1.bf16.msra.mxu0 0
    %74 = vmatprep.subr.bf16.mxu0 0
    %75 = vmatpush1.bf16.msra.mxu0 0
    %76 = vmatprep.subr.bf16.mxu0 0
    %77 = vmatpush1.bf16.msra.mxu0 0
    %78 = vmatprep.subr.bf16.mxu0 0
    %79 = vmatpush1.bf16.msra.mxu0 0
    %80 = vmatprep.subr.bf16.mxu0 0
    %81 = vmatpush1.bf16.msra.mxu0 0
    %82 = vmatprep.subr.bf16.mxu0 0
    %83 = vmatpush1.bf16.msra.mxu0 0
    %84 = vmatprep.subr.bf16.mxu0 0
    %85 = vmatpush1.bf16.msra.mxu0 0
    %86 = vmatprep.subr.bf16.mxu0 0
    %87 = vmatpush1.bf16.msra.mxu0 0
    %88 = vmatprep.subr.bf16.mxu0 0
    %89 = vmatpush1.bf16.msra.mxu0 0
    %90 = vmatprep.subr.bf16.mxu0 0
    %91 = vmatpush1.bf16.msra.mxu0 0
    %92 = vmatprep.subr.bf16.mxu0 0
    %93 = vmatpush1.bf16.msra.mxu0 0
    %94 = vmatprep.subr.bf16.mxu0 0
    %95 = vmatpush1.bf16.msra.mxu0 0
    %96 = vmatprep.subr.bf16.mxu0 0
    %97 = vmatpush1.bf16.msra.mxu0 0
    %98 = vmatprep.subr.bf16.mxu0 0
    %99 = vmatpush1.bf16.msra.mxu0 0
    %100 = vmatprep.mubr.bf16.mxu0 0
    %101 = vmatmul.mubr.bf16.gmra.mrb[0].mxu0 %v63
    %v102 = vpop.f32.mrb[0].mxu0
    %v103 = vadd.f32 %v48, %v102
    %v104 = vpop.f32.mrb[0].mxu0
    %v105 = vpop.f32.mrb[0].mxu0
    %v106 = vadd.f32 %v48, %v105
    %v107 = vpop.f32.mrb[0].mxu0
    %108 = vmatprep.mubr.bf16.mxu0 0
    %109 = vmatmul.mubr.bf16.gmra.mrb[0].mxu0 %v66
    %v110 = vpop.f32.mrb[0].mxu0
    %v111 = vadd.f32 %v48, %v110
    %v112 = vpop.f32.mrb[0].mxu0
    %v113 = vpop.f32.mrb[0].mxu0
    %v114 = vpop.f32.mrb[0].mxu0
    %115 = vdwg.mxu0
    %v116 = vpack.c.bf16 %v106, %v103
    %v117 = vpack.c.bf16 %v111, %v111
    %119 = vrot.lane.b32.xlu0 %v116, 96
    %v120 = vpop.permute.xlu0 %119
    %vm121 = vcmask 64512
    %v123 = vsel %vm121, %v116, 0
    %v126 = vsel %vm121, %v120, 0
    %128 = vmatprep.subr.bf16.mxu0 0
    %129 = vmatpush1.bf16.xpose.msra.mxu0 %v126
    %130 = vmatprep.subr.bf16.mxu0 0
    %131 = vmatpush1.bf16.xpose.msra.mxu0 0
    %132 = vmatprep.subr.bf16.mxu0 0
    %133 = vmatpush1.bf16.xpose.msra.mxu0 0
    %134 = vmatprep.subr.bf16.mxu0 0
    %135 = vmatpush1.bf16.xpose.msra.mxu0 0
    %136 = vmatprep.subr.bf16.mxu0 0
    %137 = vmatpush1.bf16.xpose.msra.mxu0 0
    %138 = vmatprep.subr.bf16.mxu0 0
    %139 = vmatpush1.bf16.xpose.msra.mxu0 0
    %140 = vmatprep.subr.bf16.mxu0 0
    %141 = vmatpush1.bf16.xpose.msra.mxu0 0
    %142 = vmatprep.subr.bf16.mxu0 0
    %143 = vmatpush1.bf16.xpose.msra.mxu0 0
    %144 = vmatprep.subr.bf16.mxu0 0
    %145 = vmatpush1.bf16.xpose.msra.mxu0 0
    %146 = vmatprep.subr.bf16.mxu0 0
    %147 = vmatpush1.bf16.xpose.msra.mxu0 0
    %148 = vmatprep.subr.bf16.mxu0 0
    %149 = vmatpush1.bf16.xpose.msra.mxu0 0
    %150 = vmatprep.subr.bf16.mxu0 0
    %151 = vmatpush1.bf16.xpose.msra.mxu0 0
    %152 = vmatprep.subr.bf16.mxu0 0
    %153 = vmatpush1.bf16.xpose.msra.mxu0 0
    %154 = vmatprep.subr.bf16.mxu0 0
    %155 = vmatpush1.bf16.xpose.msra.mxu0 0
    %156 = vmatprep.subr.bf16.mxu0 0
    %157 = vmatpush1.bf16.xpose.msra.mxu0 0
    %158 = vmatprep.subr.bf16.mxu0 0
    %159 = vmatpush1.bf16.xpose.msra.mxu0 0
    %160 = vmatprep.mubr.bf16.mxu0 0
    %161 = vmatmul.mubr.bf16.gmra.mrb[0].mxu0 %v123
    %v162 = vpop.f32.mrb[0].mxu0
    %v163 = vadd.f32 0.0, %v162
    %v164 = vpop.f32.mrb[0].mxu0
    %v165 = vpop.f32.mrb[0].mxu0
    %v166 = vadd.f32 0.0, %v165
    %v167 = vpop.f32.mrb[0].mxu0
    %168 = vdwg.mxu0
    %vm169 = vcmask 72704
    %v170 = vsel %vm169, %v163, -inf
    %171 = vmax.xlane.f32.xlu0 %v170
    %v172 = vpop.xlane.xlu0 %171
    %vm173 = vcmask 65536
    %v174 = vsel %vm173, %v166, -inf
    %175 = vmax.xlane.f32.xlu0 %v174
    %v176 = vpop.xlane.xlu0 %175
    %v177 = vsub.f32 %v163, %v172
    %v178 = vsub.f32 %v166, %v176
    %v179 = vmul.f32 %v177, 1.442695
    %v180 = vpow.pop %v179
    %v181 = vmul.f32 %v178, 1.442695
    %v182 = vpow.pop %v181
    %v183 = vsel %vm169, %v180, 0.0
    %184 = vadd.xlane.f32.xlu0 %v183
    %v185 = vpop.xlane.xlu0 %184
    %v186 = vsel %vm173, %v182, 0.0
    %187 = vadd.xlane.f32.xlu0 %v186
    %v188 = vpop.xlane.xlu0 %187
    %v189 = vrcp.pop %v185
    %v190 = vrcp.pop %v188
    %v191 = vmul.f32 %v180, %v189
    %v192 = vmul.f32 %v182, %v190
    %v193 = vpack.c.bf16 %v192, %v191
    %194 = vrot.lane.b32.xlu0 %v116, 64
    %v195 = vpop.permute.xlu0 %194
    %v197 = vsel %vm169, %v193, 0
    %vm199 = vcmask 1043456
    %vm200 = vcmask 1044480
    %v201 = vsel %vm199, 4294967295, 65535
    %v202 = vsel %vm200, %v201, 0
    %v204 = vand.u32 %v195, %v202
    %206 = vmatprep.subr.bf16.mxu0 0
    %207 = vmatpush1.bf16.msra.mxu0 %v204
    %208 = vmatprep.subr.bf16.mxu0 0
    %209 = vmatpush1.bf16.msra.mxu0 0
    %210 = vmatprep.subr.bf16.mxu0 0
    %211 = vmatpush1.bf16.msra.mxu0 0
    %212 = vmatprep.subr.bf16.mxu0 0
    %213 = vmatpush1.bf16.msra.mxu0 0
    %214 = vmatprep.subr.bf16.mxu0 0
    %215 = vmatpush1.bf16.msra.mxu0 0
    %216 = vmatprep.subr.bf16.mxu0 0
    %217 = vmatpush1.bf16.msra.mxu0 0
    %218 = vmatprep.subr.bf16.mxu0 0
    %219 = vmatpush1.bf16.msra.mxu0 0
    %220 = vmatprep.subr.bf16.mxu0 0
    %221 = vmatpush1.bf16.msra.mxu0 0
    %222 = vmatprep.subr.bf16.mxu0 0
    %223 = vmatpush1.bf16.msra.mxu0 0
    %224 = vmatprep.subr.bf16.mxu0 0
    %225 = vmatpush1.bf16.msra.mxu0 0
    %226 = vmatprep.subr.bf16.mxu0 0
    %227 = vmatpush1.bf16.msra.mxu0 0
    %228 = vmatprep.subr.bf16.mxu0 0
    %229 = vmatpush1.bf16.msra.mxu0 0
    %230 = vmatprep.subr.bf16.mxu0 0
    %231 = vmatpush1.bf16.msra.mxu0 0
    %232 = vmatprep.subr.bf16.mxu0 0
    %233 = vmatpush1.bf16.msra.mxu0 0
    %234 = vmatprep.subr.bf16.mxu0 0
    %235 = vmatpush1.bf16.msra.mxu0 0
    %236 = vmatprep.subr.bf16.mxu0 0
    %237 = vmatpush1.bf16.msra.mxu0 0
    %238 = vmatprep.mubr.bf16.mxu0 0
    %239 = vmatmul.mubr.bf16.gmra.mrb[0].mxu0 %v197
    %v240 = vpop.f32.mrb[0].mxu0
    %v241 = vadd.f32 0.0, %v240
    %v242 = vpop.f32.mrb[0].mxu0
    %v243 = vpop.f32.mrb[0].mxu0
    %v244 = vadd.f32 0.0, %v243
    %v245 = vpop.f32.mrb[0].mxu0
    %246 = vdwg.mxu0
    %v247 = vpack.c.bf16 %v244, %v241
    %248 = vrot.lane.b32.xlu0 %v116, 120
    %v249 = vpop.permute.xlu0 %248
    %250 = vrot.lane.b32.xlu0 %v116, 88
    %v251 = vpop.permute.xlu0 %250
    %v253 = vsel %vm121, %v249, 0
    %v256 = vsel %vm121, %v251, 0
    %258 = vmatprep.subr.bf16.mxu0 0
    %259 = vmatpush1.bf16.xpose.msra.mxu0 %v256
    %260 = vmatprep.subr.bf16.mxu0 0
    %261 = vmatpush1.bf16.xpose.msra.mxu0 0
    %262 = vmatprep.subr.bf16.mxu0 0
    %263 = vmatpush1.bf16.xpose.msra.mxu0 0
    %264 = vmatprep.subr.bf16.mxu0 0
    %265 = vmatpush1.bf16.xpose.msra.mxu0 0
    %266 = vmatprep.subr.bf16.mxu0 0
    %267 = vmatpush1.bf16.xpose.msra.mxu0 0
    %268 = vmatprep.subr.bf16.mxu0 0
    %269 = vmatpush1.bf16.xpose.msra.mxu0 0
    %270 = vmatprep.subr.bf16.mxu0 0
    %271 = vmatpush1.bf16.xpose.msra.mxu0 0
    %272 = vmatprep.subr.bf16.mxu0 0
    %273 = vmatpush1.bf16.xpose.msra.mxu0 0
    %274 = vmatprep.subr.bf16.mxu0 0
    %275 = vmatpush1.bf16.xpose.msra.mxu0 0
    %276 = vmatprep.subr.bf16.mxu0 0
    %277 = vmatpush1.bf16.xpose.msra.mxu0 0
    %278 = vmatprep.subr.bf16.mxu0 0
    %279 = vmatpush1.bf16.xpose.msra.mxu0 0
    %280 = vmatprep.subr.bf16.mxu0 0
    %281 = vmatpush1.bf16.xpose.msra.mxu0 0
    %282 = vmatprep.subr.bf16.mxu0 0
    %283 = vmatpush1.bf16.xpose.msra.mxu0 0
    %284 = vmatprep.subr.bf16.mxu0 0
    %285 = vmatpush1.bf16.xpose.msra.mxu0 0
    %286 = vmatprep.subr.bf16.mxu0 0
    %287 = vmatpush1.bf16.xpose.msra.mxu0 0
    %288 = vmatprep.subr.bf16.mxu0 0
    %289 = vmatpush1.bf16.xpose.msra.mxu0 0
    %290 = vmatprep.mubr.bf16.mxu0 0
    %291 = vmatmul.mubr.bf16.gmra.mrb[0].mxu0 %v253
    %v292 = vpop.f32.mrb[0].mxu0
    %v293 = vadd.f32 0.0, %v292
    %v294 = vpop.f32.mrb[0].mxu0
    %v295 = vpop.f32.mrb[0].mxu0
    %v296 = vadd.f32 0.0, %v295
    %v297 = vpop.f32.mrb[0].mxu0
    %298 = vdwg.mxu0
    %v299 = vsel %vm169, %v293, -inf
    %300 = vmax.xlane.f32.xlu0 %v299
    %v301 = vpop.xlane.xlu0 %300
    %v302 = vsel %vm173, %v296, -inf
    %303 = vmax.xlane.f32.xlu0 %v302
    %v304 = vpop.xlane.xlu0 %303
    %v305 = vsub.f32 %v293, %v301
    %v306 = vsub.f32 %v296, %v304
    %v307 = vmul.f32 %v305, 1.442695
    %v308 = vpow.pop %v307
    %v309 = vmul.f32 %v306, 1.442695
    %v310 = vpow.pop %v309
    %v311 = vsel %vm169, %v308, 0.0
    %312 = vadd.xlane.f32.xlu0 %v311
    %v313 = vpop.xlane.xlu0 %312
    %v314 = vsel %vm173, %v310, 0.0
    %315 = vadd.xlane.f32.xlu0 %v314
    %v316 = vpop.xlane.xlu0 %315
    %v317 = vrcp.pop %v313
    %v318 = vrcp.pop %v316
    %v319 = vmul.f32 %v308, %v317
    %v320 = vmul.f32 %v310, %v318
    %v321 = vpack.c.bf16 %v320, %v319
    %322 = vrot.lane.b32.xlu0 %v116, 56
    %v323 = vpop.permute.xlu0 %322
    %v325 = vsel %vm169, %v321, 0
    %v328 = vand.u32 %v323, %v202
    %330 = vmatprep.subr.bf16.mxu0 0
    %331 = vmatpush1.bf16.msra.mxu0 %v328
    %332 = vmatprep.subr.bf16.mxu0 0
    %333 = vmatpush1.bf16.msra.mxu0 0
    %334 = vmatprep.subr.bf16.mxu0 0
    %335 = vmatpush1.bf16.msra.mxu0 0
    %336 = vmatprep.subr.bf16.mxu0 0
    %337 = vmatpush1.bf16.msra.mxu0 0
    %338 = vmatprep.subr.bf16.mxu0 0
    %339 = vmatpush1.bf16.msra.mxu0 0
    %340 = vmatprep.subr.bf16.mxu0 0
    %341 = vmatpush1.bf16.msra.mxu0 0
    %342 = vmatprep.subr.bf16.mxu0 0
    %343 = vmatpush1.bf16.msra.mxu0 0
    %344 = vmatprep.subr.bf16.mxu0 0
    %345 = vmatpush1.bf16.msra.mxu0 0
    %346 = vmatprep.subr.bf16.mxu0 0
    %347 = vmatpush1.bf16.msra.mxu0 0
    %348 = vmatprep.subr.bf16.mxu0 0
    %349 = vmatpush1.bf16.msra.mxu0 0
    %350 = vmatprep.subr.bf16.mxu0 0
    %351 = vmatpush1.bf16.msra.mxu0 0
    %352 = vmatprep.subr.bf16.mxu0 0
    %353 = vmatpush1.bf16.msra.mxu0 0
    %354 = vmatprep.subr.bf16.mxu0 0
    %355 = vmatpush1.bf16.msra.mxu0 0
    %356 = vmatprep.subr.bf16.mxu0 0
    %357 = vmatpush1.bf16.msra.mxu0 0
    %358 = vmatprep.subr.bf16.mxu0 0
    %359 = vmatpush1.bf16.msra.mxu0 0
    %360 = vmatprep.subr.bf16.mxu0 0
    %361 = vmatpush1.bf16.msra.mxu0 0
    %362 = vmatprep.mubr.bf16.mxu0 0
    %363 = vmatmul.mubr.bf16.gmra.mrb[0].mxu0 %v325
    %v364 = vpop.f32.mrb[0].mxu0
    %v365 = vadd.f32 0.0, %v364
    %v366 = vpop.f32.mrb[0].mxu0
    %v367 = vpop.f32.mrb[0].mxu0
    %v368 = vadd.f32 0.0, %v367
    %v369 = vpop.f32.mrb[0].mxu0
    %370 = vdwg.mxu0
    %v371 = vpack.c.bf16 %v368, %v365
    %v373 = vsel %vm121, %v371, 0
    %v376 = vsel %vm199, %v36, 0
    %378 = vmatprep.subr.bf16.mxu0 0
    %379 = vmatpush1.bf16.msra.mxu0 %v376
    %380 = vmatprep.subr.bf16.mxu0 0
    %381 = vmatpush1.bf16.msra.mxu0 0
    %382 = vmatprep.subr.bf16.mxu0 0
    %383 = vmatpush1.bf16.msra.mxu0 0
    %384 = vmatprep.subr.bf16.mxu0 0
    %385 = vmatpush1.bf16.msra.mxu0 0
    %386 = vmatprep.subr.bf16.mxu0 0
    %387 = vmatpush1.bf16.msra.mxu0 0
    %388 = vmatprep.subr.bf16.mxu0 0
    %389 = vmatpush1.bf16.msra.mxu0 0
    %390 = vmatprep.subr.bf16.mxu0 0
    %391 = vmatpush1.bf16.msra.mxu0 0
    %392 = vmatprep.subr.bf16.mxu0 0
    %393 = vmatpush1.bf16.msra.mxu0 0
    %394 = vmatprep.subr.bf16.mxu0 0
    %395 = vmatpush1.bf16.msra.mxu0 0
    %396 = vmatprep.subr.bf16.mxu0 0
    %397 = vmatpush1.bf16.msra.mxu0 0
    %398 = vmatprep.subr.bf16.mxu0 0
    %399 = vmatpush1.bf16.msra.mxu0 0
    %400 = vmatprep.subr.bf16.mxu0 0
    %401 = vmatpush1.bf16.msra.mxu0 0
    %402 = vmatprep.subr.bf16.mxu0 0
    %403 = vmatpush1.bf16.msra.mxu0 0
    %404 = vmatprep.subr.bf16.mxu0 0
    %405 = vmatpush1.bf16.msra.mxu0 0
    %406 = vmatprep.subr.bf16.mxu0 0
    %407 = vmatpush1.bf16.msra.mxu0 0
    %408 = vmatprep.subr.bf16.mxu0 0
    %409 = vmatpush1.bf16.msra.mxu0 0
    %410 = vmatprep.mubr.bf16.mxu0 0
    %411 = vmatmul.mubr.bf16.gmra.mrb[0].mxu0 %v373
    %v412 = vpop.f32.mrb[0].mxu0
    %v413 = vadd.f32 0.0, %v412
    %v414 = vpop.f32.mrb[0].mxu0
    %v415 = vpop.f32.mrb[0].mxu0
    %v416 = vadd.f32 0.0, %v415
    %v417 = vpop.f32.mrb[0].mxu0
    %418 = vdwg.mxu0
    %v420 = vsel %vm121, %v247, 0
    %v423 = vsel %vm199, %v35, 0
    %425 = vmatprep.subr.bf16.mxu0 0
    %426 = vmatpush1.bf16.msra.mxu0 %v423
    %427 = vmatprep.subr.bf16.mxu0 0
    %428 = vmatpush1.bf16.msra.mxu0 0
    %429 = vmatprep.subr.bf16.mxu0 0
    %430 = vmatpush1.bf16.msra.mxu0 0
    %431 = vmatprep.subr.bf16.mxu0 0
    %432 = vmatpush1.bf16.msra.mxu0 0
    %433 = vmatprep.subr.bf16.mxu0 0
    %434 = vmatpush1.bf16.msra.mxu0 0
    %435 = vmatprep.subr.bf16.mxu0 0
    %436 = vmatpush1.bf16.msra.mxu0 0
    %437 = vmatprep.subr.bf16.mxu0 0
    %438 = vmatpush1.bf16.msra.mxu0 0
    %439 = vmatprep.subr.bf16.mxu0 0
    %440 = vmatpush1.bf16.msra.mxu0 0
    %441 = vmatprep.subr.bf16.mxu0 0
    %442 = vmatpush1.bf16.msra.mxu0 0
    %443 = vmatprep.subr.bf16.mxu0 0
    %444 = vmatpush1.bf16.msra.mxu0 0
    %445 = vmatprep.subr.bf16.mxu0 0
    %446 = vmatpush1.bf16.msra.mxu0 0
    %447 = vmatprep.subr.bf16.mxu0 0
    %448 = vmatpush1.bf16.msra.mxu0 0
    %449 = vmatprep.subr.bf16.mxu0 0
    %450 = vmatpush1.bf16.msra.mxu0 0
    %451 = vmatprep.subr.bf16.mxu0 0
    %452 = vmatpush1.bf16.msra.mxu0 0
    %453 = vmatprep.subr.bf16.mxu0 0
    %454 = vmatpush1.bf16.msra.mxu0 0
    %455 = vmatprep.subr.bf16.mxu0 0
    %456 = vmatpush1.bf16.msra.mxu0 0
    %457 = vmatprep.mubr.bf16.mxu0 0
    %458 = vmatmul.mubr.bf16.gmra.mrb[0].mxu0 %v420
    %v459 = vpop.f32.mrb[0].mxu0
    %v460 = vadd.f32 %v413, %v459
    %v461 = vpop.f32.mrb[0].mxu0
    %v462 = vpop.f32.mrb[0].mxu0
    %v463 = vadd.f32 %v416, %v462
    %v464 = vpop.f32.mrb[0].mxu0
    %465 = vdwg.mxu0
    %466 = vrot.lane.b32.xlu0 %v116, 112
    %v467 = vpop.permute.xlu0 %466
    %468 = vrot.lane.b32.xlu0 %v116, 80
    %v469 = vpop.permute.xlu0 %468
    %v471 = vsel %vm121, %v467, 0
    %v474 = vsel %vm121, %v469, 0
    %476 = vmatprep.subr.bf16.mxu0 0
    %477 = vmatpush1.bf16.xpose.msra.mxu0 %v474
    %478 = vmatprep.subr.bf16.mxu0 0
    %479 = vmatpush1.bf16.xpose.msra.mxu0 0
    %480 = vmatprep.subr.bf16.mxu0 0
    %481 = vmatpush1.bf16.xpose.msra.mxu0 0
    %482 = vmatprep.subr.bf16.mxu0 0
    %483 = vmatpush1.bf16.xpose.msra.mxu0 0
    %484 = vmatprep.subr.bf16.mxu0 0
    %485 = vmatpush1.bf16.xpose.msra.mxu0 0
    %486 = vmatprep.subr.bf16.mxu0 0
    %487 = vmatpush1.bf16.xpose.msra.mxu0 0
    %488 = vmatprep.subr.bf16.mxu0 0
    %489 = vmatpush1.bf16.xpose.msra.mxu0 0
    %490 = vmatprep.subr.bf16.mxu0 0
    %491 = vmatpush1.bf16.xpose.msra.mxu0 0
    %492 = vmatprep.subr.bf16.mxu0 0
    %493 = vmatpush1.bf16.xpose.msra.mxu0 0
    %494 = vmatprep.subr.bf16.mxu0 0
    %495 = vmatpush1.bf16.xpose.msra.mxu0 0
    %496 = vmatprep.subr.bf16.mxu0 0
    %497 = vmatpush1.bf16.xpose.msra.mxu0 0
    %498 = vmatprep.subr.bf16.mxu0 0
    %499 = vmatpush1.bf16.xpose.msra.mxu0 0
    %500 = vmatprep.subr.bf16.mxu0 0
    %501 = vmatpush1.bf16.xpose.msra.mxu0 0
    %502 = vmatprep.subr.bf16.mxu0 0
    %503 = vmatpush1.bf16.xpose.msra.mxu0 0
    %504 = vmatprep.subr.bf16.mxu0 0
    %505 = vmatpush1.bf16.xpose.msra.mxu0 0
    %506 = vmatprep.subr.bf16.mxu0 0
    %507 = vmatpush1.bf16.xpose.msra.mxu0 0
    %508 = vmatprep.mubr.bf16.mxu0 0
    %509 = vmatmul.mubr.bf16.gmra.mrb[0].mxu0 %v471
    %v510 = vpop.f32.mrb[0].mxu0
    %v511 = vadd.f32 0.0, %v510
    %v512 = vpop.f32.mrb[0].mxu0
    %v513 = vpop.f32.mrb[0].mxu0
    %v514 = vadd.f32 0.0, %v513
    %v515 = vpop.f32.mrb[0].mxu0
    %516 = vdwg.mxu0
    %v517 = vsel %vm169, %v511, -inf
    %518 = vmax.xlane.f32.xlu0 %v517
    %v519 = vpop.xlane.xlu0 %518
    %v520 = vsel %vm173, %v514, -inf
    %521 = vmax.xlane.f32.xlu0 %v520
    %v522 = vpop.xlane.xlu0 %521
    %v523 = vsub.f32 %v511, %v519
    %v524 = vsub.f32 %v514, %v522
    %v525 = vmul.f32 %v523, 1.442695
    %v526 = vpow.pop %v525
    %v527 = vmul.f32 %v524, 1.442695
    %v528 = vpow.pop %v527
    %v529 = vsel %vm169, %v526, 0.0
    %530 = vadd.xlane.f32.xlu0 %v529
    %v531 = vpop.xlane.xlu0 %530
    %v532 = vsel %vm173, %v528, 0.0
    %533 = vadd.xlane.f32.xlu0 %v532
    %v534 = vpop.xlane.xlu0 %533
    %v535 = vrcp.pop %v531
    %v536 = vrcp.pop %v534
    %v537 = vmul.f32 %v526, %v535
    %v538 = vmul.f32 %v528, %v536
    %v539 = vpack.c.bf16 %v538, %v537
    %540 = vrot.lane.b32.xlu0 %v116, 48
    %v541 = vpop.permute.xlu0 %540
    %v543 = vsel %vm169, %v539, 0
    %v546 = vand.u32 %v541, %v202
    %548 = vmatprep.subr.bf16.mxu0 0
    %549 = vmatpush1.bf16.msra.mxu0 %v546
    %550 = vmatprep.subr.bf16.mxu0 0
    %551 = vmatpush1.bf16.msra.mxu0 0
    %552 = vmatprep.subr.bf16.mxu0 0
    %553 = vmatpush1.bf16.msra.mxu0 0
    %554 = vmatprep.subr.bf16.mxu0 0
    %555 = vmatpush1.bf16.msra.mxu0 0
    %556 = vmatprep.subr.bf16.mxu0 0
    %557 = vmatpush1.bf16.msra.mxu0 0
    %558 = vmatprep.subr.bf16.mxu0 0
    %559 = vmatpush1.bf16.msra.mxu0 0
    %560 = vmatprep.subr.bf16.mxu0 0
    %561 = vmatpush1.bf16.msra.mxu0 0
    %562 = vmatprep.subr.bf16.mxu0 0
    %563 = vmatpush1.bf16.msra.mxu0 0
    %564 = vmatprep.subr.bf16.mxu0 0
    %565 = vmatpush1.bf16.msra.mxu0 0
    %566 = vmatprep.subr.bf16.mxu0 0
    %567 = vmatpush1.bf16.msra.mxu0 0
    %568 = vmatprep.subr.bf16.mxu0 0
    %569 = vmatpush1.bf16.msra.mxu0 0
    %570 = vmatprep.subr.bf16.mxu0 0
    %571 = vmatpush1.bf16.msra.mxu0 0
    %572 = vmatprep.subr.bf16.mxu0 0
    %573 = vmatpush1.bf16.msra.mxu0 0
    %574 = vmatprep.subr.bf16.mxu0 0
    %575 = vmatpush1.bf16.msra.mxu0 0
    %576 = vmatprep.subr.bf16.mxu0 0
    %577 = vmatpush1.bf16.msra.mxu0 0
    %578 = vmatprep.subr.bf16.mxu0 0
    %579 = vmatpush1.bf16.msra.mxu0 0
    %580 = vmatprep.mubr.bf16.mxu0 0
    %581 = vmatmul.mubr.bf16.gmra.mrb[0].mxu0 %v543
    %v582 = vpop.f32.mrb[0].mxu0
    %v583 = vadd.f32 0.0, %v582
    %v584 = vpop.f32.mrb[0].mxu0
    %v585 = vpop.f32.mrb[0].mxu0
    %v586 = vadd.f32 0.0, %v585
    %v587 = vpop.f32.mrb[0].mxu0
    %588 = vdwg.mxu0
    %v589 = vpack.c.bf16 %v586, %v583
    %v591 = vsel %vm121, %v589, 0
    %v594 = vsel %vm199, %v37, 0
    %596 = vmatprep.subr.bf16.mxu0 0
    %597 = vmatpush1.bf16.msra.mxu0 %v594
    %598 = vmatprep.subr.bf16.mxu0 0
    %599 = vmatpush1.bf16.msra.mxu0 0
    %600 = vmatprep.subr.bf16.mxu0 0
    %601 = vmatpush1.bf16.msra.mxu0 0
    %602 = vmatprep.subr.bf16.mxu0 0
    %603 = vmatpush1.bf16.msra.mxu0 0
    %604 = vmatprep.subr.bf16.mxu0 0
    %605 = vmatpush1.bf16.msra.mxu0 0
    %606 = vmatprep.subr.bf16.mxu0 0
    %607 = vmatpush1.bf16.msra.mxu0 0
    %608 = vmatprep.subr.bf16.mxu0 0
    %609 = vmatpush1.bf16.msra.mxu0 0
    %610 = vmatprep.subr.bf16.mxu0 0
    %611 = vmatpush1.bf16.msra.mxu0 0
    %612 = vmatprep.subr.bf16.mxu0 0
    %613 = vmatpush1.bf16.msra.mxu0 0
    %614 = vmatprep.subr.bf16.mxu0 0
    %615 = vmatpush1.bf16.msra.mxu0 0
    %616 = vmatprep.subr.bf16.mxu0 0
    %617 = vmatpush1.bf16.msra.mxu0 0
    %618 = vmatprep.subr.bf16.mxu0 0
    %619 = vmatpush1.bf16.msra.mxu0 0
    %620 = vmatprep.subr.bf16.mxu0 0
    %621 = vmatpush1.bf16.msra.mxu0 0
    %622 = vmatprep.subr.bf16.mxu0 0
    %623 = vmatpush1.bf16.msra.mxu0 0
    %624 = vmatprep.subr.bf16.mxu0 0
    %625 = vmatpush1.bf16.msra.mxu0 0
    %626 = vmatprep.subr.bf16.mxu0 0
    %627 = vmatpush1.bf16.msra.mxu0 0
    %628 = vmatprep.mubr.bf16.mxu0 0
    %629 = vmatmul.mubr.bf16.gmra.mrb[0].mxu0 %v591
    %v630 = vpop.f32.mrb[0].mxu0
    %v631 = vadd.f32 0.0, %v630
    %v632 = vpop.f32.mrb[0].mxu0
    %v633 = vpop.f32.mrb[0].mxu0
    %v634 = vadd.f32 0.0, %v633
    %v635 = vpop.f32.mrb[0].mxu0
    %636 = vdwg.mxu0
    %v637 = vadd.f32 %v460, %v631
    %v638 = vadd.f32 %v463, %v634
    %639 = vrot.lane.b32.xlu0 %v116, 104
    %v640 = vpop.permute.xlu0 %639
    %641 = vrot.lane.b32.xlu0 %v116, 72
    %v642 = vpop.permute.xlu0 %641
    %v644 = vsel %vm121, %v640, 0
    %v647 = vsel %vm121, %v642, 0
    %649 = vmatprep.subr.bf16.mxu0 0
    %650 = vmatpush1.bf16.xpose.msra.mxu0 %v647
    %651 = vmatprep.subr.bf16.mxu0 0
    %652 = vmatpush1.bf16.xpose.msra.mxu0 0
    %653 = vmatprep.subr.bf16.mxu0 0
    %654 = vmatpush1.bf16.xpose.msra.mxu0 0
    %655 = vmatprep.subr.bf16.mxu0 0
    %656 = vmatpush1.bf16.xpose.msra.mxu0 0
    %657 = vmatprep.subr.bf16.mxu0 0
    %658 = vmatpush1.bf16.xpose.msra.mxu0 0
    %659 = vmatprep.subr.bf16.mxu0 0
    %660 = vmatpush1.bf16.xpose.msra.mxu0 0
    %661 = vmatprep.subr.bf16.mxu0 0
    %662 = vmatpush1.bf16.xpose.msra.mxu0 0
    %663 = vmatprep.subr.bf16.mxu0 0
    %664 = vmatpush1.bf16.xpose.msra.mxu0 0
    %665 = vmatprep.subr.bf16.mxu0 0
    %666 = vmatpush1.bf16.xpose.msra.mxu0 0
    %667 = vmatprep.subr.bf16.mxu0 0
    %668 = vmatpush1.bf16.xpose.msra.mxu0 0
    %669 = vmatprep.subr.bf16.mxu0 0
    %670 = vmatpush1.bf16.xpose.msra.mxu0 0
    %671 = vmatprep.subr.bf16.mxu0 0
    %672 = vmatpush1.bf16.xpose.msra.mxu0 0
    %673 = vmatprep.subr.bf16.mxu0 0
    %674 = vmatpush1.bf16.xpose.msra.mxu0 0
    %675 = vmatprep.subr.bf16.mxu0 0
    %676 = vmatpush1.bf16.xpose.msra.mxu0 0
    %677 = vmatprep.subr.bf16.mxu0 0
    %678 = vmatpush1.bf16.xpose.msra.mxu0 0
    %679 = vmatprep.subr.bf16.mxu0 0
    %680 = vmatpush1.bf16.xpose.msra.mxu0 0
    %681 = vmatprep.mubr.bf16.mxu0 0
    %682 = vmatmul.mubr.bf16.gmra.mrb[0].mxu0 %v644
    %v683 = vpop.f32.mrb[0].mxu0
    %v684 = vadd.f32 0.0, %v683
    %v685 = vpop.f32.mrb[0].mxu0
    %v686 = vpop.f32.mrb[0].mxu0
    %v687 = vadd.f32 0.0, %v686
    %v688 = vpop.f32.mrb[0].mxu0
    %689 = vdwg.mxu0
    %v690 = vsel %vm169, %v684, -inf
    %691 = vmax.xlane.f32.xlu0 %v690
    %v692 = vpop.xlane.xlu0 %691
    %v693 = vsel %vm173, %v687, -inf
    %694 = vmax.xlane.f32.xlu0 %v693
    %v695 = vpop.xlane.xlu0 %694
    %v696 = vsub.f32 %v684, %v692
    %v697 = vsub.f32 %v687, %v695
    %v698 = vmul.f32 %v696, 1.442695
    %v699 = vpow.pop %v698
    %v700 = vmul.f32 %v697, 1.442695
    %v701 = vpow.pop %v700
    %v702 = vsel %vm169, %v699, 0.0
    %703 = vadd.xlane.f32.xlu0 %v702
    %v704 = vpop.xlane.xlu0 %703
    %v705 = vsel %vm173, %v701, 0.0
    %706 = vadd.xlane.f32.xlu0 %v705
    %v707 = vpop.xlane.xlu0 %706
    %v708 = vrcp.pop %v704
    %v709 = vrcp.pop %v707
    %v710 = vmul.f32 %v699, %v708
    %v711 = vmul.f32 %v701, %v709
    %v712 = vpack.c.bf16 %v711, %v710
    %713 = vrot.lane.b32.xlu0 %v116, 40
    %v714 = vpop.permute.xlu0 %713
    %v716 = vsel %vm169, %v712, 0
    %v719 = vand.u32 %v714, %v202
    %721 = vmatprep.subr.bf16.mxu0 0
    %722 = vmatpush1.bf16.msra.mxu0 %v719
    %723 = vmatprep.subr.bf16.mxu0 0
    %724 = vmatpush1.bf16.msra.mxu0 0
    %725 = vmatprep.subr.bf16.mxu0 0
    %726 = vmatpush1.bf16.msra.mxu0 0
    %727 = vmatprep.subr.bf16.mxu0 0
    %728 = vmatpush1.bf16.msra.mxu0 0
    %729 = vmatprep.subr.bf16.mxu0 0
    %730 = vmatpush1.bf16.msra.mxu0 0
    %731 = vmatprep.subr.bf16.mxu0 0
    %732 = vmatpush1.bf16.msra.mxu0 0
    %733 = vmatprep.subr.bf16.mxu0 0
    %734 = vmatpush1.bf16.msra.mxu0 0
    %735 = vmatprep.subr.bf16.mxu0 0
    %736 = vmatpush1.bf16.msra.mxu0 0
    %737 = vmatprep.subr.bf16.mxu0 0
    %738 = vmatpush1.bf16.msra.mxu0 0
    %739 = vmatprep.subr.bf16.mxu0 0
    %740 = vmatpush1.bf16.msra.mxu0 0
    %741 = vmatprep.subr.bf16.mxu0 0
    %742 = vmatpush1.bf16.msra.mxu0 0
    %743 = vmatprep.subr.bf16.mxu0 0
    %744 = vmatpush1.bf16.msra.mxu0 0
    %745 = vmatprep.subr.bf16.mxu0 0
    %746 = vmatpush1.bf16.msra.mxu0 0
    %747 = vmatprep.subr.bf16.mxu0 0
    %748 = vmatpush1.bf16.msra.mxu0 0
    %749 = vmatprep.subr.bf16.mxu0 0
    %750 = vmatpush1.bf16.msra.mxu0 0
    %751 = vmatprep.subr.bf16.mxu0 0
    %752 = vmatpush1.bf16.msra.mxu0 0
    %753 = vmatprep.mubr.bf16.mxu0 0
    %754 = vmatmul.mubr.bf16.gmra.mrb[0].mxu0 %v716
    %v755 = vpop.f32.mrb[0].mxu0
    %v756 = vadd.f32 0.0, %v755
    %v757 = vpop.f32.mrb[0].mxu0
    %v758 = vpop.f32.mrb[0].mxu0
    %v759 = vadd.f32 0.0, %v758
    %v760 = vpop.f32.mrb[0].mxu0
    %761 = vdwg.mxu0
    %v762 = vpack.c.bf16 %v759, %v756
    %v764 = vsel %vm121, %v762, 0
    %v767 = vsel %vm199, %v38, 0
    %769 = vmatprep.subr.bf16.mxu0 0
    %770 = vmatpush1.bf16.msra.mxu0 %v767
    %771 = vmatprep.subr.bf16.mxu0 0
    %772 = vmatpush1.bf16.msra.mxu0 0
    %773 = vmatprep.subr.bf16.mxu0 0
    %774 = vmatpush1.bf16.msra.mxu0 0
    %775 = vmatprep.subr.bf16.mxu0 0
    %776 = vmatpush1.bf16.msra.mxu0 0
    %777 = vmatprep.subr.bf16.mxu0 0
    %778 = vmatpush1.bf16.msra.mxu0 0
    %779 = vmatprep.subr.bf16.mxu0 0
    %780 = vmatpush1.bf16.msra.mxu0 0
    %781 = vmatprep.subr.bf16.mxu0 0
    %782 = vmatpush1.bf16.msra.mxu0 0
    %783 = vmatprep.subr.bf16.mxu0 0
    %784 = vmatpush1.bf16.msra.mxu0 0
    %785 = vmatprep.subr.bf16.mxu0 0
    %786 = vmatpush1.bf16.msra.mxu0 0
    %787 = vmatprep.subr.bf16.mxu0 0
    %788 = vmatpush1.bf16.msra.mxu0 0
    %789 = vmatprep.subr.bf16.mxu0 0
    %790 = vmatpush1.bf16.msra.mxu0 0
    %791 = vmatprep.subr.bf16.mxu0 0
    %792 = vmatpush1.bf16.msra.mxu0 0
    %793 = vmatprep.subr.bf16.mxu0 0
    %794 = vmatpush1.bf16.msra.mxu0 0
    %795 = vmatprep.subr.bf16.mxu0 0
    %796 = vmatpush1.bf16.msra.mxu0 0
    %797 = vmatprep.subr.bf16.mxu0 0
    %798 = vmatpush1.bf16.msra.mxu0 0
    %799 = vmatprep.subr.bf16.mxu0 0
    %800 = vmatpush1.bf16.msra.mxu0 0
    %801 = vmatprep.mubr.bf16.mxu0 0
    %802 = vmatmul.mubr.bf16.gmra.mrb[0].mxu0 %v764
    %v803 = vpop.f32.mrb[0].mxu0
    %v804 = vadd.f32 0.0, %v803
    %v805 = vpop.f32.mrb[0].mxu0
    %v806 = vpop.f32.mrb[0].mxu0
    %v807 = vadd.f32 0.0, %v806
    %v808 = vpop.f32.mrb[0].mxu0
    %809 = vdwg.mxu0
    %v810 = vadd.f32 %v637, %v804
    %v811 = vadd.f32 %v638, %v807
    %vm812 = vsmask.f32 3328
    %v813 = vshrl.u32 %v116, 16
    %v815 = vrot.slane %v813, 4
    %v816 = vshll.u32 %v116, 16
    %v818 = vrot.slane %v816, 5
    %v819 = vor.u32 %v815, %v818
    %v821 = vshrl.u32 %v117, 16
    %v823 = vrot.slane %v821, 4
    %v824 = vshll.u32 %v117, 16
    %v826 = vrot.slane %v824, 5
    %v827 = vor.u32 %v823, %v826
    %v828 = vsel %vm812, %v819, %v827
    %829 = vrot.lane.b32.xlu0 %v828, 96
    %v830 = vpop.permute.xlu0 %829
    %v832 = vsel %vm121, %v828, 0
    %v835 = vsel %vm121, %v830, 0
    %837 = vmatprep.subr.bf16.mxu0 0
    %838 = vmatpush1.bf16.xpose.msra.mxu0 %v835
    %839 = vmatprep.subr.bf16.mxu0 0
    %840 = vmatpush1.bf16.xpose.msra.mxu0 0
    %841 = vmatprep.subr.bf16.mxu0 0
    %842 = vmatpush1.bf16.xpose.msra.mxu0 0
    %843 = vmatprep.subr.bf16.mxu0 0
    %844 = vmatpush1.bf16.xpose.msra.mxu0 0
    %845 = vmatprep.subr.bf16.mxu0 0
    %846 = vmatpush1.bf16.xpose.msra.mxu0 0
    %847 = vmatprep.subr.bf16.mxu0 0
    %848 = vmatpush1.bf16.xpose.msra.mxu0 0
    %849 = vmatprep.subr.bf16.mxu0 0
    %850 = vmatpush1.bf16.xpose.msra.mxu0 0
    %851 = vmatprep.subr.bf16.mxu0 0
    %852 = vmatpush1.bf16.xpose.msra.mxu0 0
    %853 = vmatprep.subr.bf16.mxu0 0
    %854 = vmatpush1.bf16.xpose.msra.mxu0 0
    %855 = vmatprep.subr.bf16.mxu0 0
    %856 = vmatpush1.bf16.xpose.msra.mxu0 0
    %857 = vmatprep.subr.bf16.mxu0 0
    %858 = vmatpush1.bf16.xpose.msra.mxu0 0
    %859 = vmatprep.subr.bf16.mxu0 0
    %860 = vmatpush1.bf16.xpose.msra.mxu0 0
    %861 = vmatprep.subr.bf16.mxu0 0
    %862 = vmatpush1.bf16.xpose.msra.mxu0 0
    %863 = vmatprep.subr.bf16.mxu0 0
    %864 = vmatpush1.bf16.xpose.msra.mxu0 0
    %865 = vmatprep.subr.bf16.mxu0 0
    %866 = vmatpush1.bf16.xpose.msra.mxu0 0
    %867 = vmatprep.subr.bf16.mxu0 0
    %868 = vmatpush1.bf16.xpose.msra.mxu0 0
    %869 = vmatprep.mubr.bf16.mxu0 0
    %870 = vmatmul.mubr.bf16.gmra.mrb[0].mxu0 %v832
    %v871 = vpop.f32.mrb[0].mxu0
    %v872 = vadd.f32 0.0, %v871
    %v873 = vpop.f32.mrb[0].mxu0
    %v874 = vpop.f32.mrb[0].mxu0
    %v875 = vadd.f32 0.0, %v874
    %v876 = vpop.f32.mrb[0].mxu0
    %877 = vdwg.mxu0
    %v878 = vsel %vm169, %v872, -inf
    %879 = vmax.xlane.f32.xlu0 %v878
    %v880 = vpop.xlane.xlu0 %879
    %v881 = vsel %vm173, %v875, -inf
    %882 = vmax.xlane.f32.xlu0 %v881
    %v883 = vpop.xlane.xlu0 %882
    %v884 = vsub.f32 %v872, %v880
    %v885 = vsub.f32 %v875, %v883
    %v886 = vmul.f32 %v884, 1.442695
    %v887 = vpow.pop %v886
    %v888 = vmul.f32 %v885, 1.442695
    %v889 = vpow.pop %v888
    %v890 = vsel %vm169, %v887, 0.0
    %891 = vadd.xlane.f32.xlu0 %v890
    %v892 = vpop.xlane.xlu0 %891
    %v893 = vsel %vm173, %v889, 0.0
    %894 = vadd.xlane.f32.xlu0 %v893
    %v895 = vpop.xlane.xlu0 %894
    %v896 = vrcp.pop %v892
    %v897 = vrcp.pop %v895
    %v898 = vmul.f32 %v887, %v896
    %v899 = vmul.f32 %v889, %v897
    %v900 = vpack.c.bf16 %v899, %v898
    %901 = vrot.lane.b32.xlu0 %v828, 64
    %v902 = vpop.permute.xlu0 %901
    %v904 = vsel %vm169, %v900, 0
    %v907 = vand.u32 %v902, %v202
    %909 = vmatprep.subr.bf16.mxu0 0
    %910 = vmatpush1.bf16.msra.mxu0 %v907
    %911 = vmatprep.subr.bf16.mxu0 0
    %912 = vmatpush1.bf16.msra.mxu0 0
    %913 = vmatprep.subr.bf16.mxu0 0
    %914 = vmatpush1.bf16.msra.mxu0 0
    %915 = vmatprep.subr.bf16.mxu0 0
    %916 = vmatpush1.bf16.msra.mxu0 0
    %917 = vmatprep.subr.bf16.mxu0 0
    %918 = vmatpush1.bf16.msra.mxu0 0
    %919 = vmatprep.subr.bf16.mxu0 0
    %920 = vmatpush1.bf16.msra.mxu0 0
    %921 = vmatprep.subr.bf16.mxu0 0
    %922 = vmatpush1.bf16.msra.mxu0 0
    %923 = vmatprep.subr.bf16.mxu0 0
    %924 = vmatpush1.bf16.msra.mxu0 0
    %925 = vmatprep.subr.bf16.mxu0 0
    %926 = vmatpush1.bf16.msra.mxu0 0
    %927 = vmatprep.subr.bf16.mxu0 0
    %928 = vmatpush1.bf16.msra.mxu0 0
    %929 = vmatprep.subr.bf16.mxu0 0
    %930 = vmatpush1.bf16.msra.mxu0 0
    %931 = vmatprep.subr.bf16.mxu0 0
    %932 = vmatpush1.bf16.msra.mxu0 0
    %933 = vmatprep.subr.bf16.mxu0 0
    %934 = vmatpush1.bf16.msra.mxu0 0
    %935 = vmatprep.subr.bf16.mxu0 0
    %936 = vmatpush1.bf16.msra.mxu0 0
    %937 = vmatprep.subr.bf16.mxu0 0
    %938 = vmatpush1.bf16.msra.mxu0 0
    %939 = vmatprep.subr.bf16.mxu0 0
    %940 = vmatpush1.bf16.msra.mxu0 0
    %941 = vmatprep.mubr.bf16.mxu0 0
    %942 = vmatmul.mubr.bf16.gmra.mrb[0].mxu0 %v904
    %v943 = vpop.f32.mrb[0].mxu0
    %v944 = vadd.f32 0.0, %v943
    %v945 = vpop.f32.mrb[0].mxu0
    %v946 = vpop.f32.mrb[0].mxu0
    %v947 = vadd.f32 0.0, %v946
    %v948 = vpop.f32.mrb[0].mxu0
    %949 = vdwg.mxu0
    %v950 = vpack.c.bf16 %v947, %v944
    %951 = vrot.lane.b32.xlu0 %v828, 120
    %v952 = vpop.permute.xlu0 %951
    %953 = vrot.lane.b32.xlu0 %v828, 88
    %v954 = vpop.permute.xlu0 %953
    %v956 = vsel %vm121, %v952, 0
    %v959 = vsel %vm121, %v954, 0
    %961 = vmatprep.subr.bf16.mxu0 0
    %962 = vmatpush1.bf16.xpose.msra.mxu0 %v959
    %963 = vmatprep.subr.bf16.mxu0 0
    %964 = vmatpush1.bf16.xpose.msra.mxu0 0
    %965 = vmatprep.subr.bf16.mxu0 0
    %966 = vmatpush1.bf16.xpose.msra.mxu0 0
    %967 = vmatprep.subr.bf16.mxu0 0
    %968 = vmatpush1.bf16.xpose.msra.mxu0 0
    %969 = vmatprep.subr.bf16.mxu0 0
    %970 = vmatpush1.bf16.xpose.msra.mxu0 0
    %971 = vmatprep.subr.bf16.mxu0 0
    %972 = vmatpush1.bf16.xpose.msra.mxu0 0
    %973 = vmatprep.subr.bf16.mxu0 0
    %974 = vmatpush1.bf16.xpose.msra.mxu0 0
    %975 = vmatprep.subr.bf16.mxu0 0
    %976 = vmatpush1.bf16.xpose.msra.mxu0 0
    %977 = vmatprep.subr.bf16.mxu0 0
    %978 = vmatpush1.bf16.xpose.msra.mxu0 0
    %979 = vmatprep.subr.bf16.mxu0 0
    %980 = vmatpush1.bf16.xpose.msra.mxu0 0
    %981 = vmatprep.subr.bf16.mxu0 0
    %982 = vmatpush1.bf16.xpose.msra.mxu0 0
    %983 = vmatprep.subr.bf16.mxu0 0
    %984 = vmatpush1.bf16.xpose.msra.mxu0 0
    %985 = vmatprep.subr.bf16.mxu0 0
    %986 = vmatpush1.bf16.xpose.msra.mxu0 0
    %987 = vmatprep.subr.bf16.mxu0 0
    %988 = vmatpush1.bf16.xpose.msra.mxu0 0
    %989 = vmatprep.subr.bf16.mxu0 0
    %990 = vmatpush1.bf16.xpose.msra.mxu0 0
    %991 = vmatprep.subr.bf16.mxu0 0
    %992 = vmatpush1.bf16.xpose.msra.mxu0 0
    %993 = vmatprep.mubr.bf16.mxu0 0
    %994 = vmatmul.mubr.bf16.gmra.mrb[0].mxu0 %v956
    %v995 = vpop.f32.mrb[0].mxu0
    %v996 = vadd.f32 0.0, %v995
    %v997 = vpop.f32.mrb[0].mxu0
    %v998 = vpop.f32.mrb[0].mxu0
    %v999 = vadd.f32 0.0, %v998
    %v1000 = vpop.f32.mrb[0].mxu0
    %1001 = vdwg.mxu0
    %v1002 = vsel %vm169, %v996, -inf
    %1003 = vmax.xlane.f32.xlu0 %v1002
    %v1004 = vpop.xlane.xlu0 %1003
    %v1005 = vsel %vm173, %v999, -inf
    %1006 = vmax.xlane.f32.xlu0 %v1005
    %v1007 = vpop.xlane.xlu0 %1006
    %v1008 = vsub.f32 %v996, %v1004
    %v1009 = vsub.f32 %v999, %v1007
    %v1010 = vmul.f32 %v1008, 1.442695
    %v1011 = vpow.pop %v1010
    %v1012 = vmul.f32 %v1009, 1.442695
    %v1013 = vpow.pop %v1012
    %v1014 = vsel %vm169, %v1011, 0.0
    %1015 = vadd.xlane.f32.xlu0 %v1014
    %v1016 = vpop.xlane.xlu0 %1015
    %v1017 = vsel %vm173, %v1013, 0.0
    %1018 = vadd.xlane.f32.xlu0 %v1017
    %v1019 = vpop.xlane.xlu0 %1018
    %v1020 = vrcp.pop %v1016
    %v1021 = vrcp.pop %v1019
    %v1022 = vmul.f32 %v1011, %v1020
    %v1023 = vmul.f32 %v1013, %v1021
    %v1024 = vpack.c.bf16 %v1023, %v1022
    %1025 = vrot.lane.b32.xlu0 %v828, 56
    %v1026 = vpop.permute.xlu0 %1025
    %v1028 = vsel %vm169, %v1024, 0
    %v1031 = vand.u32 %v1026, %v202
    %1033 = vmatprep.subr.bf16.mxu0 0
    %1034 = vmatpush1.bf16.msra.mxu0 %v1031
    %1035 = vmatprep.subr.bf16.mxu0 0
    %1036 = vmatpush1.bf16.msra.mxu0 0
    %1037 = vmatprep.subr.bf16.mxu0 0
    %1038 = vmatpush1.bf16.msra.mxu0 0
    %1039 = vmatprep.subr.bf16.mxu0 0
    %1040 = vmatpush1.bf16.msra.mxu0 0
    %1041 = vmatprep.subr.bf16.mxu0 0
    %1042 = vmatpush1.bf16.msra.mxu0 0
    %1043 = vmatprep.subr.bf16.mxu0 0
    %1044 = vmatpush1.bf16.msra.mxu0 0
    %1045 = vmatprep.subr.bf16.mxu0 0
    %1046 = vmatpush1.bf16.msra.mxu0 0
    %1047 = vmatprep.subr.bf16.mxu0 0
    %1048 = vmatpush1.bf16.msra.mxu0 0
    %1049 = vmatprep.subr.bf16.mxu0 0
    %1050 = vmatpush1.bf16.msra.mxu0 0
    %1051 = vmatprep.subr.bf16.mxu0 0
    %1052 = vmatpush1.bf16.msra.mxu0 0
    %1053 = vmatprep.subr.bf16.mxu0 0
    %1054 = vmatpush1.bf16.msra.mxu0 0
    %1055 = vmatprep.subr.bf16.mxu0 0
    %1056 = vmatpush1.bf16.msra.mxu0 0
    %1057 = vmatprep.subr.bf16.mxu0 0
    %1058 = vmatpush1.bf16.msra.mxu0 0
    %1059 = vmatprep.subr.bf16.mxu0 0
    %1060 = vmatpush1.bf16.msra.mxu0 0
    %1061 = vmatprep.subr.bf16.mxu0 0
    %1062 = vmatpush1.bf16.msra.mxu0 0
    %1063 = vmatprep.subr.bf16.mxu0 0
    %1064 = vmatpush1.bf16.msra.mxu0 0
    %1065 = vmatprep.mubr.bf16.mxu0 0
    %1066 = vmatmul.mubr.bf16.gmra.mrb[0].mxu0 %v1028
    %v1067 = vpop.f32.mrb[0].mxu0
    %v1068 = vadd.f32 0.0, %v1067
    %v1069 = vpop.f32.mrb[0].mxu0
    %v1070 = vpop.f32.mrb[0].mxu0
    %v1071 = vadd.f32 0.0, %v1070
    %v1072 = vpop.f32.mrb[0].mxu0
    %1073 = vdwg.mxu0
    %v1074 = vpack.c.bf16 %v1071, %v1068
    %v1076 = vsel %vm121, %v1074, 0
    %1078 = vmatprep.subr.bf16.mxu0 0
    %1079 = vmatpush1.bf16.msra.mxu0 %v376
    %1080 = vmatprep.subr.bf16.mxu0 0
    %1081 = vmatpush1.bf16.msra.mxu0 0
    %1082 = vmatprep.subr.bf16.mxu0 0
    %1083 = vmatpush1.bf16.msra.mxu0 0
    %1084 = vmatprep.subr.bf16.mxu0 0
    %1085 = vmatpush1.bf16.msra.mxu0 0
    %1086 = vmatprep.subr.bf16.mxu0 0
    %1087 = vmatpush1.bf16.msra.mxu0 0
    %1088 = vmatprep.subr.bf16.mxu0 0
    %1089 = vmatpush1.bf16.msra.mxu0 0
    %1090 = vmatprep.subr.bf16.mxu0 0
    %1091 = vmatpush1.bf16.msra.mxu0 0
    %1092 = vmatprep.subr.bf16.mxu0 0
    %1093 = vmatpush1.bf16.msra.mxu0 0
    %1094 = vmatprep.subr.bf16.mxu0 0
    %1095 = vmatpush1.bf16.msra.mxu0 0
    %1096 = vmatprep.subr.bf16.mxu0 0
    %1097 = vmatpush1.bf16.msra.mxu0 0
    %1098 = vmatprep.subr.bf16.mxu0 0
    %1099 = vmatpush1.bf16.msra.mxu0 0
    %1100 = vmatprep.subr.bf16.mxu0 0
    %1101 = vmatpush1.bf16.msra.mxu0 0
    %1102 = vmatprep.subr.bf16.mxu0 0
    %1103 = vmatpush1.bf16.msra.mxu0 0
    %1104 = vmatprep.subr.bf16.mxu0 0
    %1105 = vmatpush1.bf16.msra.mxu0 0
    %1106 = vmatprep.subr.bf16.mxu0 0
    %1107 = vmatpush1.bf16.msra.mxu0 0
    %1108 = vmatprep.subr.bf16.mxu0 0
    %1109 = vmatpush1.bf16.msra.mxu0 0
    %1110 = vmatprep.mubr.bf16.mxu0 0
    %1111 = vmatmul.mubr.bf16.gmra.mrb[0].mxu0 %v1076
    %v1112 = vpop.f32.mrb[0].mxu0
    %v1113 = vadd.f32 0.0, %v1112
    %v1114 = vpop.f32.mrb[0].mxu0
    %v1115 = vpop.f32.mrb[0].mxu0
    %v1116 = vadd.f32 0.0, %v1115
    %v1117 = vpop.f32.mrb[0].mxu0
    %1118 = vdwg.mxu0
    %v1120 = vsel %vm121, %v950, 0
    %1122 = vmatprep.subr.bf16.mxu0 0
    %1123 = vmatpush1.bf16.msra.mxu0 %v423
    %1124 = vmatprep.subr.bf16.mxu0 0
    %1125 = vmatpush1.bf16.msra.mxu0 0
    %1126 = vmatprep.subr.bf16.mxu0 0
    %1127 = vmatpush1.bf16.msra.mxu0 0
    %1128 = vmatprep.subr.bf16.mxu0 0
    %1129 = vmatpush1.bf16.msra.mxu0 0
    %1130 = vmatprep.subr.bf16.mxu0 0
    %1131 = vmatpush1.bf16.msra.mxu0 0
    %1132 = vmatprep.subr.bf16.mxu0 0
    %1133 = vmatpush1.bf16.msra.mxu0 0
    %1134 = vmatprep.subr.bf16.mxu0 0
    %1135 = vmatpush1.bf16.msra.mxu0 0
    %1136 = vmatprep.subr.bf16.mxu0 0
    %1137 = vmatpush1.bf16.msra.mxu0 0
    %1138 = vmatprep.subr.bf16.mxu0 0
    %1139 = vmatpush1.bf16.msra.mxu0 0
    %1140 = vmatprep.subr.bf16.mxu0 0
    %1141 = vmatpush1.bf16.msra.mxu0 0
    %1142 = vmatprep.subr.bf16.mxu0 0
    %1143 = vmatpush1.bf16.msra.mxu0 0
    %1144 = vmatprep.subr.bf16.mxu0 0
    %1145 = vmatpush1.bf16.msra.mxu0 0
    %1146 = vmatprep.subr.bf16.mxu0 0
    %1147 = vmatpush1.bf16.msra.mxu0 0
    %1148 = vmatprep.subr.bf16.mxu0 0
    %1149 = vmatpush1.bf16.msra.mxu0 0
    %1150 = vmatprep.subr.bf16.mxu0 0
    %1151 = vmatpush1.bf16.msra.mxu0 0
    %1152 = vmatprep.subr.bf16.mxu0 0
    %1153 = vmatpush1.bf16.msra.mxu0 0
    %1154 = vmatprep.mubr.bf16.mxu0 0
    %1155 = vmatmul.mubr.bf16.gmra.mrb[0].mxu0 %v1120
    %v1156 = vpop.f32.mrb[0].mxu0
    %v1157 = vadd.f32 %v1113, %v1156
    %v1158 = vpop.f32.mrb[0].mxu0
    %v1159 = vpop.f32.mrb[0].mxu0
    %v1160 = vadd.f32 %v1116, %v1159
    %v1161 = vpop.f32.mrb[0].mxu0
    %1162 = vdwg.mxu0
    %1163 = vrot.lane.b32.xlu0 %v828, 112
    %v1164 = vpop.permute.xlu0 %1163
    %1165 = vrot.lane.b32.xlu0 %v828, 80
    %v1166 = vpop.permute.xlu0 %1165
    %v1168 = vsel %vm121, %v1164, 0
    %v1171 = vsel %vm121, %v1166, 0
    %1173 = vmatprep.subr.bf16.mxu0 0
    %1174 = vmatpush1.bf16.xpose.msra.mxu0 %v1171
    %1175 = vmatprep.subr.bf16.mxu0 0
    %1176 = vmatpush1.bf16.xpose.msra.mxu0 0
    %1177 = vmatprep.subr.bf16.mxu0 0
    %1178 = vmatpush1.bf16.xpose.msra.mxu0 0
    %1179 = vmatprep.subr.bf16.mxu0 0
    %1180 = vmatpush1.bf16.xpose.msra.mxu0 0
    %1181 = vmatprep.subr.bf16.mxu0 0
    %1182 = vmatpush1.bf16.xpose.msra.mxu0 0
    %1183 = vmatprep.subr.bf16.mxu0 0
    %1184 = vmatpush1.bf16.xpose.msra.mxu0 0
    %1185 = vmatprep.subr.bf16.mxu0 0
    %1186 = vmatpush1.bf16.xpose.msra.mxu0 0
    %1187 = vmatprep.subr.bf16.mxu0 0
    %1188 = vmatpush1.bf16.xpose.msra.mxu0 0
    %1189 = vmatprep.subr.bf16.mxu0 0
    %1190 = vmatpush1.bf16.xpose.msra.mxu0 0
    %1191 = vmatprep.subr.bf16.mxu0 0
    %1192 = vmatpush1.bf16.xpose.msra.mxu0 0
    %1193 = vmatprep.subr.bf16.mxu0 0
    %1194 = vmatpush1.bf16.xpose.msra.mxu0 0
    %1195 = vmatprep.subr.bf16.mxu0 0
    %1196 = vmatpush1.bf16.xpose.msra.mxu0 0
    %1197 = vmatprep.subr.bf16.mxu0 0
    %1198 = vmatpush1.bf16.xpose.msra.mxu0 0
    %1199 = vmatprep.subr.bf16.mxu0 0
    %1200 = vmatpush1.bf16.xpose.msra.mxu0 0
    %1201 = vmatprep.subr.bf16.mxu0 0
    %1202 = vmatpush1.bf16.xpose.msra.mxu0 0
    %1203 = vmatprep.subr.bf16.mxu0 0
    %1204 = vmatpush1.bf16.xpose.msra.mxu0 0
    %1205 = vmatprep.mubr.bf16.mxu0 0
    %1206 = vmatmul.mubr.bf16.gmra.mrb[0].mxu0 %v1168
    %v1207 = vpop.f32.mrb[0].mxu0
    %v1208 = vadd.f32 0.0, %v1207
    %v1209 = vpop.f32.mrb[0].mxu0
    %v1210 = vpop.f32.mrb[0].mxu0
    %v1211 = vadd.f32 0.0, %v1210
    %v1212 = vpop.f32.mrb[0].mxu0
    %1213 = vdwg.mxu0
    %v1214 = vsel %vm169, %v1208, -inf
    %1215 = vmax.xlane.f32.xlu0 %v1214
    %v1216 = vpop.xlane.xlu0 %1215
    %v1217 = vsel %vm173, %v1211, -inf
    %1218 = vmax.xlane.f32.xlu0 %v1217
    %v1219 = vpop.xlane.xlu0 %1218
    %v1220 = vsub.f32 %v1208, %v1216
    %v1221 = vsub.f32 %v1211, %v1219
    %v1222 = vmul.f32 %v1220, 1.442695
    %v1223 = vpow.pop %v1222
    %v1224 = vmul.f32 %v1221, 1.442695
    %v1225 = vpow.pop %v1224
    %v1226 = vsel %vm169, %v1223, 0.0
    %1227 = vadd.xlane.f32.xlu0 %v1226
    %v1228 = vpop.xlane.xlu0 %1227
    %v1229 = vsel %vm173, %v1225, 0.0
    %1230 = vadd.xlane.f32.xlu0 %v1229
    %v1231 = vpop.xlane.xlu0 %1230
    %v1232 = vrcp.pop %v1228
    %v1233 = vrcp.pop %v1231
    %v1234 = vmul.f32 %v1223, %v1232
    %v1235 = vmul.f32 %v1225, %v1233
    %v1236 = vpack.c.bf16 %v1235, %v1234
    %1237 = vrot.lane.b32.xlu0 %v828, 48
    %v1238 = vpop.permute.xlu0 %1237
    %v1240 = vsel %vm169, %v1236, 0
    %v1243 = vand.u32 %v1238, %v202
    %1245 = vmatprep.subr.bf16.mxu0 0
    %1246 = vmatpush1.bf16.msra.mxu0 %v1243
    %1247 = vmatprep.subr.bf16.mxu0 0
    %1248 = vmatpush1.bf16.msra.mxu0 0
    %1249 = vmatprep.subr.bf16.mxu0 0
    %1250 = vmatpush1.bf16.msra.mxu0 0
    %1251 = vmatprep.subr.bf16.mxu0 0
    %1252 = vmatpush1.bf16.msra.mxu0 0
    %1253 = vmatprep.subr.bf16.mxu0 0
    %1254 = vmatpush1.bf16.msra.mxu0 0
    %1255 = vmatprep.subr.bf16.mxu0 0
    %1256 = vmatpush1.bf16.msra.mxu0 0
    %1257 = vmatprep.subr.bf16.mxu0 0
    %1258 = vmatpush1.bf16.msra.mxu0 0
    %1259 = vmatprep.subr.bf16.mxu0 0
    %1260 = vmatpush1.bf16.msra.mxu0 0
    %1261 = vmatprep.subr.bf16.mxu0 0
    %1262 = vmatpush1.bf16.msra.mxu0 0
    %1263 = vmatprep.subr.bf16.mxu0 0
    %1264 = vmatpush1.bf16.msra.mxu0 0
    %1265 = vmatprep.subr.bf16.mxu0 0
    %1266 = vmatpush1.bf16.msra.mxu0 0
    %1267 = vmatprep.subr.bf16.mxu0 0
    %1268 = vmatpush1.bf16.msra.mxu0 0
    %1269 = vmatprep.subr.bf16.mxu0 0
    %1270 = vmatpush1.bf16.msra.mxu0 0
    %1271 = vmatprep.subr.bf16.mxu0 0
    %1272 = vmatpush1.bf16.msra.mxu0 0
    %1273 = vmatprep.subr.bf16.mxu0 0
    %1274 = vmatpush1.bf16.msra.mxu0 0
    %1275 = vmatprep.subr.bf16.mxu0 0
    %1276 = vmatpush1.bf16.msra.mxu0 0
    %1277 = vmatprep.mubr.bf16.mxu0 0
    %1278 = vmatmul.mubr.bf16.gmra.mrb[0].mxu0 %v1240
    %v1279 = vpop.f32.mrb[0].mxu0
    %v1280 = vadd.f32 0.0, %v1279
    %v1281 = vpop.f32.mrb[0].mxu0
    %v1282 = vpop.f32.mrb[0].mxu0
    %v1283 = vadd.f32 0.0, %v1282
    %v1284 = vpop.f32.mrb[0].mxu0
    %1285 = vdwg.mxu0
    %v1286 = vpack.c.bf16 %v1283, %v1280
    %v1288 = vsel %vm121, %v1286, 0
    %1290 = vmatprep.subr.bf16.mxu0 0
    %1291 = vmatpush1.bf16.msra.mxu0 %v594
    %1292 = vmatprep.subr.bf16.mxu0 0
    %1293 = vmatpush1.bf16.msra.mxu0 0
    %1294 = vmatprep.subr.bf16.mxu0 0
    %1295 = vmatpush1.bf16.msra.mxu0 0
    %1296 = vmatprep.subr.bf16.mxu0 0
    %1297 = vmatpush1.bf16.msra.mxu0 0
    %1298 = vmatprep.subr.bf16.mxu0 0
    %1299 = vmatpush1.bf16.msra.mxu0 0
    %1300 = vmatprep.subr.bf16.mxu0 0
    %1301 = vmatpush1.bf16.msra.mxu0 0
    %1302 = vmatprep.subr.bf16.mxu0 0
    %1303 = vmatpush1.bf16.msra.mxu0 0
    %1304 = vmatprep.subr.bf16.mxu0 0
    %1305 = vmatpush1.bf16.msra.mxu0 0
    %1306 = vmatprep.subr.bf16.mxu0 0
    %1307 = vmatpush1.bf16.msra.mxu0 0
    %1308 = vmatprep.subr.bf16.mxu0 0
    %1309 = vmatpush1.bf16.msra.mxu0 0
    %1310 = vmatprep.subr.bf16.mxu0 0
    %1311 = vmatpush1.bf16.msra.mxu0 0
    %1312 = vmatprep.subr.bf16.mxu0 0
    %1313 = vmatpush1.bf16.msra.mxu0 0
    %1314 = vmatprep.subr.bf16.mxu0 0
    %1315 = vmatpush1.bf16.msra.mxu0 0
    %1316 = vmatprep.subr.bf16.mxu0 0
    %1317 = vmatpush1.bf16.msra.mxu0 0
    %1318 = vmatprep.subr.bf16.mxu0 0
    %1319 = vmatpush1.bf16.msra.mxu0 0
    %1320 = vmatprep.subr.bf16.mxu0 0
    %1321 = vmatpush1.bf16.msra.mxu0 0
    %1322 = vmatprep.mubr.bf16.mxu0 0
    %1323 = vmatmul.mubr.bf16.gmra.mrb[0].mxu0 %v1288
    %v1324 = vpop.f32.mrb[0].mxu0
    %v1325 = vadd.f32 0.0, %v1324
    %v1326 = vpop.f32.mrb[0].mxu0
    %v1327 = vpop.f32.mrb[0].mxu0
    %v1328 = vadd.f32 0.0, %v1327
    %v1329 = vpop.f32.mrb[0].mxu0
    %1330 = vdwg.mxu0
    %v1331 = vadd.f32 %v1157, %v1325
    %v1332 = vadd.f32 %v1160, %v1328
    %1333 = vrot.lane.b32.xlu0 %v828, 104
    %v1334 = vpop.permute.xlu0 %1333
    %1335 = vrot.lane.b32.xlu0 %v828, 72
    %v1336 = vpop.permute.xlu0 %1335
    %v1338 = vsel %vm121, %v1334, 0
    %v1341 = vsel %vm121, %v1336, 0
    %1343 = vmatprep.subr.bf16.mxu0 0
    %1344 = vmatpush1.bf16.xpose.msra.mxu0 %v1341
    %1345 = vmatprep.subr.bf16.mxu0 0
    %1346 = vmatpush1.bf16.xpose.msra.mxu0 0
    %1347 = vmatprep.subr.bf16.mxu0 0
    %1348 = vmatpush1.bf16.xpose.msra.mxu0 0
    %1349 = vmatprep.subr.bf16.mxu0 0
    %1350 = vmatpush1.bf16.xpose.msra.mxu0 0
    %1351 = vmatprep.subr.bf16.mxu0 0
    %1352 = vmatpush1.bf16.xpose.msra.mxu0 0
    %1353 = vmatprep.subr.bf16.mxu0 0
    %1354 = vmatpush1.bf16.xpose.msra.mxu0 0
    %1355 = vmatprep.subr.bf16.mxu0 0
    %1356 = vmatpush1.bf16.xpose.msra.mxu0 0
    %1357 = vmatprep.subr.bf16.mxu0 0
    %1358 = vmatpush1.bf16.xpose.msra.mxu0 0
    %1359 = vmatprep.subr.bf16.mxu0 0
    %1360 = vmatpush1.bf16.xpose.msra.mxu0 0
    %1361 = vmatprep.subr.bf16.mxu0 0
    %1362 = vmatpush1.bf16.xpose.msra.mxu0 0
    %1363 = vmatprep.subr.bf16.mxu0 0
    %1364 = vmatpush1.bf16.xpose.msra.mxu0 0
    %1365 = vmatprep.subr.bf16.mxu0 0
    %1366 = vmatpush1.bf16.xpose.msra.mxu0 0
    %1367 = vmatprep.subr.bf16.mxu0 0
    %1368 = vmatpush1.bf16.xpose.msra.mxu0 0
    %1369 = vmatprep.subr.bf16.mxu0 0
    %1370 = vmatpush1.bf16.xpose.msra.mxu0 0
    %1371 = vmatprep.subr.bf16.mxu0 0
    %1372 = vmatpush1.bf16.xpose.msra.mxu0 0
    %1373 = vmatprep.subr.bf16.mxu0 0
    %1374 = vmatpush1.bf16.xpose.msra.mxu0 0
    %1375 = vmatprep.mubr.bf16.mxu0 0
    %1376 = vmatmul.mubr.bf16.gmra.mrb[0].mxu0 %v1338
    %v1377 = vpop.f32.mrb[0].mxu0
    %v1378 = vadd.f32 0.0, %v1377
    %v1379 = vpop.f32.mrb[0].mxu0
    %v1380 = vpop.f32.mrb[0].mxu0
    %v1381 = vadd.f32 0.0, %v1380
    %v1382 = vpop.f32.mrb[0].mxu0
    %1383 = vdwg.mxu0
    %v1384 = vsel %vm169, %v1378, -inf
    %1385 = vmax.xlane.f32.xlu0 %v1384
    %v1386 = vpop.xlane.xlu0 %1385
    %v1387 = vsel %vm173, %v1381, -inf
    %1388 = vmax.xlane.f32.xlu0 %v1387
    %v1389 = vpop.xlane.xlu0 %1388
    %v1390 = vsub.f32 %v1378, %v1386
    %v1391 = vsub.f32 %v1381, %v1389
    %v1392 = vmul.f32 %v1390, 1.442695
    %v1393 = vpow.pop %v1392
    %v1394 = vmul.f32 %v1391, 1.442695
    %v1395 = vpow.pop %v1394
    %v1396 = vsel %vm169, %v1393, 0.0
    %1397 = vadd.xlane.f32.xlu0 %v1396
    %v1398 = vpop.xlane.xlu0 %1397
    %v1399 = vsel %vm173, %v1395, 0.0
    %1400 = vadd.xlane.f32.xlu0 %v1399
    %v1401 = vpop.xlane.xlu0 %1400
    %v1402 = vrcp.pop %v1398
    %v1403 = vrcp.pop %v1401
    %v1404 = vmul.f32 %v1393, %v1402
    %v1405 = vmul.f32 %v1395, %v1403
    %v1406 = vpack.c.bf16 %v1405, %v1404
    %1407 = vrot.lane.b32.xlu0 %v828, 40
    %v1408 = vpop.permute.xlu0 %1407
    %v1410 = vsel %vm169, %v1406, 0
    %v1413 = vand.u32 %v1408, %v202
    %1415 = vmatprep.subr.bf16.mxu0 0
    %1416 = vmatpush1.bf16.msra.mxu0 %v1413
    %1417 = vmatprep.subr.bf16.mxu0 0
    %1418 = vmatpush1.bf16.msra.mxu0 0
    %1419 = vmatprep.subr.bf16.mxu0 0
    %1420 = vmatpush1.bf16.msra.mxu0 0
    %1421 = vmatprep.subr.bf16.mxu0 0
    %1422 = vmatpush1.bf16.msra.mxu0 0
    %1423 = vmatprep.subr.bf16.mxu0 0
    %1424 = vmatpush1.bf16.msra.mxu0 0
    %1425 = vmatprep.subr.bf16.mxu0 0
    %1426 = vmatpush1.bf16.msra.mxu0 0
    %1427 = vmatprep.subr.bf16.mxu0 0
    %1428 = vmatpush1.bf16.msra.mxu0 0
    %1429 = vmatprep.subr.bf16.mxu0 0
    %1430 = vmatpush1.bf16.msra.mxu0 0
    %1431 = vmatprep.subr.bf16.mxu0 0
    %1432 = vmatpush1.bf16.msra.mxu0 0
    %1433 = vmatprep.subr.bf16.mxu0 0
    %1434 = vmatpush1.bf16.msra.mxu0 0
    %1435 = vmatprep.subr.bf16.mxu0 0
    %1436 = vmatpush1.bf16.msra.mxu0 0
    %1437 = vmatprep.subr.bf16.mxu0 0
    %1438 = vmatpush1.bf16.msra.mxu0 0
    %1439 = vmatprep.subr.bf16.mxu0 0
    %1440 = vmatpush1.bf16.msra.mxu0 0
    %1441 = vmatprep.subr.bf16.mxu0 0
    %1442 = vmatpush1.bf16.msra.mxu0 0
    %1443 = vmatprep.subr.bf16.mxu0 0
    %1444 = vmatpush1.bf16.msra.mxu0 0
    %1445 = vmatprep.subr.bf16.mxu0 0
    %1446 = vmatpush1.bf16.msra.mxu0 0
    %1447 = vmatprep.mubr.bf16.mxu0 0
    %1448 = vmatmul.mubr.bf16.gmra.mrb[0].mxu0 %v1410
    %v1449 = vpop.f32.mrb[0].mxu0
    %v1450 = vadd.f32 0.0, %v1449
    %v1451 = vpop.f32.mrb[0].mxu0
    %v1452 = vpop.f32.mrb[0].mxu0
    %v1453 = vadd.f32 0.0, %v1452
    %v1454 = vpop.f32.mrb[0].mxu0
    %1455 = vdwg.mxu0
    %v1456 = vpack.c.bf16 %v1453, %v1450
    %v1458 = vsel %vm121, %v1456, 0
    %1460 = vmatprep.subr.bf16.mxu0 0
    %1461 = vmatpush1.bf16.msra.mxu0 %v767
    %1462 = vmatprep.subr.bf16.mxu0 0
    %1463 = vmatpush1.bf16.msra.mxu0 0
    %1464 = vmatprep.subr.bf16.mxu0 0
    %1465 = vmatpush1.bf16.msra.mxu0 0
    %1466 = vmatprep.subr.bf16.mxu0 0
    %1467 = vmatpush1.bf16.msra.mxu0 0
    %1468 = vmatprep.subr.bf16.mxu0 0
    %1469 = vmatpush1.bf16.msra.mxu0 0
    %1470 = vmatprep.subr.bf16.mxu0 0
    %1471 = vmatpush1.bf16.msra.mxu0 0
    %1472 = vmatprep.subr.bf16.mxu0 0
    %1473 = vmatpush1.bf16.msra.mxu0 0
    %1474 = vmatprep.subr.bf16.mxu0 0
    %1475 = vmatpush1.bf16.msra.mxu0 0
    %1476 = vmatprep.subr.bf16.mxu0 0
    %1477 = vmatpush1.bf16.msra.mxu0 0
    %1478 = vmatprep.subr.bf16.mxu0 0
    %1479 = vmatpush1.bf16.msra.mxu0 0
    %1480 = vmatprep.subr.bf16.mxu0 0
    %1481 = vmatpush1.bf16.msra.mxu0 0
    %1482 = vmatprep.subr.bf16.mxu0 0
    %1483 = vmatpush1.bf16.msra.mxu0 0
    %1484 = vmatprep.subr.bf16.mxu0 0
    %1485 = vmatpush1.bf16.msra.mxu0 0
    %1486 = vmatprep.subr.bf16.mxu0 0
    %1487 = vmatpush1.bf16.msra.mxu0 0
    %1488 = vmatprep.subr.bf16.mxu0 0
    %1489 = vmatpush1.bf16.msra.mxu0 0
    %1490 = vmatprep.subr.bf16.mxu0 0
    %1491 = vmatpush1.bf16.msra.mxu0 0
    %1492 = vmatprep.mubr.bf16.mxu0 0
    %1493 = vmatmul.mubr.bf16.gmra.mrb[0].mxu0 %v1458
    %v1494 = vpop.f32.mrb[0].mxu0
    %v1495 = vadd.f32 0.0, %v1494
    %v1496 = vpop.f32.mrb[0].mxu0
    %v1497 = vpop.f32.mrb[0].mxu0
    %v1498 = vadd.f32 0.0, %v1497
    %v1499 = vpop.f32.mrb[0].mxu0
    %1500 = vdwg.mxu0
    %v1501 = vadd.f32 %v1331, %v1495
    %v1502 = vadd.f32 %v1332, %v1498
    %vm1505 = vcmask 1040384
    %v1506 = vrot.slane %v1501, 7
    %v1507 = vrot.slane %v1502, 7
    %v1508 = vsel %vm1505, %v1506, %v1507
    %v1511 = vsel %vm1505, %v811, %v1506
    %v1512 = vlaneseq
    %v1513 = vshrl.u32 %v1512, 7
    %v1514 = vsub.s32 1, %v1513
    %v1515 = vrot.slane %v34, %v1514
    %v1516 = vadd.f32 %v810, %v1515
    %v1517 = vadd.f32 %v1511, %v1515
    %v1518 = vadd.f32 %v1508, %v1515
    %v1519 = vadd.f32 %v31, %v1516
    %v1520 = vadd.f32 %v32, %v1517
    %v1521 = vadd.f32 %v33, %v1518
    %v1522 = vsel %vm61, %v1519, 0.0
    %1523 = vadd.xlane.f32.xlu0 %v1522
    %v1524 = vpop.xlane.xlu0 %1523
    %v1525 = vsel %vm61, %v1520, 0.0
    %1526 = vadd.xlane.f32.xlu0 %v1525
    %v1527 = vpop.xlane.xlu0 %1526
    %vm1528 = vcmask 254976
    %v1529 = vsel %vm1528, %v1521, 0.0
    %1530 = vadd.xlane.f32.xlu0 %v1529
    %v1531 = vpop.xlane.xlu0 %1530
    %v1532 = vrcp.pop 32.0
    %v1533 = vmul.f32 %v1524, %v1532
    %v1534 = vmul.f32 %v1527, %v1532
    %v1535 = vmul.f32 %v1531, %v1532
    %v1536 = vsub.f32 %v1519, %v1533
    %v1537 = vsub.f32 %v1520, %v1534
    %v1538 = vsub.f32 %v1521, %v1535
    %v1539 = vmul.f32 %v1536, %v1536
    %v1540 = vmul.f32 %v1537, %v1537
    %v1541 = vmul.f32 %v1538, %v1538
    %v1542 = vsel %vm61, %v1539, 0.0
    %1543 = vadd.xlane.f32.xlu0 %v1542
    %v1544 = vpop.xlane.xlu0 %1543
    %v1545 = vsel %vm61, %v1540, 0.0
    %1546 = vadd.xlane.f32.xlu0 %v1545
    %v1547 = vpop.xlane.xlu0 %1546
    %v1548 = vsel %vm1528, %v1541, 0.0
    %1549 = vadd.xlane.f32.xlu0 %v1548
    %v1550 = vpop.xlane.xlu0 %1549
    %v1551 = vmul.f32 %v1544, %v1532
    %v1552 = vmul.f32 %v1547, %v1532
    %v1553 = vmul.f32 %v1550, %v1532
    %v1554 = vadd.f32 %v1551, 1e-05
    %v1555 = vadd.f32 %v1552, 1e-05
    %v1556 = vadd.f32 %v1553, 1e-05
    %v1557 = vrsqrt.pop %v1554
    %v1558 = vrsqrt.pop %v1555
    %v1559 = vrsqrt.pop %v1556
    %v1560 = vmul.f32 %v1536, %v1557
    %v1561 = vmul.f32 %v1537, %v1558
    %v1562 = vmul.f32 %v1538, %v1559
    %v1563 = vlaneseq
    %v1564 = vshrl.u32 %v1563, 7
    %v1565 = vsub.s32 4, %v1564
    %v1566 = vrot.slane %v34, %v1565
    %v1567 = vmul.f32 %v1560, %v1566
    %v1568 = vmul.f32 %v1561, %v1566
    %v1569 = vmul.f32 %v1562, %v1566
    %v1570 = vlaneseq
    %v1571 = vshrl.u32 %v1570, 7
    %v1572 = vsub.s32 5, %v1571
    %v1573 = vrot.slane %v34, %v1572
    %v1574 = vadd.f32 %v1567, %v1573
    %v1575 = vadd.f32 %v1568, %v1573
    %v1576 = vadd.f32 %v1569, %v1573
    %v1577 = vpack.c.bf16 %v1575, %v1574
    %v1578 = vpack.c.bf16 %v1576, %v1576
    %v1579 = vld [vmem:[%s3] sm:$0xf]
    %v1580 = vld [vmem:[%s3 + $0x4] sm:$0xf]
    %v1581 = vld [vmem:[%s3 + $0x8] sm:$0xf]
    %v1582 = vld [vmem:[%s3 + $0xc] sm:$0xf]
    %v1583 = vlaneseq
    %v1584 = vshrl.u32 %v1583, 7
    %v1585 = vsub.s32 2, %v1584
    %v1586 = vrot.slane %v34, %v1585
    %v1591 = vunpack.c.l.b16 %v1579
    %v1592 = vunpack.c.l.b16 %v1580
    %v1593 = vunpack.c.l.b16 %v1581
    %v1594 = vunpack.c.l.b16 %v1582
    %v1595 = vpack.c.b16 %v1592, %v1591
    %v1596 = vpack.c.b16 %v1594, %v1593
    %v1600 = vsel %vm61, %v1577, 0
    %v1603 = vsel %vm61, %v1578, 0
    %1605 = vmatprep.subr.bf16.mxu0 0
    %1606 = vmatpush1.bf16.msra.mxu0 %v1595
    %1607 = vmatprep.subr.bf16.mxu0 0
    %1608 = vmatpush1.bf16.msra.mxu0 %v1596
    %1609 = vmatprep.subr.bf16.mxu0 0
    %1610 = vmatpush1.bf16.msra.mxu0 0
    %1611 = vmatprep.subr.bf16.mxu0 0
    %1612 = vmatpush1.bf16.msra.mxu0 0
    %1613 = vmatprep.subr.bf16.mxu0 0
    %1614 = vmatpush1.bf16.msra.mxu0 0
    %1615 = vmatprep.subr.bf16.mxu0 0
    %1616 = vmatpush1.bf16.msra.mxu0 0
    %1617 = vmatprep.subr.bf16.mxu0 0
    %1618 = vmatpush1.bf16.msra.mxu0 0
    %1619 = vmatprep.subr.bf16.mxu0 0
    %1620 = vmatpush1.bf16.msra.mxu0 0
    %1621 = vmatprep.subr.bf16.mxu0 0
    %1622 = vmatpush1.bf16.msra.mxu0 0
    %1623 = vmatprep.subr.bf16.mxu0 0
    %1624 = vmatpush1.bf16.msra.mxu0 0
    %1625 = vmatprep.subr.bf16.mxu0 0
    %1626 = vmatpush1.bf16.msra.mxu0 0
    %1627 = vmatprep.subr.bf16.mxu0 0
    %1628 = vmatpush1.bf16.msra.mxu0 0
    %1629 = vmatprep.subr.bf16.mxu0 0
    %1630 = vmatpush1.bf16.msra.mxu0 0
    %1631 = vmatprep.subr.bf16.mxu0 0
    %1632 = vmatpush1.bf16.msra.mxu0 0
    %1633 = vmatprep.subr.bf16.mxu0 0
    %1634 = vmatpush1.bf16.msra.mxu0 0
    %1635 = vmatprep.subr.bf16.mxu0 0
    %1636 = vmatpush1.bf16.msra.mxu0 0
    %1637 = vmatprep.mubr.bf16.mxu0 0
    %1638 = vmatmul.mubr.bf16.gmra.mrb[0].mxu0 %v1600
    %v1639 = vpop.f32.mrb[0].mxu0
    %v1640 = vadd.f32 %v1586, %v1639
    %v1641 = vpop.f32.mrb[0].mxu0
    %v1642 = vpop.f32.mrb[0].mxu0
    %v1643 = vadd.f32 %v1586, %v1642
    %v1644 = vpop.f32.mrb[0].mxu0
    %1645 = vmatprep.mubr.bf16.mxu0 0
    %1646 = vmatmul.mubr.bf16.gmra.mrb[0].mxu0 %v1603
    %v1647 = vpop.f32.mrb[0].mxu0
    %v1648 = vadd.f32 %v1586, %v1647
    %v1649 = vpop.f32.mrb[0].mxu0
    %v1650 = vpop.f32.mrb[0].mxu0
    %v1651 = vpop.f32.mrb[0].mxu0
    %1652 = vdwg.mxu0
    %v1653 = vmax.f32 %v1640, 0.0
    %v1654 = vmax.f32 %v1643, 0.0
    %v1655 = vmax.f32 %v1648, 0.0
    %v1656 = vpack.c.bf16 %v1654, %v1653
    %v1657 = vpack.c.bf16 %v1655, %v1655
    %v1658 = vld [vmem:[%s4] sm:$0xf]
    %v1659 = vld [vmem:[%s4 + $0x4] sm:$0xf]
    %v1660 = vld [vmem:[%s4 + $0x8] sm:$0xf]
    %v1661 = vld [vmem:[%s4 + $0xc] sm:$0xf]
    %v1662 = vld [vmem:[%s4 + $0x10] sm:$0xf]
    %v1663 = vld [vmem:[%s4 + $0x14] sm:$0xf]
    %v1664 = vld [vmem:[%s4 + $0x18] sm:$0xf]
    %v1665 = vld [vmem:[%s4 + $0x1c] sm:$0xf]
    %v1666 = vlaneseq
    %v1667 = vshrl.u32 %v1666, 7
    %v1668 = vsub.s32 3, %v1667
    %v1669 = vrot.slane %v34, %v1668
    %v1678 = vunpack.c.l.b16 %v1658
    %v1679 = vunpack.c.l.b16 %v1659
    %v1680 = vunpack.c.l.b16 %v1660
    %v1681 = vunpack.c.l.b16 %v1661
    %v1682 = vunpack.c.l.b16 %v1662
    %v1683 = vunpack.c.l.b16 %v1663
    %v1684 = vunpack.c.l.b16 %v1664
    %v1685 = vunpack.c.l.b16 %v1665
    %v1686 = vpack.c.b16 %v1679, %v1678
    %v1687 = vpack.c.b16 %v1681, %v1680
    %v1688 = vpack.c.b16 %v1683, %v1682
    %v1689 = vpack.c.b16 %v1685, %v1684
    %vm1694 = vcmask 523264
    %v1696 = vsel %vm1694, %v1656, 0
    %v1699 = vsel %vm1694, %v1657, 0
    %1701 = vmatprep.subr.bf16.mxu0 0
    %1702 = vmatpush1.bf16.msra.mxu0 %v1686
    %1703 = vmatprep.subr.bf16.mxu0 0
    %1704 = vmatpush1.bf16.msra.mxu0 %v1687
    %1705 = vmatprep.subr.bf16.mxu0 0
    %1706 = vmatpush1.bf16.msra.mxu0 %v1688
    %1707 = vmatprep.subr.bf16.mxu0 0
    %1708 = vmatpush1.bf16.msra.mxu0 %v1689
    %1709 = vmatprep.subr.bf16.mxu0 0
    %1710 = vmatpush1.bf16.msra.mxu0 0
    %1711 = vmatprep.subr.bf16.mxu0 0
    %1712 = vmatpush1.bf16.msra.mxu0 0
    %1713 = vmatprep.subr.bf16.mxu0 0
    %1714 = vmatpush1.bf16.msra.mxu0 0
    %1715 = vmatprep.subr.bf16.mxu0 0
    %1716 = vmatpush1.bf16.msra.mxu0 0
    %1717 = vmatprep.subr.bf16.mxu0 0
    %1718 = vmatpush1.bf16.msra.mxu0 0
    %1719 = vmatprep.subr.bf16.mxu0 0
    %1720 = vmatpush1.bf16.msra.mxu0 0
    %1721 = vmatprep.subr.bf16.mxu0 0
    %1722 = vmatpush1.bf16.msra.mxu0 0
    %1723 = vmatprep.subr.bf16.mxu0 0
    %1724 = vmatpush1.bf16.msra.mxu0 0
    %1725 = vmatprep.subr.bf16.mxu0 0
    %1726 = vmatpush1.bf16.msra.mxu0 0
    %1727 = vmatprep.subr.bf16.mxu0 0
    %1728 = vmatpush1.bf16.msra.mxu0 0
    %1729 = vmatprep.subr.bf16.mxu0 0
    %1730 = vmatpush1.bf16.msra.mxu0 0
    %1731 = vmatprep.subr.bf16.mxu0 0
    %1732 = vmatpush1.bf16.msra.mxu0 0
    %1733 = vmatprep.mubr.bf16.mxu0 0
    %1734 = vmatmul.mubr.bf16.gmra.mrb[0].mxu0 %v1696
    %v1735 = vpop.f32.mrb[0].mxu0
    %v1736 = vadd.f32 %v1669, %v1735
    %v1737 = vpop.f32.mrb[0].mxu0
    %v1738 = vpop.f32.mrb[0].mxu0
    %v1739 = vadd.f32 %v1669, %v1738
    %v1740 = vpop.f32.mrb[0].mxu0
    %1741 = vmatprep.mubr.bf16.mxu0 0
    %1742 = vmatmul.mubr.bf16.gmra.mrb[0].mxu0 %v1699
    %v1743 = vpop.f32.mrb[0].mxu0
    %v1744 = vadd.f32 %v1669, %v1743
    %v1745 = vpop.f32.mrb[0].mxu0
    %v1746 = vpop.f32.mrb[0].mxu0
    %v1747 = vpop.f32.mrb[0].mxu0
    %1748 = vdwg.mxu0
    %v1749 = vadd.f32 %v1574, %v1736
    %v1750 = vadd.f32 %v1575, %v1739
    %v1751 = vadd.f32 %v1576, %v1744
    %v1752 = vsel %vm61, %v1749, 0.0
    %1753 = vadd.xlane.f32.xlu0 %v1752
    %v1754 = vpop.xlane.xlu0 %1753
    %v1755 = vsel %vm61, %v1750, 0.0
    %1756 = vadd.xlane.f32.xlu0 %v1755
    %v1757 = vpop.xlane.xlu0 %1756
    %v1758 = vsel %vm1528, %v1751, 0.0
    %1759 = vadd.xlane.f32.xlu0 %v1758
    %v1760 = vpop.xlane.xlu0 %1759
    %v1761 = vmul.f32 %v1754, %v1532
    %v1762 = vmul.f32 %v1757, %v1532
    %v1763 = vmul.f32 %v1760, %v1532
    %v1764 = vsub.f32 %v1749, %v1761
    %v1765 = vsub.f32 %v1750, %v1762
    %v1766 = vsub.f32 %v1751, %v1763
    %v1767 = vmul.f32 %v1764, %v1764
    %v1768 = vmul.f32 %v1765, %v1765
    %v1769 = vmul.f32 %v1766, %v1766
    %v1770 = vsel %vm61, %v1767, 0.0
    %1771 = vadd.xlane.f32.xlu0 %v1770
    %v1772 = vpop.xlane.xlu0 %1771
    %v1773 = vsel %vm61, %v1768, 0.0
    %1774 = vadd.xlane.f32.xlu0 %v1773
    %v1775 = vpop.xlane.xlu0 %1774
    %v1776 = vsel %vm1528, %v1769, 0.0
    %1777 = vadd.xlane.f32.xlu0 %v1776
    %v1778 = vpop.xlane.xlu0 %1777
    %v1779 = vmul.f32 %v1772, %v1532
    %v1780 = vmul.f32 %v1775, %v1532
    %v1781 = vmul.f32 %v1778, %v1532
    %v1782 = vadd.f32 %v1779, 1e-05
    %v1783 = vadd.f32 %v1780, 1e-05
    %v1784 = vadd.f32 %v1781, 1e-05
    %v1785 = vrsqrt.pop %v1782
    %v1786 = vrsqrt.pop %v1783
    %v1787 = vrsqrt.pop %v1784
    %v1788 = vmul.f32 %v1764, %v1785
    %v1789 = vmul.f32 %v1765, %v1786
    %v1790 = vmul.f32 %v1766, %v1787
    %v1791 = vlaneseq
    %v1792 = vshrl.u32 %v1791, 7
    %v1793 = vsub.s32 6, %v1792
    %v1794 = vrot.slane %v34, %v1793
    %v1795 = vmul.f32 %v1788, %v1794
    %v1796 = vmul.f32 %v1789, %v1794
    %v1797 = vmul.f32 %v1790, %v1794
    %v1798 = vlaneseq
    %v1799 = vshrl.u32 %v1798, 7
    %v1800 = vsub.s32 7, %v1799
    %v1801 = vrot.slane %v34, %v1800
    %v1802 = vadd.f32 %v1795, %v1801
    %v1803 = vadd.f32 %v1796, %v1801
    %v1804 = vadd.f32 %v1797, %v1801
    %s1805 = scalar_lea.vmem %s6, 8
    %v1806 = vld [vmem:[%s1805] sm:$0xff]
    %s1807 = scalar_lea.vmem %s2, 16
    %v1808 = vld [vmem:[%s1807] sm:$0xf]
    %v1809 = vld [vmem:[%s1807 + $0x4] sm:$0xf]
    %v1810 = vld [vmem:[%s1807 + $0x8] sm:$0xf]
    %v1811 = vld [vmem:[%s1807 + $0xc] sm:$0xf]
    %v1812 = vpack.c.bf16 %v1803, %v1802
    %v1813 = vpack.c.bf16 %v1804, %v1804
    %s1814 = scalar_lea.vmem %s1, 16
    %v1815 = vld [vmem:[%s1814] sm:$0xf]
    %v1816 = vld [vmem:[%s1814 + $0x4] sm:$0xf]
    %v1817 = vld [vmem:[%s1814 + $0x8] sm:$0xf]
    %v1818 = vld [vmem:[%s1814 + $0xc] sm:$0xf]
    %v1819 = vlaneseq
    %v1820 = vshrl.u32 %v1819, 7
    %v1821 = vsub.s32 0, %v1820
    %v1822 = vrot.slane %v1806, %v1821
    %v1827 = vunpack.c.l.b16 %v1815
    %v1828 = vunpack.c.l.b16 %v1816
    %v1829 = vunpack.c.l.b16 %v1817
    %v1830 = vunpack.c.l.b16 %v1818
    %v1831 = vpack.c.b16 %v1828, %v1827
    %v1832 = vpack.c.b16 %v1830, %v1829
    %v1836 = vsel %vm61, %v1812, 0
    %v1839 = vsel %vm61, %v1813, 0
    %1841 = vmatprep.subr.bf16.mxu0 0
    %1842 = vmatpush1.bf16.msra.mxu0 %v1831
    %1843 = vmatprep.subr.bf16.mxu0 0
    %1844 = vmatpush1.bf16.msra.mxu0 %v1832
    %1845 = vmatprep.subr.bf16.mxu0 0
    %1846 = vmatpush1.bf16.msra.mxu0 0
    %1847 = vmatprep.subr.bf16.mxu0 0
    %1848 = vmatpush1.bf16.msra.mxu0 0
    %1849 = vmatprep.subr.bf16.mxu0 0
    %1850 = vmatpush1.bf16.msra.mxu0 0
    %1851 = vmatprep.subr.bf16.mxu0 0
    %1852 = vmatpush1.bf16.msra.mxu0 0
    %1853 = vmatprep.subr.bf16.mxu0 0
    %1854 = vmatpush1.bf16.msra.mxu0 0
    %1855 = vmatprep.subr.bf16.mxu0 0
    %1856 = vmatpush1.bf16.msra.mxu0 0
    %1857 = vmatprep.subr.bf16.mxu0 0
    %1858 = vmatpush1.bf16.msra.mxu0 0
    %1859 = vmatprep.subr.bf16.mxu0 0
    %1860 = vmatpush1.bf16.msra.mxu0 0
    %1861 = vmatprep.subr.bf16.mxu0 0
    %1862 = vmatpush1.bf16.msra.mxu0 0
    %1863 = vmatprep.subr.bf16.mxu0 0
    %1864 = vmatpush1.bf16.msra.mxu0 0
    %1865 = vmatprep.subr.bf16.mxu0 0
    %1866 = vmatpush1.bf16.msra.mxu0 0
    %1867 = vmatprep.subr.bf16.mxu0 0
    %1868 = vmatpush1.bf16.msra.mxu0 0
    %1869 = vmatprep.subr.bf16.mxu0 0
    %1870 = vmatpush1.bf16.msra.mxu0 0
    %1871 = vmatprep.subr.bf16.mxu0 0
    %1872 = vmatpush1.bf16.msra.mxu0 0
    %1873 = vmatprep.mubr.bf16.mxu0 0
    %1874 = vmatmul.mubr.bf16.gmra.mrb[0].mxu0 %v1836
    %v1875 = vpop.f32.mrb[0].mxu0
    %v1876 = vadd.f32 %v1822, %v1875
    %v1877 = vpop.f32.mrb[0].mxu0
    %v1878 = vpop.f32.mrb[0].mxu0
    %v1879 = vadd.f32 %v1822, %v1878
    %v1880 = vpop.f32.mrb[0].mxu0
    %1881 = vmatprep.mubr.bf16.mxu0 0
    %1882 = vmatmul.mubr.bf16.gmra.mrb[0].mxu0 %v1839
    %v1883 = vpop.f32.mrb[0].mxu0
    %v1884 = vadd.f32 %v1822, %v1883
    %v1885 = vpop.f32.mrb[0].mxu0
    %v1886 = vpop.f32.mrb[0].mxu0
    %v1887 = vpop.f32.mrb[0].mxu0
    %1888 = vdwg.mxu0
    %v1889 = vpack.c.bf16 %v1879, %v1876
    %v1890 = vpack.c.bf16 %v1884, %v1884
    %1892 = vrot.lane.b32.xlu0 %v1889, 96
    %v1893 = vpop.permute.xlu0 %1892
    %v1895 = vsel %vm121, %v1889, 0
    %v1898 = vsel %vm121, %v1893, 0
    %1900 = vmatprep.subr.bf16.mxu0 0
    %1901 = vmatpush1.bf16.xpose.msra.mxu0 %v1898
    %1902 = vmatprep.subr.bf16.mxu0 0
    %1903 = vmatpush1.bf16.xpose.msra.mxu0 0
    %1904 = vmatprep.subr.bf16.mxu0 0
    %1905 = vmatpush1.bf16.xpose.msra.mxu0 0
    %1906 = vmatprep.subr.bf16.mxu0 0
    %1907 = vmatpush1.bf16.xpose.msra.mxu0 0
    %1908 = vmatprep.subr.bf16.mxu0 0
    %1909 = vmatpush1.bf16.xpose.msra.mxu0 0
    %1910 = vmatprep.subr.bf16.mxu0 0
    %1911 = vmatpush1.bf16.xpose.msra.mxu0 0
    %1912 = vmatprep.subr.bf16.mxu0 0
    %1913 = vmatpush1.bf16.xpose.msra.mxu0 0
    %1914 = vmatprep.subr.bf16.mxu0 0
    %1915 = vmatpush1.bf16.xpose.msra.mxu0 0
    %1916 = vmatprep.subr.bf16.mxu0 0
    %1917 = vmatpush1.bf16.xpose.msra.mxu0 0
    %1918 = vmatprep.subr.bf16.mxu0 0
    %1919 = vmatpush1.bf16.xpose.msra.mxu0 0
    %1920 = vmatprep.subr.bf16.mxu0 0
    %1921 = vmatpush1.bf16.xpose.msra.mxu0 0
    %1922 = vmatprep.subr.bf16.mxu0 0
    %1923 = vmatpush1.bf16.xpose.msra.mxu0 0
    %1924 = vmatprep.subr.bf16.mxu0 0
    %1925 = vmatpush1.bf16.xpose.msra.mxu0 0
    %1926 = vmatprep.subr.bf16.mxu0 0
    %1927 = vmatpush1.bf16.xpose.msra.mxu0 0
    %1928 = vmatprep.subr.bf16.mxu0 0
    %1929 = vmatpush1.bf16.xpose.msra.mxu0 0
    %1930 = vmatprep.subr.bf16.mxu0 0
    %1931 = vmatpush1.bf16.xpose.msra.mxu0 0
    %1932 = vmatprep.mubr.bf16.mxu0 0
    %1933 = vmatmul.mubr.bf16.gmra.mrb[0].mxu0 %v1895
    %v1934 = vpop.f32.mrb[0].mxu0
    %v1935 = vadd.f32 0.0, %v1934
    %v1936 = vpop.f32.mrb[0].mxu0
    %v1937 = vpop.f32.mrb[0].mxu0
    %v1938 = vadd.f32 0.0, %v1937
    %v1939 = vpop.f32.mrb[0].mxu0
    %1940 = vdwg.mxu0
    %v1941 = vsel %vm169, %v1935, -inf
    %1942 = vmax.xlane.f32.xlu0 %v1941
    %v1943 = vpop.xlane.xlu0 %1942
    %v1944 = vsel %vm173, %v1938, -inf
    %1945 = vmax.xlane.f32.xlu0 %v1944
    %v1946 = vpop.xlane.xlu0 %1945
    %v1947 = vsub.f32 %v1935, %v1943
    %v1948 = vsub.f32 %v1938, %v1946
    %v1949 = vmul.f32 %v1947, 1.442695
    %v1950 = vpow.pop %v1949
    %v1951 = vmul.f32 %v1948, 1.442695
    %v1952 = vpow.pop %v1951
    %v1953 = vsel %vm169, %v1950, 0.0
    %1954 = vadd.xlane.f32.xlu0 %v1953
    %v1955 = vpop.xlane.xlu0 %1954
    %v1956 = vsel %vm173, %v1952, 0.0
    %1957 = vadd.xlane.f32.xlu0 %v1956
    %v1958 = vpop.xlane.xlu0 %1957
    %v1959 = vrcp.pop %v1955
    %v1960 = vrcp.pop %v1958
    %v1961 = vmul.f32 %v1950, %v1959
    %v1962 = vmul.f32 %v1952, %v1960
    %v1963 = vpack.c.bf16 %v1962, %v1961
    %1964 = vrot.lane.b32.xlu0 %v1889, 64
    %v1965 = vpop.permute.xlu0 %1964
    %v1967 = vsel %vm169, %v1963, 0
    %v1970 = vand.u32 %v1965, %v202
    %1972 = vmatprep.subr.bf16.mxu0 0
    %1973 = vmatpush1.bf16.msra.mxu0 %v1970
    %1974 = vmatprep.subr.bf16.mxu0 0
    %1975 = vmatpush1.bf16.msra.mxu0 0
    %1976 = vmatprep.subr.bf16.mxu0 0
    %1977 = vmatpush1.bf16.msra.mxu0 0
    %1978 = vmatprep.subr.bf16.mxu0 0
    %1979 = vmatpush1.bf16.msra.mxu0 0
    %1980 = vmatprep.subr.bf16.mxu0 0
    %1981 = vmatpush1.bf16.msra.mxu0 0
    %1982 = vmatprep.subr.bf16.mxu0 0
    %1983 = vmatpush1.bf16.msra.mxu0 0
    %1984 = vmatprep.subr.bf16.mxu0 0
    %1985 = vmatpush1.bf16.msra.mxu0 0
    %1986 = vmatprep.subr.bf16.mxu0 0
    %1987 = vmatpush1.bf16.msra.mxu0 0
    %1988 = vmatprep.subr.bf16.mxu0 0
    %1989 = vmatpush1.bf16.msra.mxu0 0
    %1990 = vmatprep.subr.bf16.mxu0 0
    %1991 = vmatpush1.bf16.msra.mxu0 0
    %1992 = vmatprep.subr.bf16.mxu0 0
    %1993 = vmatpush1.bf16.msra.mxu0 0
    %1994 = vmatprep.subr.bf16.mxu0 0
    %1995 = vmatpush1.bf16.msra.mxu0 0
    %1996 = vmatprep.subr.bf16.mxu0 0
    %1997 = vmatpush1.bf16.msra.mxu0 0
    %1998 = vmatprep.subr.bf16.mxu0 0
    %1999 = vmatpush1.bf16.msra.mxu0 0
    %2000 = vmatprep.subr.bf16.mxu0 0
    %2001 = vmatpush1.bf16.msra.mxu0 0
    %2002 = vmatprep.subr.bf16.mxu0 0
    %2003 = vmatpush1.bf16.msra.mxu0 0
    %2004 = vmatprep.mubr.bf16.mxu0 0
    %2005 = vmatmul.mubr.bf16.gmra.mrb[0].mxu0 %v1967
    %v2006 = vpop.f32.mrb[0].mxu0
    %v2007 = vadd.f32 0.0, %v2006
    %v2008 = vpop.f32.mrb[0].mxu0
    %v2009 = vpop.f32.mrb[0].mxu0
    %v2010 = vadd.f32 0.0, %v2009
    %v2011 = vpop.f32.mrb[0].mxu0
    %2012 = vdwg.mxu0
    %v2013 = vpack.c.bf16 %v2010, %v2007
    %2014 = vrot.lane.b32.xlu0 %v1889, 120
    %v2015 = vpop.permute.xlu0 %2014
    %2016 = vrot.lane.b32.xlu0 %v1889, 88
    %v2017 = vpop.permute.xlu0 %2016
    %v2019 = vsel %vm121, %v2015, 0
    %v2022 = vsel %vm121, %v2017, 0
    %2024 = vmatprep.subr.bf16.mxu0 0
    %2025 = vmatpush1.bf16.xpose.msra.mxu0 %v2022
    %2026 = vmatprep.subr.bf16.mxu0 0
    %2027 = vmatpush1.bf16.xpose.msra.mxu0 0
    %2028 = vmatprep.subr.bf16.mxu0 0
    %2029 = vmatpush1.bf16.xpose.msra.mxu0 0
    %2030 = vmatprep.subr.bf16.mxu0 0
    %2031 = vmatpush1.bf16.xpose.msra.mxu0 0
    %2032 = vmatprep.subr.bf16.mxu0 0
    %2033 = vmatpush1.bf16.xpose.msra.mxu0 0
    %2034 = vmatprep.subr.bf16.mxu0 0
    %2035 = vmatpush1.bf16.xpose.msra.mxu0 0
    %2036 = vmatprep.subr.bf16.mxu0 0
    %2037 = vmatpush1.bf16.xpose.msra.mxu0 0
    %2038 = vmatprep.subr.bf16.mxu0 0
    %2039 = vmatpush1.bf16.xpose.msra.mxu0 0
    %2040 = vmatprep.subr.bf16.mxu0 0
    %2041 = vmatpush1.bf16.xpose.msra.mxu0 0
    %2042 = vmatprep.subr.bf16.mxu0 0
    %2043 = vmatpush1.bf16.xpose.msra.mxu0 0
    %2044 = vmatprep.subr.bf16.mxu0 0
    %2045 = vmatpush1.bf16.xpose.msra.mxu0 0
    %2046 = vmatprep.subr.bf16.mxu0 0
    %2047 = vmatpush1.bf16.xpose.msra.mxu0 0
    %2048 = vmatprep.subr.bf16.mxu0 0
    %2049 = vmatpush1.bf16.xpose.msra.mxu0 0
    %2050 = vmatprep.subr.bf16.mxu0 0
    %2051 = vmatpush1.bf16.xpose.msra.mxu0 0
    %2052 = vmatprep.subr.bf16.mxu0 0
    %2053 = vmatpush1.bf16.xpose.msra.mxu0 0
    %2054 = vmatprep.subr.bf16.mxu0 0
    %2055 = vmatpush1.bf16.xpose.msra.mxu0 0
    %2056 = vmatprep.mubr.bf16.mxu0 0
    %2057 = vmatmul.mubr.bf16.gmra.mrb[0].mxu0 %v2019
    %v2058 = vpop.f32.mrb[0].mxu0
    %v2059 = vadd.f32 0.0, %v2058
    %v2060 = vpop.f32.mrb[0].mxu0
    %v2061 = vpop.f32.mrb[0].mxu0
    %v2062 = vadd.f32 0.0, %v2061
    %v2063 = vpop.f32.mrb[0].mxu0
    %2064 = vdwg.mxu0
    %v2065 = vsel %vm169, %v2059, -inf
    %2066 = vmax.xlane.f32.xlu0 %v2065
    %v2067 = vpop.xlane.xlu0 %2066
    %v2068 = vsel %vm173, %v2062, -inf
    %2069 = vmax.xlane.f32.xlu0 %v2068
    %v2070 = vpop.xlane.xlu0 %2069
    %v2071 = vsub.f32 %v2059, %v2067
    %v2072 = vsub.f32 %v2062, %v2070
    %v2073 = vmul.f32 %v2071, 1.442695
    %v2074 = vpow.pop %v2073
    %v2075 = vmul.f32 %v2072, 1.442695
    %v2076 = vpow.pop %v2075
    %v2077 = vsel %vm169, %v2074, 0.0
    %2078 = vadd.xlane.f32.xlu0 %v2077
    %v2079 = vpop.xlane.xlu0 %2078
    %v2080 = vsel %vm173, %v2076, 0.0
    %2081 = vadd.xlane.f32.xlu0 %v2080
    %v2082 = vpop.xlane.xlu0 %2081
    %v2083 = vrcp.pop %v2079
    %v2084 = vrcp.pop %v2082
    %v2085 = vmul.f32 %v2074, %v2083
    %v2086 = vmul.f32 %v2076, %v2084
    %v2087 = vpack.c.bf16 %v2086, %v2085
    %2088 = vrot.lane.b32.xlu0 %v1889, 56
    %v2089 = vpop.permute.xlu0 %2088
    %v2091 = vsel %vm169, %v2087, 0
    %v2094 = vand.u32 %v2089, %v202
    %2096 = vmatprep.subr.bf16.mxu0 0
    %2097 = vmatpush1.bf16.msra.mxu0 %v2094
    %2098 = vmatprep.subr.bf16.mxu0 0
    %2099 = vmatpush1.bf16.msra.mxu0 0
    %2100 = vmatprep.subr.bf16.mxu0 0
    %2101 = vmatpush1.bf16.msra.mxu0 0
    %2102 = vmatprep.subr.bf16.mxu0 0
    %2103 = vmatpush1.bf16.msra.mxu0 0
    %2104 = vmatprep.subr.bf16.mxu0 0
    %2105 = vmatpush1.bf16.msra.mxu0 0
    %2106 = vmatprep.subr.bf16.mxu0 0
    %2107 = vmatpush1.bf16.msra.mxu0 0
    %2108 = vmatprep.subr.bf16.mxu0 0
    %2109 = vmatpush1.bf16.msra.mxu0 0
    %2110 = vmatprep.subr.bf16.mxu0 0
    %2111 = vmatpush1.bf16.msra.mxu0 0
    %2112 = vmatprep.subr.bf16.mxu0 0
    %2113 = vmatpush1.bf16.msra.mxu0 0
    %2114 = vmatprep.subr.bf16.mxu0 0
    %2115 = vmatpush1.bf16.msra.mxu0 0
    %2116 = vmatprep.subr.bf16.mxu0 0
    %2117 = vmatpush1.bf16.msra.mxu0 0
    %2118 = vmatprep.subr.bf16.mxu0 0
    %2119 = vmatpush1.bf16.msra.mxu0 0
    %2120 = vmatprep.subr.bf16.mxu0 0
    %2121 = vmatpush1.bf16.msra.mxu0 0
    %2122 = vmatprep.subr.bf16.mxu0 0
    %2123 = vmatpush1.bf16.msra.mxu0 0
    %2124 = vmatprep.subr.bf16.mxu0 0
    %2125 = vmatpush1.bf16.msra.mxu0 0
    %2126 = vmatprep.subr.bf16.mxu0 0
    %2127 = vmatpush1.bf16.msra.mxu0 0
    %2128 = vmatprep.mubr.bf16.mxu0 0
    %2129 = vmatmul.mubr.bf16.gmra.mrb[0].mxu0 %v2091
    %v2130 = vpop.f32.mrb[0].mxu0
    %v2131 = vadd.f32 0.0, %v2130
    %v2132 = vpop.f32.mrb[0].mxu0
    %v2133 = vpop.f32.mrb[0].mxu0
    %v2134 = vadd.f32 0.0, %v2133
    %v2135 = vpop.f32.mrb[0].mxu0
    %2136 = vdwg.mxu0
    %v2137 = vpack.c.bf16 %v2134, %v2131
    %v2139 = vsel %vm121, %v2137, 0
    %v2142 = vsel %vm199, %v1809, 0
    %2144 = vmatprep.subr.bf16.mxu0 0
    %2145 = vmatpush1.bf16.msra.mxu0 %v2142
    %2146 = vmatprep.subr.bf16.mxu0 0
    %2147 = vmatpush1.bf16.msra.mxu0 0
    %2148 = vmatprep.subr.bf16.mxu0 0
    %2149 = vmatpush1.bf16.msra.mxu0 0
    %2150 = vmatprep.subr.bf16.mxu0 0
    %2151 = vmatpush1.bf16.msra.mxu0 0
    %2152 = vmatprep.subr.bf16.mxu0 0
    %2153 = vmatpush1.bf16.msra.mxu0 0
    %2154 = vmatprep.subr.bf16.mxu0 0
    %2155 = vmatpush1.bf16.msra.mxu0 0
    %2156 = vmatprep.subr.bf16.mxu0 0
    %2157 = vmatpush1.bf16.msra.mxu0 0
    %2158 = vmatprep.subr.bf16.mxu0 0
    %2159 = vmatpush1.bf16.msra.mxu0 0
    %2160 = vmatprep.subr.bf16.mxu0 0
    %2161 = vmatpush1.bf16.msra.mxu0 0
    %2162 = vmatprep.subr.bf16.mxu0 0
    %2163 = vmatpush1.bf16.msra.mxu0 0
    %2164 = vmatprep.subr.bf16.mxu0 0
    %2165 = vmatpush1.bf16.msra.mxu0 0
    %2166 = vmatprep.subr.bf16.mxu0 0
    %2167 = vmatpush1.bf16.msra.mxu0 0
    %2168 = vmatprep.subr.bf16.mxu0 0
    %2169 = vmatpush1.bf16.msra.mxu0 0
    %2170 = vmatprep.subr.bf16.mxu0 0
    %2171 = vmatpush1.bf16.msra.mxu0 0
    %2172 = vmatprep.subr.bf16.mxu0 0
    %2173 = vmatpush1.bf16.msra.mxu0 0
    %2174 = vmatprep.subr.bf16.mxu0 0
    %2175 = vmatpush1.bf16.msra.mxu0 0
    %2176 = vmatprep.mubr.bf16.mxu0 0
    %2177 = vmatmul.mubr.bf16.gmra.mrb[0].mxu0 %v2139
    %v2178 = vpop.f32.mrb[0].mxu0
    %v2179 = vadd.f32 0.0, %v2178
    %v2180 = vpop.f32.mrb[0].mxu0
    %v2181 = vpop.f32.mrb[0].mxu0
    %v2182 = vadd.f32 0.0, %v2181
    %v2183 = vpop.f32.mrb[0].mxu0
    %2184 = vdwg.mxu0
    %v2186 = vsel %vm121, %v2013, 0
    %v2189 = vsel %vm199, %v1808, 0
    %2191 = vmatprep.subr.bf16.mxu0 0
    %2192 = vmatpush1.bf16.msra.mxu0 %v2189
    %2193 = vmatprep.subr.bf16.mxu0 0
    %2194 = vmatpush1.bf16.msra.mxu0 0
    %2195 = vmatprep.subr.bf16.mxu0 0
    %2196 = vmatpush1.bf16.msra.mxu0 0
    %2197 = vmatprep.subr.bf16.mxu0 0
    %2198 = vmatpush1.bf16.msra.mxu0 0
    %2199 = vmatprep.subr.bf16.mxu0 0
    %2200 = vmatpush1.bf16.msra.mxu0 0
    %2201 = vmatprep.subr.bf16.mxu0 0
    %2202 = vmatpush1.bf16.msra.mxu0 0
    %2203 = vmatprep.subr.bf16.mxu0 0
    %2204 = vmatpush1.bf16.msra.mxu0 0
    %2205 = vmatprep.subr.bf16.mxu0 0
    %2206 = vmatpush1.bf16.msra.mxu0 0
    %2207 = vmatprep.subr.bf16.mxu0 0
    %2208 = vmatpush1.bf16.msra.mxu0 0
    %2209 = vmatprep.subr.bf16.mxu0 0
    %2210 = vmatpush1.bf16.msra.mxu0 0
    %2211 = vmatprep.subr.bf16.mxu0 0
    %2212 = vmatpush1.bf16.msra.mxu0 0
    %2213 = vmatprep.subr.bf16.mxu0 0
    %2214 = vmatpush1.bf16.msra.mxu0 0
    %2215 = vmatprep.subr.bf16.mxu0 0
    %2216 = vmatpush1.bf16.msra.mxu0 0
    %2217 = vmatprep.subr.bf16.mxu0 0
    %2218 = vmatpush1.bf16.msra.mxu0 0
    %2219 = vmatprep.subr.bf16.mxu0 0
    %2220 = vmatpush1.bf16.msra.mxu0 0
    %2221 = vmatprep.subr.bf16.mxu0 0
    %2222 = vmatpush1.bf16.msra.mxu0 0
    %2223 = vmatprep.mubr.bf16.mxu0 0
    %2224 = vmatmul.mubr.bf16.gmra.mrb[0].mxu0 %v2186
    %v2225 = vpop.f32.mrb[0].mxu0
    %v2226 = vadd.f32 %v2179, %v2225
    %v2227 = vpop.f32.mrb[0].mxu0
    %v2228 = vpop.f32.mrb[0].mxu0
    %v2229 = vadd.f32 %v2182, %v2228
    %v2230 = vpop.f32.mrb[0].mxu0
    %2231 = vdwg.mxu0
    %2232 = vrot.lane.b32.xlu0 %v1889, 112
    %v2233 = vpop.permute.xlu0 %2232
    %2234 = vrot.lane.b32.xlu0 %v1889, 80
    %v2235 = vpop.permute.xlu0 %2234
    %v2237 = vsel %vm121, %v2233, 0
    %v2240 = vsel %vm121, %v2235, 0
    %2242 = vmatprep.subr.bf16.mxu0 0
    %2243 = vmatpush1.bf16.xpose.msra.mxu0 %v2240
    %2244 = vmatprep.subr.bf16.mxu0 0
    %2245 = vmatpush1.bf16.xpose.msra.mxu0 0
    %2246 = vmatprep.subr.bf16.mxu0 0
    %2247 = vmatpush1.bf16.xpose.msra.mxu0 0
    %2248 = vmatprep.subr.bf16.mxu0 0
    %2249 = vmatpush1.bf16.xpose.msra.mxu0 0
    %2250 = vmatprep.subr.bf16.mxu0 0
    %2251 = vmatpush1.bf16.xpose.msra.mxu0 0
    %2252 = vmatprep.subr.bf16.mxu0 0
    %2253 = vmatpush1.bf16.xpose.msra.mxu0 0
    %2254 = vmatprep.subr.bf16.mxu0 0
    %2255 = vmatpush1.bf16.xpose.msra.mxu0 0
    %2256 = vmatprep.subr.bf16.mxu0 0
    %2257 = vmatpush1.bf16.xpose.msra.mxu0 0
    %2258 = vmatprep.subr.bf16.mxu0 0
    %2259 = vmatpush1.bf16.xpose.msra.mxu0 0
    %2260 = vmatprep.subr.bf16.mxu0 0
    %2261 = vmatpush1.bf16.xpose.msra.mxu0 0
    %2262 = vmatprep.subr.bf16.mxu0 0
    %2263 = vmatpush1.bf16.xpose.msra.mxu0 0
    %2264 = vmatprep.subr.bf16.mxu0 0
    %2265 = vmatpush1.bf16.xpose.msra.mxu0 0
    %2266 = vmatprep.subr.bf16.mxu0 0
    %2267 = vmatpush1.bf16.xpose.msra.mxu0 0
    %2268 = vmatprep.subr.bf16.mxu0 0
    %2269 = vmatpush1.bf16.xpose.msra.mxu0 0
    %2270 = vmatprep.subr.bf16.mxu0 0
    %2271 = vmatpush1.bf16.xpose.msra.mxu0 0
    %2272 = vmatprep.subr.bf16.mxu0 0
    %2273 = vmatpush1.bf16.xpose.msra.mxu0 0
    %2274 = vmatprep.mubr.bf16.mxu0 0
    %2275 = vmatmul.mubr.bf16.gmra.mrb[0].mxu0 %v2237
    %v2276 = vpop.f32.mrb[0].mxu0
    %v2277 = vadd.f32 0.0, %v2276
    %v2278 = vpop.f32.mrb[0].mxu0
    %v2279 = vpop.f32.mrb[0].mxu0
    %v2280 = vadd.f32 0.0, %v2279
    %v2281 = vpop.f32.mrb[0].mxu0
    %2282 = vdwg.mxu0
    %v2283 = vsel %vm169, %v2277, -inf
    %2284 = vmax.xlane.f32.xlu0 %v2283
    %v2285 = vpop.xlane.xlu0 %2284
    %v2286 = vsel %vm173, %v2280, -inf
    %2287 = vmax.xlane.f32.xlu0 %v2286
    %v2288 = vpop.xlane.xlu0 %2287
    %v2289 = vsub.f32 %v2277, %v2285
    %v2290 = vsub.f32 %v2280, %v2288
    %v2291 = vmul.f32 %v2289, 1.442695
    %v2292 = vpow.pop %v2291
    %v2293 = vmul.f32 %v2290, 1.442695
    %v2294 = vpow.pop %v2293
    %v2295 = vsel %vm169, %v2292, 0.0
    %2296 = vadd.xlane.f32.xlu0 %v2295
    %v2297 = vpop.xlane.xlu0 %2296
    %v2298 = vsel %vm173, %v2294, 0.0
    %2299 = vadd.xlane.f32.xlu0 %v2298
    %v2300 = vpop.xlane.xlu0 %2299
    %v2301 = vrcp.pop %v2297
    %v2302 = vrcp.pop %v2300
    %v2303 = vmul.f32 %v2292, %v2301
    %v2304 = vmul.f32 %v2294, %v2302
    %v2305 = vpack.c.bf16 %v2304, %v2303
    %2306 = vrot.lane.b32.xlu0 %v1889, 48
    %v2307 = vpop.permute.xlu0 %2306
    %v2309 = vsel %vm169, %v2305, 0
    %v2312 = vand.u32 %v2307, %v202
    %2314 = vmatprep.subr.bf16.mxu0 0
    %2315 = vmatpush1.bf16.msra.mxu0 %v2312
    %2316 = vmatprep.subr.bf16.mxu0 0
    %2317 = vmatpush1.bf16.msra.mxu0 0
    %2318 = vmatprep.subr.bf16.mxu0 0
    %2319 = vmatpush1.bf16.msra.mxu0 0
    %2320 = vmatprep.subr.bf16.mxu0 0
    %2321 = vmatpush1.bf16.msra.mxu0 0
    %2322 = vmatprep.subr.bf16.mxu0 0
    %2323 = vmatpush1.bf16.msra.mxu0 0
    %2324 = vmatprep.subr.bf16.mxu0 0
    %2325 = vmatpush1.bf16.msra.mxu0 0
    %2326 = vmatprep.subr.bf16.mxu0 0
    %2327 = vmatpush1.bf16.msra.mxu0 0
    %2328 = vmatprep.subr.bf16.mxu0 0
    %2329 = vmatpush1.bf16.msra.mxu0 0
    %2330 = vmatprep.subr.bf16.mxu0 0
    %2331 = vmatpush1.bf16.msra.mxu0 0
    %2332 = vmatprep.subr.bf16.mxu0 0
    %2333 = vmatpush1.bf16.msra.mxu0 0
    %2334 = vmatprep.subr.bf16.mxu0 0
    %2335 = vmatpush1.bf16.msra.mxu0 0
    %2336 = vmatprep.subr.bf16.mxu0 0
    %2337 = vmatpush1.bf16.msra.mxu0 0
    %2338 = vmatprep.subr.bf16.mxu0 0
    %2339 = vmatpush1.bf16.msra.mxu0 0
    %2340 = vmatprep.subr.bf16.mxu0 0
    %2341 = vmatpush1.bf16.msra.mxu0 0
    %2342 = vmatprep.subr.bf16.mxu0 0
    %2343 = vmatpush1.bf16.msra.mxu0 0
    %2344 = vmatprep.subr.bf16.mxu0 0
    %2345 = vmatpush1.bf16.msra.mxu0 0
    %2346 = vmatprep.mubr.bf16.mxu0 0
    %2347 = vmatmul.mubr.bf16.gmra.mrb[0].mxu0 %v2309
    %v2348 = vpop.f32.mrb[0].mxu0
    %v2349 = vadd.f32 0.0, %v2348
    %v2350 = vpop.f32.mrb[0].mxu0
    %v2351 = vpop.f32.mrb[0].mxu0
    %v2352 = vadd.f32 0.0, %v2351
    %v2353 = vpop.f32.mrb[0].mxu0
    %2354 = vdwg.mxu0
    %v2355 = vpack.c.bf16 %v2352, %v2349
    %v2357 = vsel %vm121, %v2355, 0
    %v2360 = vsel %vm199, %v1810, 0
    %2362 = vmatprep.subr.bf16.mxu0 0
    %2363 = vmatpush1.bf16.msra.mxu0 %v2360
    %2364 = vmatprep.subr.bf16.mxu0 0
    %2365 = vmatpush1.bf16.msra.mxu0 0
    %2366 = vmatprep.subr.bf16.mxu0 0
    %2367 = vmatpush1.bf16.msra.mxu0 0
    %2368 = vmatprep.subr.bf16.mxu0 0
    %2369 = vmatpush1.bf16.msra.mxu0 0
    %2370 = vmatprep.subr.bf16.mxu0 0
    %2371 = vmatpush1.bf16.msra.mxu0 0
    %2372 = vmatprep.subr.bf16.mxu0 0
    %2373 = vmatpush1.bf16.msra.mxu0 0
    %2374 = vmatprep.subr.bf16.mxu0 0
    %2375 = vmatpush1.bf16.msra.mxu0 0
    %2376 = vmatprep.subr.bf16.mxu0 0
    %2377 = vmatpush1.bf16.msra.mxu0 0
    %2378 = vmatprep.subr.bf16.mxu0 0
    %2379 = vmatpush1.bf16.msra.mxu0 0
    %2380 = vmatprep.subr.bf16.mxu0 0
    %2381 = vmatpush1.bf16.msra.mxu0 0
    %2382 = vmatprep.subr.bf16.mxu0 0
    %2383 = vmatpush1.bf16.msra.mxu0 0
    %2384 = vmatprep.subr.bf16.mxu0 0
    %2385 = vmatpush1.bf16.msra.mxu0 0
    %2386 = vmatprep.subr.bf16.mxu0 0
    %2387 = vmatpush1.bf16.msra.mxu0 0
    %2388 = vmatprep.subr.bf16.mxu0 0
    %2389 = vmatpush1.bf16.msra.mxu0 0
    %2390 = vmatprep.subr.bf16.mxu0 0
    %2391 = vmatpush1.bf16.msra.mxu0 0
    %2392 = vmatprep.subr.bf16.mxu0 0
    %2393 = vmatpush1.bf16.msra.mxu0 0
    %2394 = vmatprep.mubr.bf16.mxu0 0
    %2395 = vmatmul.mubr.bf16.gmra.mrb[0].mxu0 %v2357
    %v2396 = vpop.f32.mrb[0].mxu0
    %v2397 = vadd.f32 0.0, %v2396
    %v2398 = vpop.f32.mrb[0].mxu0
    %v2399 = vpop.f32.mrb[0].mxu0
    %v2400 = vadd.f32 0.0, %v2399
    %v2401 = vpop.f32.mrb[0].mxu0
    %2402 = vdwg.mxu0
    %v2403 = vadd.f32 %v2226, %v2397
    %v2404 = vadd.f32 %v2229, %v2400
    %2405 = vrot.lane.b32.xlu0 %v1889, 104
    %v2406 = vpop.permute.xlu0 %2405
    %2407 = vrot.lane.b32.xlu0 %v1889, 72
    %v2408 = vpop.permute.xlu0 %2407
    %v2410 = vsel %vm121, %v2406, 0
    %v2413 = vsel %vm121, %v2408, 0
    %2415 = vmatprep.subr.bf16.mxu0 0
    %2416 = vmatpush1.bf16.xpose.msra.mxu0 %v2413
    %2417 = vmatprep.subr.bf16.mxu0 0
    %2418 = vmatpush1.bf16.xpose.msra.mxu0 0
    %2419 = vmatprep.subr.bf16.mxu0 0
    %2420 = vmatpush1.bf16.xpose.msra.mxu0 0
    %2421 = vmatprep.subr.bf16.mxu0 0
    %2422 = vmatpush1.bf16.xpose.msra.mxu0 0
    %2423 = vmatprep.subr.bf16.mxu0 0
    %2424 = vmatpush1.bf16.xpose.msra.mxu0 0
    %2425 = vmatprep.subr.bf16.mxu0 0
    %2426 = vmatpush1.bf16.xpose.msra.mxu0 0
    %2427 = vmatprep.subr.bf16.mxu0 0
    %2428 = vmatpush1.bf16.xpose.msra.mxu0 0
    %2429 = vmatprep.subr.bf16.mxu0 0
    %2430 = vmatpush1.bf16.xpose.msra.mxu0 0
    %2431 = vmatprep.subr.bf16.mxu0 0
    %2432 = vmatpush1.bf16.xpose.msra.mxu0 0
    %2433 = vmatprep.subr.bf16.mxu0 0
    %2434 = vmatpush1.bf16.xpose.msra.mxu0 0
    %2435 = vmatprep.subr.bf16.mxu0 0
    %2436 = vmatpush1.bf16.xpose.msra.mxu0 0
    %2437 = vmatprep.subr.bf16.mxu0 0
    %2438 = vmatpush1.bf16.xpose.msra.mxu0 0
    %2439 = vmatprep.subr.bf16.mxu0 0
    %2440 = vmatpush1.bf16.xpose.msra.mxu0 0
    %2441 = vmatprep.subr.bf16.mxu0 0
    %2442 = vmatpush1.bf16.xpose.msra.mxu0 0
    %2443 = vmatprep.subr.bf16.mxu0 0
    %2444 = vmatpush1.bf16.xpose.msra.mxu0 0
    %2445 = vmatprep.subr.bf16.mxu0 0
    %2446 = vmatpush1.bf16.xpose.msra.mxu0 0
    %2447 = vmatprep.mubr.bf16.mxu0 0
    %2448 = vmatmul.mubr.bf16.gmra.mrb[0].mxu0 %v2410
    %v2449 = vpop.f32.mrb[0].mxu0
    %v2450 = vadd.f32 0.0, %v2449
    %v2451 = vpop.f32.mrb[0].mxu0
    %v2452 = vpop.f32.mrb[0].mxu0
    %v2453 = vadd.f32 0.0, %v2452
    %v2454 = vpop.f32.mrb[0].mxu0
    %2455 = vdwg.mxu0
    %v2456 = vsel %vm169, %v2450, -inf
    %2457 = vmax.xlane.f32.xlu0 %v2456
    %v2458 = vpop.xlane.xlu0 %2457
    %v2459 = vsel %vm173, %v2453, -inf
    %2460 = vmax.xlane.f32.xlu0 %v2459
    %v2461 = vpop.xlane.xlu0 %2460
    %v2462 = vsub.f32 %v2450, %v2458
    %v2463 = vsub.f32 %v2453, %v2461
    %v2464 = vmul.f32 %v2462, 1.442695
    %v2465 = vpow.pop %v2464
    %v2466 = vmul.f32 %v2463, 1.442695
    %v2467 = vpow.pop %v2466
    %v2468 = vsel %vm169, %v2465, 0.0
    %2469 = vadd.xlane.f32.xlu0 %v2468
    %v2470 = vpop.xlane.xlu0 %2469
    %v2471 = vsel %vm173, %v2467, 0.0
    %2472 = vadd.xlane.f32.xlu0 %v2471
    %v2473 = vpop.xlane.xlu0 %2472
    %v2474 = vrcp.pop %v2470
    %v2475 = vrcp.pop %v2473
    %v2476 = vmul.f32 %v2465, %v2474
    %v2477 = vmul.f32 %v2467, %v2475
    %v2478 = vpack.c.bf16 %v2477, %v2476
    %2479 = vrot.lane.b32.xlu0 %v1889, 40
    %v2480 = vpop.permute.xlu0 %2479
    %v2482 = vsel %vm169, %v2478, 0
    %v2485 = vand.u32 %v2480, %v202
    %2487 = vmatprep.subr.bf16.mxu0 0
    %2488 = vmatpush1.bf16.msra.mxu0 %v2485
    %2489 = vmatprep.subr.bf16.mxu0 0
    %2490 = vmatpush1.bf16.msra.mxu0 0
    %2491 = vmatprep.subr.bf16.mxu0 0
    %2492 = vmatpush1.bf16.msra.mxu0 0
    %2493 = vmatprep.subr.bf16.mxu0 0
    %2494 = vmatpush1.bf16.msra.mxu0 0
    %2495 = vmatprep.subr.bf16.mxu0 0
    %2496 = vmatpush1.bf16.msra.mxu0 0
    %2497 = vmatprep.subr.bf16.mxu0 0
    %2498 = vmatpush1.bf16.msra.mxu0 0
    %2499 = vmatprep.subr.bf16.mxu0 0
    %2500 = vmatpush1.bf16.msra.mxu0 0
    %2501 = vmatprep.subr.bf16.mxu0 0
    %2502 = vmatpush1.bf16.msra.mxu0 0
    %2503 = vmatprep.subr.bf16.mxu0 0
    %2504 = vmatpush1.bf16.msra.mxu0 0
    %2505 = vmatprep.subr.bf16.mxu0 0
    %2506 = vmatpush1.bf16.msra.mxu0 0
    %2507 = vmatprep.subr.bf16.mxu0 0
    %2508 = vmatpush1.bf16.msra.mxu0 0
    %2509 = vmatprep.subr.bf16.mxu0 0
    %2510 = vmatpush1.bf16.msra.mxu0 0
    %2511 = vmatprep.subr.bf16.mxu0 0
    %2512 = vmatpush1.bf16.msra.mxu0 0
    %2513 = vmatprep.subr.bf16.mxu0 0
    %2514 = vmatpush1.bf16.msra.mxu0 0
    %2515 = vmatprep.subr.bf16.mxu0 0
    %2516 = vmatpush1.bf16.msra.mxu0 0
    %2517 = vmatprep.subr.bf16.mxu0 0
    %2518 = vmatpush1.bf16.msra.mxu0 0
    %2519 = vmatprep.mubr.bf16.mxu0 0
    %2520 = vmatmul.mubr.bf16.gmra.mrb[0].mxu0 %v2482
    %v2521 = vpop.f32.mrb[0].mxu0
    %v2522 = vadd.f32 0.0, %v2521
    %v2523 = vpop.f32.mrb[0].mxu0
    %v2524 = vpop.f32.mrb[0].mxu0
    %v2525 = vadd.f32 0.0, %v2524
    %v2526 = vpop.f32.mrb[0].mxu0
    %2527 = vdwg.mxu0
    %v2528 = vpack.c.bf16 %v2525, %v2522
    %v2530 = vsel %vm121, %v2528, 0
    %v2533 = vsel %vm199, %v1811, 0
    %2535 = vmatprep.subr.bf16.mxu0 0
    %2536 = vmatpush1.bf16.msra.mxu0 %v2533
    %2537 = vmatprep.subr.bf16.mxu0 0
    %2538 = vmatpush1.bf16.msra.mxu0 0
    %2539 = vmatprep.subr.bf16.mxu0 0
    %2540 = vmatpush1.bf16.msra.mxu0 0
    %2541 = vmatprep.subr.bf16.mxu0 0
    %2542 = vmatpush1.bf16.msra.mxu0 0
    %2543 = vmatprep.subr.bf16.mxu0 0
    %2544 = vmatpush1.bf16.msra.mxu0 0
    %2545 = vmatprep.subr.bf16.mxu0 0
    %2546 = vmatpush1.bf16.msra.mxu0 0
    %2547 = vmatprep.subr.bf16.mxu0 0
    %2548 = vmatpush1.bf16.msra.mxu0 0
    %2549 = vmatprep.subr.bf16.mxu0 0
    %2550 = vmatpush1.bf16.msra.mxu0 0
    %2551 = vmatprep.subr.bf16.mxu0 0
    %2552 = vmatpush1.bf16.msra.mxu0 0
    %2553 = vmatprep.subr.bf16.mxu0 0
    %2554 = vmatpush1.bf16.msra.mxu0 0
    %2555 = vmatprep.subr.bf16.mxu0 0
    %2556 = vmatpush1.bf16.msra.mxu0 0
    %2557 = vmatprep.subr.bf16.mxu0 0
    %2558 = vmatpush1.bf16.msra.mxu0 0
    %2559 = vmatprep.subr.bf16.mxu0 0
    %2560 = vmatpush1.bf16.msra.mxu0 0
    %2561 = vmatprep.subr.bf16.mxu0 0
    %2562 = vmatpush1.bf16.msra.mxu0 0
    %2563 = vmatprep.subr.bf16.mxu0 0
    %2564 = vmatpush1.bf16.msra.mxu0 0
    %2565 = vmatprep.subr.bf16.mxu0 0
    %2566 = vmatpush1.bf16.msra.mxu0 0
    %2567 = vmatprep.mubr.bf16.mxu0 0
    %2568 = vmatmul.mubr.bf16.gmra.mrb[0].mxu0 %v2530
    %v2569 = vpop.f32.mrb[0].mxu0
    %v2570 = vadd.f32 0.0, %v2569
    %v2571 = vpop.f32.mrb[0].mxu0
    %v2572 = vpop.f32.mrb[0].mxu0
    %v2573 = vadd.f32 0.0, %v2572
    %v2574 = vpop.f32.mrb[0].mxu0
    %2575 = vdwg.mxu0
    %v2576 = vadd.f32 %v2403, %v2570
    %v2577 = vadd.f32 %v2404, %v2573
    %v2578 = vshrl.u32 %v1889, 16
    %v2580 = vrot.slane %v2578, 4
    %v2581 = vshll.u32 %v1889, 16
    %v2583 = vrot.slane %v2581, 5
    %v2584 = vor.u32 %v2580, %v2583
    %v2586 = vshrl.u32 %v1890, 16
    %v2588 = vrot.slane %v2586, 4
    %v2589 = vshll.u32 %v1890, 16
    %v2591 = vrot.slane %v2589, 5
    %v2592 = vor.u32 %v2588, %v2591
    %v2593 = vsel %vm812, %v2584, %v2592
    %2594 = vrot.lane.b32.xlu0 %v2593, 96
    %v2595 = vpop.permute.xlu0 %2594
    %v2597 = vsel %vm121, %v2593, 0
    %v2600 = vsel %vm121, %v2595, 0
    %2602 = vmatprep.subr.bf16.mxu0 0
    %2603 = vmatpush1.bf16.xpose.msra.mxu0 %v2600
    %2604 = vmatprep.subr.bf16.mxu0 0
    %2605 = vmatpush1.bf16.xpose.msra.mxu0 0
    %2606 = vmatprep.subr.bf16.mxu0 0
    %2607 = vmatpush1.bf16.xpose.msra.mxu0 0
    %2608 = vmatprep.subr.bf16.mxu0 0
    %2609 = vmatpush1.bf16.xpose.msra.mxu0 0
    %2610 = vmatprep.subr.bf16.mxu0 0
    %2611 = vmatpush1.bf16.xpose.msra.mxu0 0
    %2612 = vmatprep.subr.bf16.mxu0 0
    %2613 = vmatpush1.bf16.xpose.msra.mxu0 0
    %2614 = vmatprep.subr.bf16.mxu0 0
    %2615 = vmatpush1.bf16.xpose.msra.mxu0 0
    %2616 = vmatprep.subr.bf16.mxu0 0
    %2617 = vmatpush1.bf16.xpose.msra.mxu0 0
    %2618 = vmatprep.subr.bf16.mxu0 0
    %2619 = vmatpush1.bf16.xpose.msra.mxu0 0
    %2620 = vmatprep.subr.bf16.mxu0 0
    %2621 = vmatpush1.bf16.xpose.msra.mxu0 0
    %2622 = vmatprep.subr.bf16.mxu0 0
    %2623 = vmatpush1.bf16.xpose.msra.mxu0 0
    %2624 = vmatprep.subr.bf16.mxu0 0
    %2625 = vmatpush1.bf16.xpose.msra.mxu0 0
    %2626 = vmatprep.subr.bf16.mxu0 0
    %2627 = vmatpush1.bf16.xpose.msra.mxu0 0
    %2628 = vmatprep.subr.bf16.mxu0 0
    %2629 = vmatpush1.bf16.xpose.msra.mxu0 0
    %2630 = vmatprep.subr.bf16.mxu0 0
    %2631 = vmatpush1.bf16.xpose.msra.mxu0 0
    %2632 = vmatprep.subr.bf16.mxu0 0
    %2633 = vmatpush1.bf16.xpose.msra.mxu0 0
    %2634 = vmatprep.mubr.bf16.mxu0 0
    %2635 = vmatmul.mubr.bf16.gmra.mrb[0].mxu0 %v2597
    %v2636 = vpop.f32.mrb[0].mxu0
    %v2637 = vadd.f32 0.0, %v2636
    %v2638 = vpop.f32.mrb[0].mxu0
    %v2639 = vpop.f32.mrb[0].mxu0
    %v2640 = vadd.f32 0.0, %v2639
    %v2641 = vpop.f32.mrb[0].mxu0
    %2642 = vdwg.mxu0
    %v2643 = vsel %vm169, %v2637, -inf
    %2644 = vmax.xlane.f32.xlu0 %v2643
    %v2645 = vpop.xlane.xlu0 %2644
    %v2646 = vsel %vm173, %v2640, -inf
    %2647 = vmax.xlane.f32.xlu0 %v2646
    %v2648 = vpop.xlane.xlu0 %2647
    %v2649 = vsub.f32 %v2637, %v2645
    %v2650 = vsub.f32 %v2640, %v2648
    %v2651 = vmul.f32 %v2649, 1.442695
    %v2652 = vpow.pop %v2651
    %v2653 = vmul.f32 %v2650, 1.442695
    %v2654 = vpow.pop %v2653
    %v2655 = vsel %vm169, %v2652, 0.0
    %2656 = vadd.xlane.f32.xlu0 %v2655
    %v2657 = vpop.xlane.xlu0 %2656
    %v2658 = vsel %vm173, %v2654, 0.0
    %2659 = vadd.xlane.f32.xlu0 %v2658
    %v2660 = vpop.xlane.xlu0 %2659
    %v2661 = vrcp.pop %v2657
    %v2662 = vrcp.pop %v2660
    %v2663 = vmul.f32 %v2652, %v2661
    %v2664 = vmul.f32 %v2654, %v2662
    %v2665 = vpack.c.bf16 %v2664, %v2663
    %2666 = vrot.lane.b32.xlu0 %v2593, 64
    %v2667 = vpop.permute.xlu0 %2666
    %v2669 = vsel %vm169, %v2665, 0
    %v2672 = vand.u32 %v2667, %v202
    %2674 = vmatprep.subr.bf16.mxu0 0
    %2675 = vmatpush1.bf16.msra.mxu0 %v2672
    %2676 = vmatprep.subr.bf16.mxu0 0
    %2677 = vmatpush1.bf16.msra.mxu0 0
    %2678 = vmatprep.subr.bf16.mxu0 0
    %2679 = vmatpush1.bf16.msra.mxu0 0
    %2680 = vmatprep.subr.bf16.mxu0 0
    %2681 = vmatpush1.bf16.msra.mxu0 0
    %2682 = vmatprep.subr.bf16.mxu0 0
    %2683 = vmatpush1.bf16.msra.mxu0 0
    %2684 = vmatprep.subr.bf16.mxu0 0
    %2685 = vmatpush1.bf16.msra.mxu0 0
    %2686 = vmatprep.subr.bf16.mxu0 0
    %2687 = vmatpush1.bf16.msra.mxu0 0
    %2688 = vmatprep.subr.bf16.mxu0 0
    %2689 = vmatpush1.bf16.msra.mxu0 0
    %2690 = vmatprep.subr.bf16.mxu0 0
    %2691 = vmatpush1.bf16.msra.mxu0 0
    %2692 = vmatprep.subr.bf16.mxu0 0
    %2693 = vmatpush1.bf16.msra.mxu0 0
    %2694 = vmatprep.subr.bf16.mxu0 0
    %2695 = vmatpush1.bf16.msra.mxu0 0
    %2696 = vmatprep.subr.bf16.mxu0 0
    %2697 = vmatpush1.bf16.msra.mxu0 0
    %2698 = vmatprep.subr.bf16.mxu0 0
    %2699 = vmatpush1.bf16.msra.mxu0 0
    %2700 = vmatprep.subr.bf16.mxu0 0
    %2701 = vmatpush1.bf16.msra.mxu0 0
    %2702 = vmatprep.subr.bf16.mxu0 0
    %2703 = vmatpush1.bf16.msra.mxu0 0
    %2704 = vmatprep.subr.bf16.mxu0 0
    %2705 = vmatpush1.bf16.msra.mxu0 0
    %2706 = vmatprep.mubr.bf16.mxu0 0
    %2707 = vmatmul.mubr.bf16.gmra.mrb[0].mxu0 %v2669
    %v2708 = vpop.f32.mrb[0].mxu0
    %v2709 = vadd.f32 0.0, %v2708
    %v2710 = vpop.f32.mrb[0].mxu0
    %v2711 = vpop.f32.mrb[0].mxu0
    %v2712 = vadd.f32 0.0, %v2711
    %v2713 = vpop.f32.mrb[0].mxu0
    %2714 = vdwg.mxu0
    %v2715 = vpack.c.bf16 %v2712, %v2709
    %2716 = vrot.lane.b32.xlu0 %v2593, 120
    %v2717 = vpop.permute.xlu0 %2716
    %2718 = vrot.lane.b32.xlu0 %v2593, 88
    %v2719 = vpop.permute.xlu0 %2718
    %v2721 = vsel %vm121, %v2717, 0
    %v2724 = vsel %vm121, %v2719, 0
    %2726 = vmatprep.subr.bf16.mxu0 0
    %2727 = vmatpush1.bf16.xpose.msra.mxu0 %v2724
    %2728 = vmatprep.subr.bf16.mxu0 0
    %2729 = vmatpush1.bf16.xpose.msra.mxu0 0
    %2730 = vmatprep.subr.bf16.mxu0 0
    %2731 = vmatpush1.bf16.xpose.msra.mxu0 0
    %2732 = vmatprep.subr.bf16.mxu0 0
    %2733 = vmatpush1.bf16.xpose.msra.mxu0 0
    %2734 = vmatprep.subr.bf16.mxu0 0
    %2735 = vmatpush1.bf16.xpose.msra.mxu0 0
    %2736 = vmatprep.subr.bf16.mxu0 0
    %2737 = vmatpush1.bf16.xpose.msra.mxu0 0
    %2738 = vmatprep.subr.bf16.mxu0 0
    %2739 = vmatpush1.bf16.xpose.msra.mxu0 0
    %2740 = vmatprep.subr.bf16.mxu0 0
    %2741 = vmatpush1.bf16.xpose.msra.mxu0 0
    %2742 = vmatprep.subr.bf16.mxu0 0
    %2743 = vmatpush1.bf16.xpose.msra.mxu0 0
    %2744 = vmatprep.subr.bf16.mxu0 0
    %2745 = vmatpush1.bf16.xpose.msra.mxu0 0
    %2746 = vmatprep.subr.bf16.mxu0 0
    %2747 = vmatpush1.bf16.xpose.msra.mxu0 0
    %2748 = vmatprep.subr.bf16.mxu0 0
    %2749 = vmatpush1.bf16.xpose.msra.mxu0 0
    %2750 = vmatprep.subr.bf16.mxu0 0
    %2751 = vmatpush1.bf16.xpose.msra.mxu0 0
    %2752 = vmatprep.subr.bf16.mxu0 0
    %2753 = vmatpush1.bf16.xpose.msra.mxu0 0
    %2754 = vmatprep.subr.bf16.mxu0 0
    %2755 = vmatpush1.bf16.xpose.msra.mxu0 0
    %2756 = vmatprep.subr.bf16.mxu0 0
    %2757 = vmatpush1.bf16.xpose.msra.mxu0 0
    %2758 = vmatprep.mubr.bf16.mxu0 0
    %2759 = vmatmul.mubr.bf16.gmra.mrb[0].mxu0 %v2721
    %v2760 = vpop.f32.mrb[0].mxu0
    %v2761 = vadd.f32 0.0, %v2760
    %v2762 = vpop.f32.mrb[0].mxu0
    %v2763 = vpop.f32.mrb[0].mxu0
    %v2764 = vadd.f32 0.0, %v2763
    %v2765 = vpop.f32.mrb[0].mxu0
    %2766 = vdwg.mxu0
    %v2767 = vsel %vm169, %v2761, -inf
    %2768 = vmax.xlane.f32.xlu0 %v2767
    %v2769 = vpop.xlane.xlu0 %2768
    %v2770 = vsel %vm173, %v2764, -inf
    %2771 = vmax.xlane.f32.xlu0 %v2770
    %v2772 = vpop.xlane.xlu0 %2771
    %v2773 = vsub.f32 %v2761, %v2769
    %v2774 = vsub.f32 %v2764, %v2772
    %v2775 = vmul.f32 %v2773, 1.442695
    %v2776 = vpow.pop %v2775
    %v2777 = vmul.f32 %v2774, 1.442695
    %v2778 = vpow.pop %v2777
    %v2779 = vsel %vm169, %v2776, 0.0
    %2780 = vadd.xlane.f32.xlu0 %v2779
    %v2781 = vpop.xlane.xlu0 %2780
    %v2782 = vsel %vm173, %v2778, 0.0
    %2783 = vadd.xlane.f32.xlu0 %v2782
    %v2784 = vpop.xlane.xlu0 %2783
    %v2785 = vrcp.pop %v2781
    %v2786 = vrcp.pop %v2784
    %v2787 = vmul.f32 %v2776, %v2785
    %v2788 = vmul.f32 %v2778, %v2786
    %v2789 = vpack.c.bf16 %v2788, %v2787
    %2790 = vrot.lane.b32.xlu0 %v2593, 56
    %v2791 = vpop.permute.xlu0 %2790
    %v2793 = vsel %vm169, %v2789, 0
    %v2796 = vand.u32 %v2791, %v202
    %2798 = vmatprep.subr.bf16.mxu0 0
    %2799 = vmatpush1.bf16.msra.mxu0 %v2796
    %2800 = vmatprep.subr.bf16.mxu0 0
    %2801 = vmatpush1.bf16.msra.mxu0 0
    %2802 = vmatprep.subr.bf16.mxu0 0
    %2803 = vmatpush1.bf16.msra.mxu0 0
    %2804 = vmatprep.subr.bf16.mxu0 0
    %2805 = vmatpush1.bf16.msra.mxu0 0
    %2806 = vmatprep.subr.bf16.mxu0 0
    %2807 = vmatpush1.bf16.msra.mxu0 0
    %2808 = vmatprep.subr.bf16.mxu0 0
    %2809 = vmatpush1.bf16.msra.mxu0 0
    %2810 = vmatprep.subr.bf16.mxu0 0
    %2811 = vmatpush1.bf16.msra.mxu0 0
    %2812 = vmatprep.subr.bf16.mxu0 0
    %2813 = vmatpush1.bf16.msra.mxu0 0
    %2814 = vmatprep.subr.bf16.mxu0 0
    %2815 = vmatpush1.bf16.msra.mxu0 0
    %2816 = vmatprep.subr.bf16.mxu0 0
    %2817 = vmatpush1.bf16.msra.mxu0 0
    %2818 = vmatprep.subr.bf16.mxu0 0
    %2819 = vmatpush1.bf16.msra.mxu0 0
    %2820 = vmatprep.subr.bf16.mxu0 0
    %2821 = vmatpush1.bf16.msra.mxu0 0
    %2822 = vmatprep.subr.bf16.mxu0 0
    %2823 = vmatpush1.bf16.msra.mxu0 0
    %2824 = vmatprep.subr.bf16.mxu0 0
    %2825 = vmatpush1.bf16.msra.mxu0 0
    %2826 = vmatprep.subr.bf16.mxu0 0
    %2827 = vmatpush1.bf16.msra.mxu0 0
    %2828 = vmatprep.subr.bf16.mxu0 0
    %2829 = vmatpush1.bf16.msra.mxu0 0
    %2830 = vmatprep.mubr.bf16.mxu0 0
    %2831 = vmatmul.mubr.bf16.gmra.mrb[0].mxu0 %v2793
    %v2832 = vpop.f32.mrb[0].mxu0
    %v2833 = vadd.f32 0.0, %v2832
    %v2834 = vpop.f32.mrb[0].mxu0
    %v2835 = vpop.f32.mrb[0].mxu0
    %v2836 = vadd.f32 0.0, %v2835
    %v2837 = vpop.f32.mrb[0].mxu0
    %2838 = vdwg.mxu0
    %v2839 = vpack.c.bf16 %v2836, %v2833
    %v2841 = vsel %vm121, %v2839, 0
    %2843 = vmatprep.subr.bf16.mxu0 0
    %2844 = vmatpush1.bf16.msra.mxu0 %v2142
    %2845 = vmatprep.subr.bf16.mxu0 0
    %2846 = vmatpush1.bf16.msra.mxu0 0
    %2847 = vmatprep.subr.bf16.mxu0 0
    %2848 = vmatpush1.bf16.msra.mxu0 0
    %2849 = vmatprep.subr.bf16.mxu0 0
    %2850 = vmatpush1.bf16.msra.mxu0 0
    %2851 = vmatprep.subr.bf16.mxu0 0
    %2852 = vmatpush1.bf16.msra.mxu0 0
    %2853 = vmatprep.subr.bf16.mxu0 0
    %2854 = vmatpush1.bf16.msra.mxu0 0
    %2855 = vmatprep.subr.bf16.mxu0 0
    %2856 = vmatpush1.bf16.msra.mxu0 0
    %2857 = vmatprep.subr.bf16.mxu0 0
    %2858 = vmatpush1.bf16.msra.mxu0 0
    %2859 = vmatprep.subr.bf16.mxu0 0
    %2860 = vmatpush1.bf16.msra.mxu0 0
    %2861 = vmatprep.subr.bf16.mxu0 0
    %2862 = vmatpush1.bf16.msra.mxu0 0
    %2863 = vmatprep.subr.bf16.mxu0 0
    %2864 = vmatpush1.bf16.msra.mxu0 0
    %2865 = vmatprep.subr.bf16.mxu0 0
    %2866 = vmatpush1.bf16.msra.mxu0 0
    %2867 = vmatprep.subr.bf16.mxu0 0
    %2868 = vmatpush1.bf16.msra.mxu0 0
    %2869 = vmatprep.subr.bf16.mxu0 0
    %2870 = vmatpush1.bf16.msra.mxu0 0
    %2871 = vmatprep.subr.bf16.mxu0 0
    %2872 = vmatpush1.bf16.msra.mxu0 0
    %2873 = vmatprep.subr.bf16.mxu0 0
    %2874 = vmatpush1.bf16.msra.mxu0 0
    %2875 = vmatprep.mubr.bf16.mxu0 0
    %2876 = vmatmul.mubr.bf16.gmra.mrb[0].mxu0 %v2841
    %v2877 = vpop.f32.mrb[0].mxu0
    %v2878 = vadd.f32 0.0, %v2877
    %v2879 = vpop.f32.mrb[0].mxu0
    %v2880 = vpop.f32.mrb[0].mxu0
    %v2881 = vadd.f32 0.0, %v2880
    %v2882 = vpop.f32.mrb[0].mxu0
    %2883 = vdwg.mxu0
    %v2885 = vsel %vm121, %v2715, 0
    %2887 = vmatprep.subr.bf16.mxu0 0
    %2888 = vmatpush1.bf16.msra.mxu0 %v2189
    %2889 = vmatprep.subr.bf16.mxu0 0
    %2890 = vmatpush1.bf16.msra.mxu0 0
    %2891 = vmatprep.subr.bf16.mxu0 0
    %2892 = vmatpush1.bf16.msra.mxu0 0
    %2893 = vmatprep.subr.bf16.mxu0 0
    %2894 = vmatpush1.bf16.msra.mxu0 0
    %2895 = vmatprep.subr.bf16.mxu0 0
    %2896 = vmatpush1.bf16.msra.mxu0 0
    %2897 = vmatprep.subr.bf16.mxu0 0
    %2898 = vmatpush1.bf16.msra.mxu0 0
    %2899 = vmatprep.subr.bf16.mxu0 0
    %2900 = vmatpush1.bf16.msra.mxu0 0
    %2901 = vmatprep.subr.bf16.mxu0 0
    %2902 = vmatpush1.bf16.msra.mxu0 0
    %2903 = vmatprep.subr.bf16.mxu0 0
    %2904 = vmatpush1.bf16.msra.mxu0 0
    %2905 = vmatprep.subr.bf16.mxu0 0
    %2906 = vmatpush1.bf16.msra.mxu0 0
    %2907 = vmatprep.subr.bf16.mxu0 0
    %2908 = vmatpush1.bf16.msra.mxu0 0
    %2909 = vmatprep.subr.bf16.mxu0 0
    %2910 = vmatpush1.bf16.msra.mxu0 0
    %2911 = vmatprep.subr.bf16.mxu0 0
    %2912 = vmatpush1.bf16.msra.mxu0 0
    %2913 = vmatprep.subr.bf16.mxu0 0
    %2914 = vmatpush1.bf16.msra.mxu0 0
    %2915 = vmatprep.subr.bf16.mxu0 0
    %2916 = vmatpush1.bf16.msra.mxu0 0
    %2917 = vmatprep.subr.bf16.mxu0 0
    %2918 = vmatpush1.bf16.msra.mxu0 0
    %2919 = vmatprep.mubr.bf16.mxu0 0
    %2920 = vmatmul.mubr.bf16.gmra.mrb[0].mxu0 %v2885
    %v2921 = vpop.f32.mrb[0].mxu0
    %v2922 = vadd.f32 %v2878, %v2921
    %v2923 = vpop.f32.mrb[0].mxu0
    %v2924 = vpop.f32.mrb[0].mxu0
    %v2925 = vadd.f32 %v2881, %v2924
    %v2926 = vpop.f32.mrb[0].mxu0
    %2927 = vdwg.mxu0
    %2928 = vrot.lane.b32.xlu0 %v2593, 112
    %v2929 = vpop.permute.xlu0 %2928
    %2930 = vrot.lane.b32.xlu0 %v2593, 80
    %v2931 = vpop.permute.xlu0 %2930
    %v2933 = vsel %vm121, %v2929, 0
    %v2936 = vsel %vm121, %v2931, 0
    %2938 = vmatprep.subr.bf16.mxu0 0
    %2939 = vmatpush1.bf16.xpose.msra.mxu0 %v2936
    %2940 = vmatprep.subr.bf16.mxu0 0
    %2941 = vmatpush1.bf16.xpose.msra.mxu0 0
    %2942 = vmatprep.subr.bf16.mxu0 0
    %2943 = vmatpush1.bf16.xpose.msra.mxu0 0
    %2944 = vmatprep.subr.bf16.mxu0 0
    %2945 = vmatpush1.bf16.xpose.msra.mxu0 0
    %2946 = vmatprep.subr.bf16.mxu0 0
    %2947 = vmatpush1.bf16.xpose.msra.mxu0 0
    %2948 = vmatprep.subr.bf16.mxu0 0
    %2949 = vmatpush1.bf16.xpose.msra.mxu0 0
    %2950 = vmatprep.subr.bf16.mxu0 0
    %2951 = vmatpush1.bf16.xpose.msra.mxu0 0
    %2952 = vmatprep.subr.bf16.mxu0 0
    %2953 = vmatpush1.bf16.xpose.msra.mxu0 0
    %2954 = vmatprep.subr.bf16.mxu0 0
    %2955 = vmatpush1.bf16.xpose.msra.mxu0 0
    %2956 = vmatprep.subr.bf16.mxu0 0
    %2957 = vmatpush1.bf16.xpose.msra.mxu0 0
    %2958 = vmatprep.subr.bf16.mxu0 0
    %2959 = vmatpush1.bf16.xpose.msra.mxu0 0
    %2960 = vmatprep.subr.bf16.mxu0 0
    %2961 = vmatpush1.bf16.xpose.msra.mxu0 0
    %2962 = vmatprep.subr.bf16.mxu0 0
    %2963 = vmatpush1.bf16.xpose.msra.mxu0 0
    %2964 = vmatprep.subr.bf16.mxu0 0
    %2965 = vmatpush1.bf16.xpose.msra.mxu0 0
    %2966 = vmatprep.subr.bf16.mxu0 0
    %2967 = vmatpush1.bf16.xpose.msra.mxu0 0
    %2968 = vmatprep.subr.bf16.mxu0 0
    %2969 = vmatpush1.bf16.xpose.msra.mxu0 0
    %2970 = vmatprep.mubr.bf16.mxu0 0
    %2971 = vmatmul.mubr.bf16.gmra.mrb[0].mxu0 %v2933
    %v2972 = vpop.f32.mrb[0].mxu0
    %v2973 = vadd.f32 0.0, %v2972
    %v2974 = vpop.f32.mrb[0].mxu0
    %v2975 = vpop.f32.mrb[0].mxu0
    %v2976 = vadd.f32 0.0, %v2975
    %v2977 = vpop.f32.mrb[0].mxu0
    %2978 = vdwg.mxu0
    %v2979 = vsel %vm169, %v2973, -inf
    %2980 = vmax.xlane.f32.xlu0 %v2979
    %v2981 = vpop.xlane.xlu0 %2980
    %v2982 = vsel %vm173, %v2976, -inf
    %2983 = vmax.xlane.f32.xlu0 %v2982
    %v2984 = vpop.xlane.xlu0 %2983
    %v2985 = vsub.f32 %v2973, %v2981
    %v2986 = vsub.f32 %v2976, %v2984
    %v2987 = vmul.f32 %v2985, 1.442695
    %v2988 = vpow.pop %v2987
    %v2989 = vmul.f32 %v2986, 1.442695
    %v2990 = vpow.pop %v2989
    %v2991 = vsel %vm169, %v2988, 0.0
    %2992 = vadd.xlane.f32.xlu0 %v2991
    %v2993 = vpop.xlane.xlu0 %2992
    %v2994 = vsel %vm173, %v2990, 0.0
    %2995 = vadd.xlane.f32.xlu0 %v2994
    %v2996 = vpop.xlane.xlu0 %2995
    %v2997 = vrcp.pop %v2993
    %v2998 = vrcp.pop %v2996
    %v2999 = vmul.f32 %v2988, %v2997
    %v3000 = vmul.f32 %v2990, %v2998
    %v3001 = vpack.c.bf16 %v3000, %v2999
    %3002 = vrot.lane.b32.xlu0 %v2593, 48
    %v3003 = vpop.permute.xlu0 %3002
    %v3005 = vsel %vm169, %v3001, 0
    %v3008 = vand.u32 %v3003, %v202
    %3010 = vmatprep.subr.bf16.mxu0 0
    %3011 = vmatpush1.bf16.msra.mxu0 %v3008
    %3012 = vmatprep.subr.bf16.mxu0 0
    %3013 = vmatpush1.bf16.msra.mxu0 0
    %3014 = vmatprep.subr.bf16.mxu0 0
    %3015 = vmatpush1.bf16.msra.mxu0 0
    %3016 = vmatprep.subr.bf16.mxu0 0
    %3017 = vmatpush1.bf16.msra.mxu0 0
    %3018 = vmatprep.subr.bf16.mxu0 0
    %3019 = vmatpush1.bf16.msra.mxu0 0
    %3020 = vmatprep.subr.bf16.mxu0 0
    %3021 = vmatpush1.bf16.msra.mxu0 0
    %3022 = vmatprep.subr.bf16.mxu0 0
    %3023 = vmatpush1.bf16.msra.mxu0 0
    %3024 = vmatprep.subr.bf16.mxu0 0
    %3025 = vmatpush1.bf16.msra.mxu0 0
    %3026 = vmatprep.subr.bf16.mxu0 0
    %3027 = vmatpush1.bf16.msra.mxu0 0
    %3028 = vmatprep.subr.bf16.mxu0 0
    %3029 = vmatpush1.bf16.msra.mxu0 0
    %3030 = vmatprep.subr.bf16.mxu0 0
    %3031 = vmatpush1.bf16.msra.mxu0 0
    %3032 = vmatprep.subr.bf16.mxu0 0
    %3033 = vmatpush1.bf16.msra.mxu0 0
    %3034 = vmatprep.subr.bf16.mxu0 0
    %3035 = vmatpush1.bf16.msra.mxu0 0
    %3036 = vmatprep.subr.bf16.mxu0 0
    %3037 = vmatpush1.bf16.msra.mxu0 0
    %3038 = vmatprep.subr.bf16.mxu0 0
    %3039 = vmatpush1.bf16.msra.mxu0 0
    %3040 = vmatprep.subr.bf16.mxu0 0
    %3041 = vmatpush1.bf16.msra.mxu0 0
    %3042 = vmatprep.mubr.bf16.mxu0 0
    %3043 = vmatmul.mubr.bf16.gmra.mrb[0].mxu0 %v3005
    %v3044 = vpop.f32.mrb[0].mxu0
    %v3045 = vadd.f32 0.0, %v3044
    %v3046 = vpop.f32.mrb[0].mxu0
    %v3047 = vpop.f32.mrb[0].mxu0
    %v3048 = vadd.f32 0.0, %v3047
    %v3049 = vpop.f32.mrb[0].mxu0
    %3050 = vdwg.mxu0
    %v3051 = vpack.c.bf16 %v3048, %v3045
    %v3053 = vsel %vm121, %v3051, 0
    %3055 = vmatprep.subr.bf16.mxu0 0
    %3056 = vmatpush1.bf16.msra.mxu0 %v2360
    %3057 = vmatprep.subr.bf16.mxu0 0
    %3058 = vmatpush1.bf16.msra.mxu0 0
    %3059 = vmatprep.subr.bf16.mxu0 0
    %3060 = vmatpush1.bf16.msra.mxu0 0
    %3061 = vmatprep.subr.bf16.mxu0 0
    %3062 = vmatpush1.bf16.msra.mxu0 0
    %3063 = vmatprep.subr.bf16.mxu0 0
    %3064 = vmatpush1.bf16.msra.mxu0 0
    %3065 = vmatprep.subr.bf16.mxu0 0
    %3066 = vmatpush1.bf16.msra.mxu0 0
    %3067 = vmatprep.subr.bf16.mxu0 0
    %3068 = vmatpush1.bf16.msra.mxu0 0
    %3069 = vmatprep.subr.bf16.mxu0 0
    %3070 = vmatpush1.bf16.msra.mxu0 0
    %3071 = vmatprep.subr.bf16.mxu0 0
    %3072 = vmatpush1.bf16.msra.mxu0 0
    %3073 = vmatprep.subr.bf16.mxu0 0
    %3074 = vmatpush1.bf16.msra.mxu0 0
    %3075 = vmatprep.subr.bf16.mxu0 0
    %3076 = vmatpush1.bf16.msra.mxu0 0
    %3077 = vmatprep.subr.bf16.mxu0 0
    %3078 = vmatpush1.bf16.msra.mxu0 0
    %3079 = vmatprep.subr.bf16.mxu0 0
    %3080 = vmatpush1.bf16.msra.mxu0 0
    %3081 = vmatprep.subr.bf16.mxu0 0
    %3082 = vmatpush1.bf16.msra.mxu0 0
    %3083 = vmatprep.subr.bf16.mxu0 0
    %3084 = vmatpush1.bf16.msra.mxu0 0
    %3085 = vmatprep.subr.bf16.mxu0 0
    %3086 = vmatpush1.bf16.msra.mxu0 0
    %3087 = vmatprep.mubr.bf16.mxu0 0
    %3088 = vmatmul.mubr.bf16.gmra.mrb[0].mxu0 %v3053
    %v3089 = vpop.f32.mrb[0].mxu0
    %v3090 = vadd.f32 0.0, %v3089
    %v3091 = vpop.f32.mrb[0].mxu0
    %v3092 = vpop.f32.mrb[0].mxu0
    %v3093 = vadd.f32 0.0, %v3092
    %v3094 = vpop.f32.mrb[0].mxu0
    %3095 = vdwg.mxu0
    %v3096 = vadd.f32 %v2922, %v3090
    %v3097 = vadd.f32 %v2925, %v3093
    %3098 = vrot.lane.b32.xlu0 %v2593, 104
    %v3099 = vpop.permute.xlu0 %3098
    %3100 = vrot.lane.b32.xlu0 %v2593, 72
    %v3101 = vpop.permute.xlu0 %3100
    %v3103 = vsel %vm121, %v3099, 0
    %v3106 = vsel %vm121, %v3101, 0
    %3108 = vmatprep.subr.bf16.mxu0 0
    %3109 = vmatpush1.bf16.xpose.msra.mxu0 %v3106
    %3110 = vmatprep.subr.bf16.mxu0 0
    %3111 = vmatpush1.bf16.xpose.msra.mxu0 0
    %3112 = vmatprep.subr.bf16.mxu0 0
    %3113 = vmatpush1.bf16.xpose.msra.mxu0 0
    %3114 = vmatprep.subr.bf16.mxu0 0
    %3115 = vmatpush1.bf16.xpose.msra.mxu0 0
    %3116 = vmatprep.subr.bf16.mxu0 0
    %3117 = vmatpush1.bf16.xpose.msra.mxu0 0
    %3118 = vmatprep.subr.bf16.mxu0 0
    %3119 = vmatpush1.bf16.xpose.msra.mxu0 0
    %3120 = vmatprep.subr.bf16.mxu0 0
    %3121 = vmatpush1.bf16.xpose.msra.mxu0 0
    %3122 = vmatprep.subr.bf16.mxu0 0
    %3123 = vmatpush1.bf16.xpose.msra.mxu0 0
    %3124 = vmatprep.subr.bf16.mxu0 0
    %3125 = vmatpush1.bf16.xpose.msra.mxu0 0
    %3126 = vmatprep.subr.bf16.mxu0 0
    %3127 = vmatpush1.bf16.xpose.msra.mxu0 0
    %3128 = vmatprep.subr.bf16.mxu0 0
    %3129 = vmatpush1.bf16.xpose.msra.mxu0 0
    %3130 = vmatprep.subr.bf16.mxu0 0
    %3131 = vmatpush1.bf16.xpose.msra.mxu0 0
    %3132 = vmatprep.subr.bf16.mxu0 0
    %3133 = vmatpush1.bf16.xpose.msra.mxu0 0
    %3134 = vmatprep.subr.bf16.mxu0 0
    %3135 = vmatpush1.bf16.xpose.msra.mxu0 0
    %3136 = vmatprep.subr.bf16.mxu0 0
    %3137 = vmatpush1.bf16.xpose.msra.mxu0 0
    %3138 = vmatprep.subr.bf16.mxu0 0
    %3139 = vmatpush1.bf16.xpose.msra.mxu0 0
    %3140 = vmatprep.mubr.bf16.mxu0 0
    %3141 = vmatmul.mubr.bf16.gmra.mrb[0].mxu0 %v3103
    %v3142 = vpop.f32.mrb[0].mxu0
    %v3143 = vadd.f32 0.0, %v3142
    %v3144 = vpop.f32.mrb[0].mxu0
    %v3145 = vpop.f32.mrb[0].mxu0
    %v3146 = vadd.f32 0.0, %v3145
    %v3147 = vpop.f32.mrb[0].mxu0
    %3148 = vdwg.mxu0
    %v3149 = vsel %vm169, %v3143, -inf
    %3150 = vmax.xlane.f32.xlu0 %v3149
    %v3151 = vpop.xlane.xlu0 %3150
    %v3152 = vsel %vm173, %v3146, -inf
    %3153 = vmax.xlane.f32.xlu0 %v3152
    %v3154 = vpop.xlane.xlu0 %3153
    %v3155 = vsub.f32 %v3143, %v3151
    %v3156 = vsub.f32 %v3146, %v3154
    %v3157 = vmul.f32 %v3155, 1.442695
    %v3158 = vpow.pop %v3157
    %v3159 = vmul.f32 %v3156, 1.442695
    %v3160 = vpow.pop %v3159
    %v3161 = vsel %vm169, %v3158, 0.0
    %3162 = vadd.xlane.f32.xlu0 %v3161
    %v3163 = vpop.xlane.xlu0 %3162
    %v3164 = vsel %vm173, %v3160, 0.0
    %3165 = vadd.xlane.f32.xlu0 %v3164
    %v3166 = vpop.xlane.xlu0 %3165
    %v3167 = vrcp.pop %v3163
    %v3168 = vrcp.pop %v3166
    %v3169 = vmul.f32 %v3158, %v3167
    %v3170 = vmul.f32 %v3160, %v3168
    %v3171 = vpack.c.bf16 %v3170, %v3169
    %3172 = vrot.lane.b32.xlu0 %v2593, 40
    %v3173 = vpop.permute.xlu0 %3172
    %v3175 = vsel %vm169, %v3171, 0
    %v3178 = vand.u32 %v3173, %v202
    %3180 = vmatprep.subr.bf16.mxu0 0
    %3181 = vmatpush1.bf16.msra.mxu0 %v3178
    %3182 = vmatprep.subr.bf16.mxu0 0
    %3183 = vmatpush1.bf16.msra.mxu0 0
    %3184 = vmatprep.subr.bf16.mxu0 0
    %3185 = vmatpush1.bf16.msra.mxu0 0
    %3186 = vmatprep.subr.bf16.mxu0 0
    %3187 = vmatpush1.bf16.msra.mxu0 0
    %3188 = vmatprep.subr.bf16.mxu0 0
    %3189 = vmatpush1.bf16.msra.mxu0 0
    %3190 = vmatprep.subr.bf16.mxu0 0
    %3191 = vmatpush1.bf16.msra.mxu0 0
    %3192 = vmatprep.subr.bf16.mxu0 0
    %3193 = vmatpush1.bf16.msra.mxu0 0
    %3194 = vmatprep.subr.bf16.mxu0 0
    %3195 = vmatpush1.bf16.msra.mxu0 0
    %3196 = vmatprep.subr.bf16.mxu0 0
    %3197 = vmatpush1.bf16.msra.mxu0 0
    %3198 = vmatprep.subr.bf16.mxu0 0
    %3199 = vmatpush1.bf16.msra.mxu0 0
    %3200 = vmatprep.subr.bf16.mxu0 0
    %3201 = vmatpush1.bf16.msra.mxu0 0
    %3202 = vmatprep.subr.bf16.mxu0 0
    %3203 = vmatpush1.bf16.msra.mxu0 0
    %3204 = vmatprep.subr.bf16.mxu0 0
    %3205 = vmatpush1.bf16.msra.mxu0 0
    %3206 = vmatprep.subr.bf16.mxu0 0
    %3207 = vmatpush1.bf16.msra.mxu0 0
    %3208 = vmatprep.subr.bf16.mxu0 0
    %3209 = vmatpush1.bf16.msra.mxu0 0
    %3210 = vmatprep.subr.bf16.mxu0 0
    %3211 = vmatpush1.bf16.msra.mxu0 0
    %3212 = vmatprep.mubr.bf16.mxu0 0
    %3213 = vmatmul.mubr.bf16.gmra.mrb[0].mxu0 %v3175
    %v3214 = vpop.f32.mrb[0].mxu0
    %v3215 = vadd.f32 0.0, %v3214
    %v3216 = vpop.f32.mrb[0].mxu0
    %v3217 = vpop.f32.mrb[0].mxu0
    %v3218 = vadd.f32 0.0, %v3217
    %v3219 = vpop.f32.mrb[0].mxu0
    %3220 = vdwg.mxu0
    %v3221 = vpack.c.bf16 %v3218, %v3215
    %v3223 = vsel %vm121, %v3221, 0
    %3225 = vmatprep.subr.bf16.mxu0 0
    %3226 = vmatpush1.bf16.msra.mxu0 %v2533
    %3227 = vmatprep.subr.bf16.mxu0 0
    %3228 = vmatpush1.bf16.msra.mxu0 0
    %3229 = vmatprep.subr.bf16.mxu0 0
    %3230 = vmatpush1.bf16.msra.mxu0 0
    %3231 = vmatprep.subr.bf16.mxu0 0
    %3232 = vmatpush1.bf16.msra.mxu0 0
    %3233 = vmatprep.subr.bf16.mxu0 0
    %3234 = vmatpush1.bf16.msra.mxu0 0
    %3235 = vmatprep.subr.bf16.mxu0 0
    %3236 = vmatpush1.bf16.msra.mxu0 0
    %3237 = vmatprep.subr.bf16.mxu0 0
    %3238 = vmatpush1.bf16.msra.mxu0 0
    %3239 = vmatprep.subr.bf16.mxu0 0
    %3240 = vmatpush1.bf16.msra.mxu0 0
    %3241 = vmatprep.subr.bf16.mxu0 0
    %3242 = vmatpush1.bf16.msra.mxu0 0
    %3243 = vmatprep.subr.bf16.mxu0 0
    %3244 = vmatpush1.bf16.msra.mxu0 0
    %3245 = vmatprep.subr.bf16.mxu0 0
    %3246 = vmatpush1.bf16.msra.mxu0 0
    %3247 = vmatprep.subr.bf16.mxu0 0
    %3248 = vmatpush1.bf16.msra.mxu0 0
    %3249 = vmatprep.subr.bf16.mxu0 0
    %3250 = vmatpush1.bf16.msra.mxu0 0
    %3251 = vmatprep.subr.bf16.mxu0 0
    %3252 = vmatpush1.bf16.msra.mxu0 0
    %3253 = vmatprep.subr.bf16.mxu0 0
    %3254 = vmatpush1.bf16.msra.mxu0 0
    %3255 = vmatprep.subr.bf16.mxu0 0
    %3256 = vmatpush1.bf16.msra.mxu0 0
    %3257 = vmatprep.mubr.bf16.mxu0 0
    %3258 = vmatmul.mubr.bf16.gmra.mrb[0].mxu0 %v3223
    %v3259 = vpop.f32.mrb[0].mxu0
    %v3260 = vadd.f32 0.0, %v3259
    %v3261 = vpop.f32.mrb[0].mxu0
    %v3262 = vpop.f32.mrb[0].mxu0
    %v3263 = vadd.f32 0.0, %v3262
    %v3264 = vpop.f32.mrb[0].mxu0
    %3265 = vdwg.mxu0
    %v3266 = vadd.f32 %v3096, %v3260
    %v3267 = vadd.f32 %v3097, %v3263
    %v3270 = vrot.slane %v3266, 7
    %v3271 = vrot.slane %v3267, 7
    %v3272 = vsel %vm1505, %v3270, %v3271
    %v3275 = vsel %vm1505, %v2577, %v3270
    %v3276 = vlaneseq
    %v3277 = vshrl.u32 %v3276, 7
    %v3278 = vsub.s32 1, %v3277
    %v3279 = vrot.slane %v1806, %v3278
    %v3280 = vadd.f32 %v2576, %v3279
    %v3281 = vadd.f32 %v3275, %v3279
    %v3282 = vadd.f32 %v3272, %v3279
    %v3283 = vadd.f32 %v1802, %v3280
    %v3284 = vadd.f32 %v1803, %v3281
    %v3285 = vadd.f32 %v1804, %v3282
    %v3286 = vsel %vm61, %v3283, 0.0
    %3287 = vadd.xlane.f32.xlu0 %v3286
    %v3288 = vpop.xlane.xlu0 %3287
    %v3289 = vsel %vm61, %v3284, 0.0
    %3290 = vadd.xlane.f32.xlu0 %v3289
    %v3291 = vpop.xlane.xlu0 %3290
    %v3292 = vsel %vm1528, %v3285, 0.0
    %3293 = vadd.xlane.f32.xlu0 %v3292
    %v3294 = vpop.xlane.xlu0 %3293
    %v3295 = vmul.f32 %v3288, %v1532
    %v3296 = vmul.f32 %v3291, %v1532
    %v3297 = vmul.f32 %v3294, %v1532
    %v3298 = vsub.f32 %v3283, %v3295
    %v3299 = vsub.f32 %v3284, %v3296
    %v3300 = vsub.f32 %v3285, %v3297
    %v3301 = vmul.f32 %v3298, %v3298
    %v3302 = vmul.f32 %v3299, %v3299
    %v3303 = vmul.f32 %v3300, %v3300
    %v3304 = vsel %vm61, %v3301, 0.0
    %3305 = vadd.xlane.f32.xlu0 %v3304
    %v3306 = vpop.xlane.xlu0 %3305
    %v3307 = vsel %vm61, %v3302, 0.0
    %3308 = vadd.xlane.f32.xlu0 %v3307
    %v3309 = vpop.xlane.xlu0 %3308
    %v3310 = vsel %vm1528, %v3303, 0.0
    %3311 = vadd.xlane.f32.xlu0 %v3310
    %v3312 = vpop.xlane.xlu0 %3311
    %v3313 = vmul.f32 %v3306, %v1532
    %v3314 = vmul.f32 %v3309, %v1532
    %v3315 = vmul.f32 %v3312, %v1532
    %v3316 = vadd.f32 %v3313, 1e-05
    %v3317 = vadd.f32 %v3314, 1e-05
    %v3318 = vadd.f32 %v3315, 1e-05
    %v3319 = vrsqrt.pop %v3316
    %v3320 = vrsqrt.pop %v3317
    %v3321 = vrsqrt.pop %v3318
    %v3322 = vmul.f32 %v3298, %v3319
    %v3323 = vmul.f32 %v3299, %v3320
    %v3324 = vmul.f32 %v3300, %v3321
    %v3325 = vlaneseq
    %v3326 = vshrl.u32 %v3325, 7
    %v3327 = vsub.s32 4, %v3326
    %v3328 = vrot.slane %v1806, %v3327
    %v3329 = vmul.f32 %v3322, %v3328
    %v3330 = vmul.f32 %v3323, %v3328
    %v3331 = vmul.f32 %v3324, %v3328
    %v3332 = vlaneseq
    %v3333 = vshrl.u32 %v3332, 7
    %v3334 = vsub.s32 5, %v3333
    %v3335 = vrot.slane %v1806, %v3334
    %v3336 = vadd.f32 %v3329, %v3335
    %v3337 = vadd.f32 %v3330, %v3335
    %v3338 = vadd.f32 %v3331, %v3335
    %v3339 = vpack.c.bf16 %v3337, %v3336
    %v3340 = vpack.c.bf16 %v3338, %v3338
    %s3341 = scalar_lea.vmem %s3, 16
    %v3342 = vld [vmem:[%s3341] sm:$0xf]
    %v3343 = vld [vmem:[%s3341 + $0x4] sm:$0xf]
    %v3344 = vld [vmem:[%s3341 + $0x8] sm:$0xf]
    %v3345 = vld [vmem:[%s3341 + $0xc] sm:$0xf]
    %v3346 = vlaneseq
    %v3347 = vshrl.u32 %v3346, 7
    %v3348 = vsub.s32 2, %v3347
    %v3349 = vrot.slane %v1806, %v3348
    %v3354 = vunpack.c.l.b16 %v3342
    %v3355 = vunpack.c.l.b16 %v3343
    %v3356 = vunpack.c.l.b16 %v3344
    %v3357 = vunpack.c.l.b16 %v3345
    %v3358 = vpack.c.b16 %v3355, %v3354
    %v3359 = vpack.c.b16 %v3357, %v3356
    %v3363 = vsel %vm61, %v3339, 0
    %v3366 = vsel %vm61, %v3340, 0
    %3368 = vmatprep.subr.bf16.mxu0 0
    %3369 = vmatpush1.bf16.msra.mxu0 %v3358
    %3370 = vmatprep.subr.bf16.mxu0 0
    %3371 = vmatpush1.bf16.msra.mxu0 %v3359
    %3372 = vmatprep.subr.bf16.mxu0 0
    %3373 = vmatpush1.bf16.msra.mxu0 0
    %3374 = vmatprep.subr.bf16.mxu0 0
    %3375 = vmatpush1.bf16.msra.mxu0 0
    %3376 = vmatprep.subr.bf16.mxu0 0
    %3377 = vmatpush1.bf16.msra.mxu0 0
    %3378 = vmatprep.subr.bf16.mxu0 0
    %3379 = vmatpush1.bf16.msra.mxu0 0
    %3380 = vmatprep.subr.bf16.mxu0 0
    %3381 = vmatpush1.bf16.msra.mxu0 0
    %3382 = vmatprep.subr.bf16.mxu0 0
    %3383 = vmatpush1.bf16.msra.mxu0 0
    %3384 = vmatprep.subr.bf16.mxu0 0
    %3385 = vmatpush1.bf16.msra.mxu0 0
    %3386 = vmatprep.subr.bf16.mxu0 0
    %3387 = vmatpush1.bf16.msra.mxu0 0
    %3388 = vmatprep.subr.bf16.mxu0 0
    %3389 = vmatpush1.bf16.msra.mxu0 0
    %3390 = vmatprep.subr.bf16.mxu0 0
    %3391 = vmatpush1.bf16.msra.mxu0 0
    %3392 = vmatprep.subr.bf16.mxu0 0
    %3393 = vmatpush1.bf16.msra.mxu0 0
    %3394 = vmatprep.subr.bf16.mxu0 0
    %3395 = vmatpush1.bf16.msra.mxu0 0
    %3396 = vmatprep.subr.bf16.mxu0 0
    %3397 = vmatpush1.bf16.msra.mxu0 0
    %3398 = vmatprep.subr.bf16.mxu0 0
    %3399 = vmatpush1.bf16.msra.mxu0 0
    %3400 = vmatprep.mubr.bf16.mxu0 0
    %3401 = vmatmul.mubr.bf16.gmra.mrb[0].mxu0 %v3363
    %v3402 = vpop.f32.mrb[0].mxu0
    %v3403 = vadd.f32 %v3349, %v3402
    %v3404 = vpop.f32.mrb[0].mxu0
    %v3405 = vpop.f32.mrb[0].mxu0
    %v3406 = vadd.f32 %v3349, %v3405
    %v3407 = vpop.f32.mrb[0].mxu0
    %3408 = vmatprep.mubr.bf16.mxu0 0
    %3409 = vmatmul.mubr.bf16.gmra.mrb[0].mxu0 %v3366
    %v3410 = vpop.f32.mrb[0].mxu0
    %v3411 = vadd.f32 %v3349, %v3410
    %v3412 = vpop.f32.mrb[0].mxu0
    %v3413 = vpop.f32.mrb[0].mxu0
    %v3414 = vpop.f32.mrb[0].mxu0
    %3415 = vdwg.mxu0
    %v3416 = vmax.f32 %v3403, 0.0
    %v3417 = vmax.f32 %v3406, 0.0
    %v3418 = vmax.f32 %v3411, 0.0
    %v3419 = vpack.c.bf16 %v3417, %v3416
    %v3420 = vpack.c.bf16 %v3418, %v3418
    %s3421 = scalar_lea.vmem %s4, 32
    %v3422 = vld [vmem:[%s3421] sm:$0xf]
    %v3423 = vld [vmem:[%s3421 + $0x4] sm:$0xf]
    %v3424 = vld [vmem:[%s3421 + $0x8] sm:$0xf]
    %v3425 = vld [vmem:[%s3421 + $0xc] sm:$0xf]
    %v3426 = vld [vmem:[%s3421 + $0x10] sm:$0xf]
    %v3427 = vld [vmem:[%s3421 + $0x14] sm:$0xf]
    %v3428 = vld [vmem:[%s3421 + $0x18] sm:$0xf]
    %v3429 = vld [vmem:[%s3421 + $0x1c] sm:$0xf]
    %v3430 = vlaneseq
    %v3431 = vshrl.u32 %v3430, 7
    %v3432 = vsub.s32 3, %v3431
    %v3433 = vrot.slane %v1806, %v3432
    %v3442 = vunpack.c.l.b16 %v3422
    %v3443 = vunpack.c.l.b16 %v3423
    %v3444 = vunpack.c.l.b16 %v3424
    %v3445 = vunpack.c.l.b16 %v3425
    %v3446 = vunpack.c.l.b16 %v3426
    %v3447 = vunpack.c.l.b16 %v3427
    %v3448 = vunpack.c.l.b16 %v3428
    %v3449 = vunpack.c.l.b16 %v3429
    %v3450 = vpack.c.b16 %v3443, %v3442
    %v3451 = vpack.c.b16 %v3445, %v3444
    %v3452 = vpack.c.b16 %v3447, %v3446
    %v3453 = vpack.c.b16 %v3449, %v3448
    %v3459 = vsel %vm1694, %v3419, 0
    %v3462 = vsel %vm1694, %v3420, 0
    %3464 = vmatprep.subr.bf16.mxu0 0
    %3465 = vmatpush1.bf16.msra.mxu0 %v3450
    %3466 = vmatprep.subr.bf16.mxu0 0
    %3467 = vmatpush1.bf16.msra.mxu0 %v3451
    %3468 = vmatprep.subr.bf16.mxu0 0
    %3469 = vmatpush1.bf16.msra.mxu0 %v3452
    %3470 = vmatprep.subr.bf16.mxu0 0
    %3471 = vmatpush1.bf16.msra.mxu0 %v3453
    %3472 = vmatprep.subr.bf16.mxu0 0
    %3473 = vmatpush1.bf16.msra.mxu0 0
    %3474 = vmatprep.subr.bf16.mxu0 0
    %3475 = vmatpush1.bf16.msra.mxu0 0
    %3476 = vmatprep.subr.bf16.mxu0 0
    %3477 = vmatpush1.bf16.msra.mxu0 0
    %3478 = vmatprep.subr.bf16.mxu0 0
    %3479 = vmatpush1.bf16.msra.mxu0 0
    %3480 = vmatprep.subr.bf16.mxu0 0
    %3481 = vmatpush1.bf16.msra.mxu0 0
    %3482 = vmatprep.subr.bf16.mxu0 0
    %3483 = vmatpush1.bf16.msra.mxu0 0
    %3484 = vmatprep.subr.bf16.mxu0 0
    %3485 = vmatpush1.bf16.msra.mxu0 0
    %3486 = vmatprep.subr.bf16.mxu0 0
    %3487 = vmatpush1.bf16.msra.mxu0 0
    %3488 = vmatprep.subr.bf16.mxu0 0
    %3489 = vmatpush1.bf16.msra.mxu0 0
    %3490 = vmatprep.subr.bf16.mxu0 0
    %3491 = vmatpush1.bf16.msra.mxu0 0
    %3492 = vmatprep.subr.bf16.mxu0 0
    %3493 = vmatpush1.bf16.msra.mxu0 0
    %3494 = vmatprep.subr.bf16.mxu0 0
    %3495 = vmatpush1.bf16.msra.mxu0 0
    %3496 = vmatprep.mubr.bf16.mxu0 0
    %3497 = vmatmul.mubr.bf16.gmra.mrb[0].mxu0 %v3459
    %v3498 = vpop.f32.mrb[0].mxu0
    %v3499 = vadd.f32 %v3433, %v3498
    %v3500 = vpop.f32.mrb[0].mxu0
    %v3501 = vpop.f32.mrb[0].mxu0
    %v3502 = vadd.f32 %v3433, %v3501
    %v3503 = vpop.f32.mrb[0].mxu0
    %3504 = vmatprep.mubr.bf16.mxu0 0
    %3505 = vmatmul.mubr.bf16.gmra.mrb[0].mxu0 %v3462
    %v3506 = vpop.f32.mrb[0].mxu0
    %v3507 = vpop.f32.mrb[0].mxu0
    %v3508 = vpop.f32.mrb[0].mxu0
    %v3509 = vpop.f32.mrb[0].mxu0
    %3510 = vdwg.mxu0
    %v3511 = vadd.f32 %v3336, %v3499
    %v3512 = vadd.f32 %v3337, %v3502
    %v3513 = vsel %vm61, %v3511, 0.0
    %3514 = vadd.xlane.f32.xlu0 %v3513
    %v3515 = vpop.xlane.xlu0 %3514
    %v3516 = vsel %vm61, %v3512, 0.0
    %3517 = vadd.xlane.f32.xlu0 %v3516
    %v3518 = vpop.xlane.xlu0 %3517
    %v3519 = vmul.f32 %v3515, %v1532
    %v3520 = vmul.f32 %v3518, %v1532
    %v3521 = vsub.f32 %v3511, %v3519
    %v3522 = vsub.f32 %v3512, %v3520
    %v3523 = vmul.f32 %v3521, %v3521
    %v3524 = vmul.f32 %v3522, %v3522
    %v3525 = vsel %vm61, %v3523, 0.0
    %3526 = vadd.xlane.f32.xlu0 %v3525
    %v3527 = vpop.xlane.xlu0 %3526
    %v3528 = vsel %vm61, %v3524, 0.0
    %3529 = vadd.xlane.f32.xlu0 %v3528
    %v3530 = vpop.xlane.xlu0 %3529
    %v3531 = vmul.f32 %v3527, %v1532
    %v3532 = vmul.f32 %v3530, %v1532
    %v3533 = vadd.f32 %v3531, 1e-05
    %v3534 = vadd.f32 %v3532, 1e-05
    %v3535 = vrsqrt.pop %v3533
    %v3536 = vrsqrt.pop %v3534
    %v3537 = vmul.f32 %v3521, %v3535
    %v3538 = vmul.f32 %v3522, %v3536
    %v3539 = vlaneseq
    %v3540 = vshrl.u32 %v3539, 7
    %v3541 = vsub.s32 6, %v3540
    %v3542 = vrot.slane %v1806, %v3541
    %v3543 = vmul.f32 %v3537, %v3542
    %v3544 = vmul.f32 %v3538, %v3542
    %v3545 = vlaneseq
    %v3546 = vshrl.u32 %v3545, 7
    %v3547 = vsub.s32 7, %v3546
    %v3548 = vrot.slane %v1806, %v3547
    %v3549 = vadd.f32 %v3543, %v3548
    %v3550 = vadd.f32 %v3544, %v3548
    %v3551 = vsel %vm1505, %v3549, %v3550
    %v3552 = vpack.c.bf16 %v3551, %v3551
    %v3553 = vld [vmem:[%s5] sm:$0xf]
    %v3554 = vld [vmem:[%s5 + $0x4] sm:$0xf]
    %v3555 = vld [vmem:[%s5 + $0x8] sm:$0xf]
    %v3556 = vld [vmem:[%s5 + $0xc] sm:$0xf]
    %v3557 = vld [vmem:[%s7] sm:$0x1]
    %v3559 = vlaneseq
    %v3560 = vshrl.u32 %v3559, 7
    %v3561 = vsub.s32 0, %v3560
    %v3562 = vrot.slane %v3557, %v3561
    %v3568 = vunpack.c.l.b16 %v3553
    %v3569 = vunpack.c.l.b16 %v3554
    %v3570 = vunpack.c.l.b16 %v3555
    %v3571 = vunpack.c.l.b16 %v3556
    %v3572 = vpack.c.b16 %v3569, %v3568
    %v3573 = vpack.c.b16 %v3571, %v3570
    %v3577 = vsel %vm61, %v3552, 0
    %3579 = vmatprep.subr.bf16.mxu0 0
    %3580 = vmatpush1.bf16.msra.mxu0 %v3572
    %3581 = vmatprep.subr.bf16.mxu0 0
    %3582 = vmatpush1.bf16.msra.mxu0 %v3573
    %3583 = vmatprep.subr.bf16.mxu0 0
    %3584 = vmatpush1.bf16.msra.mxu0 0
    %3585 = vmatprep.subr.bf16.mxu0 0
    %3586 = vmatpush1.bf16.msra.mxu0 0
    %3587 = vmatprep.subr.bf16.mxu0 0
    %3588 = vmatpush1.bf16.msra.mxu0 0
    %3589 = vmatprep.subr.bf16.mxu0 0
    %3590 = vmatpush1.bf16.msra.mxu0 0
    %3591 = vmatprep.subr.bf16.mxu0 0
    %3592 = vmatpush1.bf16.msra.mxu0 0
    %3593 = vmatprep.subr.bf16.mxu0 0
    %3594 = vmatpush1.bf16.msra.mxu0 0
    %3595 = vmatprep.subr.bf16.mxu0 0
    %3596 = vmatpush1.bf16.msra.mxu0 0
    %3597 = vmatprep.subr.bf16.mxu0 0
    %3598 = vmatpush1.bf16.msra.mxu0 0
    %3599 = vmatprep.subr.bf16.mxu0 0
    %3600 = vmatpush1.bf16.msra.mxu0 0
    %3601 = vmatprep.subr.bf16.mxu0 0
    %3602 = vmatpush1.bf16.msra.mxu0 0
    %3603 = vmatprep.subr.bf16.mxu0 0
    %3604 = vmatpush1.bf16.msra.mxu0 0
    %3605 = vmatprep.subr.bf16.mxu0 0
    %3606 = vmatpush1.bf16.msra.mxu0 0
    %3607 = vmatprep.subr.bf16.mxu0 0
    %3608 = vmatpush1.bf16.msra.mxu0 0
    %3609 = vmatprep.subr.bf16.mxu0 0
    %3610 = vmatpush1.bf16.msra.mxu0 0
    %3611 = vmatprep.mubr.bf16.mxu0 0
    %3612 = vmatmul.mubr.bf16.gmra.mrb[0].mxu0 %v3577
    %v3613 = vpop.f32.mrb[0].mxu0
    %v3614 = vadd.f32 %v3562, %v3613
    %v3615 = vpop.f32.mrb[0].mxu0
    %v3616 = vpop.f32.mrb[0].mxu0
    %v3617 = vpop.f32.mrb[0].mxu0
    %3618 = vdwg.mxu0
    %3619 = vst [vmem:[#allocation2] sm:$0x3] %v3614
    // Predicated region
    $region34: #{transformer_encoder_forward.1} parent=1 // pred_check
      _
    $region35: #{transformer_encoder_forward.1} parent=1 // pred_check_branch
      %3621 = sbr.rel (0) target = $region37
    $region36: #{transformer_encoder_forward.1} parent=1 // pred_region
      %s3623 = ssub.s32 32, 32
      %3624 = vsyncadd [#allocation3], %s3623
      %s3626 = sshll.u32 [#allocation2], 4
      %s3627 = int_to_ptr.vmem [resolvable:$true] %s3626
      %3629 = dma.vmem_to_hbm [thread:$0]  %s3627, 32, %s8, [#allocation3]
    $region37: #{transformer_encoder_forward.1} parent=1 // pred_fallthru
      _
    // Predicated region
    $region38: #{transformer_encoder_forward.1} parent=1 // pred_check
      _
    $region39: #{transformer_encoder_forward.1} parent=1 // pred_check_branch
      %3631 = sbr.rel (0) target = $region41
    $region40: #{transformer_encoder_forward.1} parent=1 // pred_region
      %3632 = dma.done [#allocation3], 32
    $region41: #{transformer_encoder_forward.1} parent=1 // pred_fallthru
      _
    %3633 = vsyncpa [#allocation3], 1

</llo_original>
